<compile_context>
chip_gen: v7x
topology: tpu7x:2x2x1
jax: 0.10.0
libtpu: 0.0.40
codegen_flags: <defaults>
</compile_context>

<pallas_src>
import functools

import jax
import jax.numpy as jnp
from jax import lax
from jax.experimental import pallas as pl
from jax.experimental.pallas import tpu as pltpu

BAND_WIDTH = 0.05
EPS_LOG = 1e-5
EPS_NORM = 1e-12   # torch.nn.functional.normalize default eps


def _round_up(x, m):
    return (x + m - 1) // m * m


def _l2norm(x, scale=1.0):
    # F.normalize(x, p=2, dim=C): x / max(||x||, eps) == x * rsqrt(max(||x||^2, eps^2)).
    # `scale` lets 1/band_width fuse into the normalization multiply for free.
    ss = jnp.sum(x * x, axis=-1, keepdims=True)
    return x * (lax.rsqrt(jnp.maximum(ss, EPS_NORM * EPS_NORM)) * scale)


def _vmem_capacity_bytes():
    try:
        cap = getattr(pltpu.get_tpu_info(), "vmem_capacity_bytes", None)
        if cap:
            return int(cap)
    except Exception:
        pass
    return 64 << 20   # conservative (v7x-sized) fallback


def _plan_vmem(C):
    """Per-generation tile cap, scoped-VMEM limit and resident-t1 budget."""
    cap = _vmem_capacity_bytes()
    big_vmem = cap > (96 << 20)            # v5e/v6e: 128 MiB; v7x: 64 MiB
    # Bigger tiles cut the ~0.35us/step grid overhead and t1 re-streaming, but
    # sim/e temporaries + double-buffered inputs must fit the chip's VMEM.
    max_tile = 1024 if C <= (512 if big_vmem else 256) else 512
    vmem_limit = int(min((cap * 3) // 4, 100 << 20))   # ~96 MiB / ~48 MiB
    slab_budget = (24 << 20) if big_vmem else (10 << 20)
    return max_tile, vmem_limit, slab_budget


def _contrastive_kernel(t1_ref, t2_ref, out_ref, col_acc, row_acc, pos_acc,
                        *, inv_bw, tile, nt, k_actual, t1_resident):
    """One (TILE x TILE) tile of the symmetric InfoNCE for one batch element.

    t1_ref : (1, tile, C) block (columns j) -- or the full (1, k_pad, C) slab
             when t1_resident (sliced in-kernel with pl.ds).
    t2_ref : (1, tile, C) block (rows i), already scaled by 1/band_width.
    out_ref: (1, 1, k_pad); -log(0.5*(nce1+nce2)+1e-5), written once per b.
    col/row/pos_acc: (nt, 1, tile) f32 VMEM accumulators (full-K running sums).
    """
    ti = pl.program_id(1)          # row-tile index  (t2 side)
    tj = pl.program_id(2)          # col-tile index  (t1 side)
    k_pad = nt * tile
    padded = k_actual != k_pad     # static

    @pl.when((ti == 0) & (tj == 0))
    def _init():
        col_acc[...] = jnp.zeros_like(col_acc)
        row_acc[...] = jnp.zeros_like(row_acc)
        pos_acc[...] = jnp.zeros_like(pos_acc)

    if t1_resident:
        j0 = pl.multiple_of(tj * tile, tile)
        t1_blk = t1_ref[0, pl.ds(j0, tile), :]      # (tile, C) columns j
    else:
        t1_blk = t1_ref[0]                          # (tile, C) columns j
    t2_blk = t2_ref[0]                              # (tile, C) rows i

    # sim/band_width directly from the MXU (t2 pre-scaled by inv_bw outside);
    # contract C on both operands (no transpose), f32 accumulation.
    sim = lax.dot_general(t2_blk, t1_blk, (((1,), (1,)), ((), ())),
                          preferred_element_type=jnp.float32)    # (tile, tile)
    # Shift by max possible scaled cosine: exp never overflows for any
    # band_width; the constant factor cancels exactly in the nce ratios.
    e = jnp.exp(sim - inv_bw)

    lane = lax.broadcasted_iota(jnp.int32, (1, tile), 1)
    if padded:
        row_ok = ((ti * tile + lane) < k_actual).astype(jnp.float32)  # rows i
        col_ok = ((tj * tile + lane) < k_actual).astype(jnp.float32)  # cols j
    else:
        row_ok = jnp.ones((1, tile), jnp.float32)
        col_ok = row_ok

    # Column AND row sums as (1,tile)x(tile,tile) mat-vecs on the (otherwise
    # idle) MXU: results are lane-major, no TILE^2 VALU mul / XLU reduce.
    col_part = lax.dot_general(row_ok, e, (((1,), (0,)), ((), ())),
                               preferred_element_type=jnp.float32)    # (1, tile)
    row_part = lax.dot_general(col_ok, e, (((1,), (1,)), ((), ())),
                               preferred_element_type=jnp.float32)    # (1, tile)

    col_acc[tj] = col_acc[tj] + col_part
    row_acc[ti] = row_acc[ti] + row_part

    # Positives = diagonal of e; only the nt diagonal tiles carry it.
    # TODO(synk): positives_negatives / positives_negatives2 are not defined in
    # the source file; standard InfoNCE split (diagonal = positives) assumed.
    @pl.when(ti == tj)
    def _diag():
        ii = lax.broadcasted_iota(jnp.int32, (tile, 1), 0)
        jj = lax.broadcasted_iota(jnp.int32, (1, tile), 1)
        pos_acc[ti] = jnp.sum(jnp.where(ii == jj, e, 0.0), axis=0, keepdims=True)

    @pl.when((ti == nt - 1) & (tj == nt - 1))
    def _finalize():
        for t in range(nt):        # static unroll; nt <= ~22 at real sizes
            pos = pos_acc[t]
            nce = 0.5 * (pos / col_acc[t] + pos / row_acc[t])
            out_ref[0, :, t * tile:(t + 1) * tile] = -jnp.log(nce + EPS_LOG)


def contrastive_loss_level(t1_sel, t2_sel, band_width=BAND_WIDTH, *,
                           max_tile=None, t1_resident=None, use_bf16=None):
    """t1_sel, t2_sel: (B, K, C) selected (unnormalized) features -> scalar loss."""
    B, K, C = t1_sel.shape
    inv_bw = 1.0 / band_width

    # L2 normalization hoisted out of the kernel (was re-done nt times per
    # block); 1/band_width folded into t2's normalization scale so the MXU
    # emits sim/band_width directly.
    t1n = _l2norm(t1_sel.astype(jnp.float32))
    t2s = _l2norm(t2_sel.astype(jnp.float32), scale=inv_bw)

    if use_bf16 is None:
        # At production ResNet widths (C>=1024) the f32 MXU pass, not the EUP
        # exp, is the binding unit; bf16 operands (f32 accumulation) win there.
        use_bf16 = C >= 1024
    if use_bf16:
        t1n = t1n.astype(jnp.bfloat16)
        t2s = t2s.astype(jnp.bfloat16)
    itemsize = t1n.dtype.itemsize

    default_max_tile, vmem_limit, slab_budget = _plan_vmem(C)
    max_tile = default_max_tile if max_tile is None else max(16, _round_up(max_tile, 16))
    tile = _round_up(K, 16) if K <= max_tile else max_tile
    k_pad = _round_up(K, tile)
    nt = k_pad // tile
    if t1_resident is None:
        # Keep the whole padded t1 slab resident per batch element (one HBM
        # read instead of nt) when it is a small fraction of VMEM.
        t1_resident = nt > 1 and 2 * k_pad * C * itemsize <= slab_budget

    if k_pad != K:
        pad = ((0, 0), (0, k_pad - K), (0, 0))
        t1n = jnp.pad(t1n, pad)
        t2s = jnp.pad(t2s, pad)

    if t1_resident:
        t1_spec = pl.BlockSpec((1, k_pad, C), lambda b, ti, tj: (b, 0, 0))
    else:
        t1_spec = pl.BlockSpec((1, tile, C), lambda b, ti, tj: (b, tj, 0))
    t2_spec = pl.BlockSpec((1, tile, C), lambda b, ti, tj: (b, ti, 0))

    t1_reads = 1 if t1_resident else nt
    cost = pl.CostEstimate(
        flops=int(2 * B * k_pad * k_pad * (C + 2)),
        transcendentals=int(B * k_pad * k_pad),
        bytes_accessed=int(B * k_pad * C * itemsize * (1 + t1_reads) + B * k_pad * 4))

    kern = functools.partial(_contrastive_kernel, inv_bw=inv_bw, tile=tile,
                             nt=nt, k_actual=K, t1_resident=t1_resident)
    neg_log = pl.pallas_call(
        kern,
        out_shape=jax.ShapeDtypeStruct((B, 1, k_pad), jnp.float32),
        grid=(B, nt, nt),
        in_specs=[t1_spec, t2_spec],
        out_specs=pl.BlockSpec((1, 1, k_pad), lambda b, ti, tj: (b, 0, 0)),
        scratch_shapes=[
            pltpu.VMEM((nt, 1, tile), jnp.float32),   # running column sums
            pltpu.VMEM((nt, 1, tile), jnp.float32),   # running row sums
            pltpu.VMEM((nt, 1, tile), jnp.float32),   # positives (diag of e)
        ],
        compiler_params=pltpu.CompilerParams(
            dimension_semantics=("parallel", "arbitrary", "arbitrary"),
            vmem_limit_bytes=vmem_limit),
        cost_estimate=cost,
    )(t1n, t2s)
    return jnp.mean(neg_log[:, 0, :K])


def random_select_element(key, t1_feat, t2_feat, num):
    """Select `num` random spatial locations (same indices for both inputs).

    t1_feat, t2_feat: NCHW. Returns (B, K, C) channels-last patches.
    TODO(synk): random_select_element is not defined in the source file;
    assumed shared, without-replacement spatial sampling for both inputs.
    """
    B, C, H, W = t1_feat.shape
    k = min(num, H * W)
    idx = jax.random.permutation(key, H * W)[:k]
    t1_flat = t1_feat.reshape(B, C, H * W)
    t2_flat = t2_feat.reshape(B, C, H * W)
    t1_sel = jnp.transpose(jnp.take(t1_flat, idx, axis=2), (0, 2, 1))
    t2_sel = jnp.transpose(jnp.take(t2_flat, idx, axis=2), (0, 2, 1))
    return t1_sel, t2_sel


def contrastive_loss_resnet_forward(t2_features, t1_features, key,
                                    band_width=BAND_WIDTH):
    """Mirrors Contrastive_loss_resnet.forward (pyramid levels 3, 2, 0).

    Note: the original normalizes the full NCHW maps before selection; since
    the per-point normalization over C commutes with spatial selection, it is
    applied to the K selected points inside contrastive_loss_level instead.
    """
    k3, k2, k0 = jax.random.split(key, 3)
    # Original counts (3456, 11059, 11118) are clamped to H*W at small shapes.
    sel3 = random_select_element(k3, t1_features[3], t2_features[3], 3456)
    sel2 = random_select_element(k2, t1_features[2], t2_features[2], 11059)
    sel0 = random_select_element(k0, t1_features[0], t2_features[0], 11118)
    losses = jnp.stack([
        contrastive_loss_level(*sel3, band_width=band_width),
        contrastive_loss_level(*sel2, band_width=band_width),
        contrastive_loss_level(*sel0, band_width=band_width),
    ])
    return jnp.mean(losses)


# ------------------------- pure-JAX reference ------------------------------
def _ref_level(t1_sel, t2_sel, band_width=BAND_WIDTH):
    def l2norm(x):
        return x / jnp.maximum(jnp.linalg.norm(x, axis=-1, keepdims=True), EPS_NORM)

    t1n = l2norm(t1_sel.astype(jnp.float32))
    t2n = l2norm(t2_sel.astype(jnp.float32))
    sim = jnp.einsum("bic,bjc->bij", t2n, t1n)
    e = jnp.exp(sim / band_width)
    K = sim.shape[-1]
    eye = jnp.eye(K, dtype=bool)
    pos_e = jnp.sum(jnp.where(eye, e, 0.0), axis=1)
    e_off = jnp.where(eye, 0.0, e)
    nce1 = pos_e / (pos_e + jnp.sum(e_off, axis=1))
    nce2 = pos_e / (pos_e + jnp.sum(e_off, axis=2))
    return jnp.mean(-jnp.log(0.5 * (nce1 + nce2) + EPS_LOG))


if __name__ == "__main__":
    root = jax.random.PRNGKey(0)
    kf1, kf2, sel_key, kx1, kx2 = jax.random.split(root, 5)

    B = 2
    # Small ResNet-style feature pyramid (NCHW). Level 1 exists but is unused.
    shapes = [(B, 8, 16, 16), (B, 12, 16, 16), (B, 16, 8, 8), (B, 32, 4, 4)]
    kt1 = jax.random.split(kf1, 4)
    kt2 = jax.random.split(kf2, 4)
    t1_features = [jax.random.normal(kt1[i], s, jnp.float32) for i, s in enumerate(shapes)]
    t2_features = [jax.random.normal(kt2[i], s, jnp.float32) for i, s in enumerate(shapes)]

    loss = jax.jit(contrastive_loss_resnet_forward)(t2_features, t1_features, sel_key)
    loss = jax.block_until_ready(loss)

    # Cross-check against a pure-JAX reference of the same math / same selection.
    k3, k2, k0 = jax.random.split(sel_key, 3)
    ref = jnp.mean(jnp.stack([
        _ref_level(*random_select_element(k3, t1_features[3], t2_features[3], 3456)),
        _ref_level(*random_select_element(k2, t1_features[2], t2_features[2], 11059)),
        _ref_level(*random_select_element(k0, t1_features[0], t2_features[0], 11118)),
    ]))
    assert jnp.allclose(loss, ref, rtol=2e-3, atol=2e-3), (loss, ref)

    # Exercise the multi-tile paths the tiny pyramid never reaches:
    # K=200 -> 4 tiles of 64 (padded to 256), both resident-t1 and streamed-t1.
    xa = jax.random.normal(kx1, (B, 200, 24), jnp.float32)
    xb = jax.random.normal(kx2, (B, 200, 24), jnp.float32)
    ref_t = _ref_level(xa, xb)
    for resident in (True, False):
        got = jax.block_until_ready(
            contrastive_loss_level(xa, xb, max_tile=64, t1_resident=resident))
        assert jnp.allclose(got, ref_t, rtol=2e-3, atol=2e-3), (resident, got, ref_t)

    # bf16-MXU path (auto-selected at production C>=1024): run with a loose
    # tolerance -- operand error enters the exponent as ~(1/band_width)*dsim.
    got_bf16 = jax.block_until_ready(
        contrastive_loss_level(xa, xb, max_tile=64, use_bf16=True))
    assert bool(jnp.isfinite(got_bf16))
    assert jnp.allclose(got_bf16, ref_t, rtol=0.1, atol=0.1), (got_bf16, ref_t)

    print("KERNEL_OK")
</pallas_src>

<mosaic_0001>
module attributes {stable_mosaic.version = 11 : i64} {
  func.func @_contrastive_kernel(%arg0: i32, %arg1: i32, %arg2: i32, %arg3: memref<1x16x32xf32, #tpu.memory_space<vmem>>, %arg4: memref<1x16x32xf32, #tpu.memory_space<vmem>>, %arg5: memref<1x1x16xf32, #tpu.memory_space<vmem>>, %arg6: memref<1x1x16xf32, #tpu.memory_space<vmem>>, %arg7: memref<1x1x16xf32, #tpu.memory_space<vmem>>, %arg8: memref<1x1x16xf32, #tpu.memory_space<vmem>>) attributes {dimension_semantics = [#tpu.dimension_semantics<parallel>, #tpu.dimension_semantics<arbitrary>, #tpu.dimension_semantics<arbitrary>], iteration_bounds = array<i64: 2, 1, 1>, scalar_prefetch = 0 : i64, scratch_operands = 3 : i64, tpu.core_type = #tpu.core_type<tc>, window_params = [{transform_indices = @transform_0, window_bounds = array<i64: 1, 16, 32>}, {transform_indices = @transform_1, window_bounds = array<i64: 1, 16, 32>}, {transform_indices = @transform_2, window_bounds = array<i64: 1, 1, 16>}]} {
    %c0_i32 = arith.constant 0 : i32
    %0 = arith.cmpi eq, %arg1, %c0_i32 : i32
    %c0_i32_0 = arith.constant 0 : i32
    %1 = arith.cmpi eq, %arg2, %c0_i32_0 : i32
    %2 = arith.andi %0, %1 : i1
    %3 = arith.extui %2 : i1 to i32
    %c0_i32_1 = arith.constant 0 : i32
    %4 = arith.cmpi ne, %3, %c0_i32_1 : i32
    scf.if %4 {
      %cst_23 = arith.constant 0.000000e+00 : f32
      %40 = vector.broadcast %cst_23 : f32 to vector<1x1x16xf32>
      %c0_24 = arith.constant 0 : index
      %c0_25 = arith.constant 0 : index
      %c0_26 = arith.constant 0 : index
      %41 = vector.load %arg6[%c0_24, %c0_25, %c0_26] : memref<1x1x16xf32, #tpu.memory_space<vmem>>, vector<1x1x16xf32>
      tpu.vector_store %arg6[%c0_24, %c0_25, %c0_26], %40 {strides = array<i32>} : memref<1x1x16xf32, #tpu.memory_space<vmem>>, vector<1x1x16xf32>,
      %cst_27 = arith.constant 0.000000e+00 : f32
      %42 = vector.broadcast %cst_27 : f32 to vector<1x1x16xf32>
      %c0_28 = arith.constant 0 : index
      %c0_29 = arith.constant 0 : index
      %c0_30 = arith.constant 0 : index
      %43 = vector.load %arg7[%c0_28, %c0_29, %c0_30] : memref<1x1x16xf32, #tpu.memory_space<vmem>>, vector<1x1x16xf32>
      tpu.vector_store %arg7[%c0_28, %c0_29, %c0_30], %42 {strides = array<i32>} : memref<1x1x16xf32, #tpu.memory_space<vmem>>, vector<1x1x16xf32>,
      %cst_31 = arith.constant 0.000000e+00 : f32
      %44 = vector.broadcast %cst_31 : f32 to vector<1x1x16xf32>
      %c0_32 = arith.constant 0 : index
      %c0_33 = arith.constant 0 : index
      %c0_34 = arith.constant 0 : index
      %45 = vector.load %arg8[%c0_32, %c0_33, %c0_34] : memref<1x1x16xf32, #tpu.memory_space<vmem>>, vector<1x1x16xf32>
      tpu.vector_store %arg8[%c0_32, %c0_33, %c0_34], %44 {strides = array<i32>} : memref<1x1x16xf32, #tpu.memory_space<vmem>>, vector<1x1x16xf32>,
    } else {
    }
    %c0 = arith.constant 0 : index
    %c0_2 = arith.constant 0 : index
    %c0_3 = arith.constant 0 : index
    %5 = vector.load %arg3[%c0, %c0_2, %c0_3] : memref<1x16x32xf32, #tpu.memory_space<vmem>>, vector<1x16x32xf32>
    %6 = vector.shape_cast %5 : vector<1x16x32xf32> to vector<16x32xf32>
    %c0_4 = arith.constant 0 : index
    %c0_5 = arith.constant 0 : index
    %c0_6 = arith.constant 0 : index
    %7 = vector.load %arg4[%c0_4, %c0_5, %c0_6] : memref<1x16x32xf32, #tpu.memory_space<vmem>>, vector<1x16x32xf32>
    %8 = vector.shape_cast %7 : vector<1x16x32xf32> to vector<16x32xf32>
    %cst = arith.constant dense<0.000000e+00> : vector<16x16xf32>
    %9 = tpu.matmul %8, %6, %cst {dimension_numbers = #tpu.dot_dimension_numbers<[1], [1], [0], [0], [0, 0, 1, 0], [], []>} : vector<16x32xf32>, vector<16x32xf32>, vector<16x16xf32> -> vector<16x16xf32>
    %cst_7 = arith.constant 2.000000e+01 : f32
    %10 = vector.broadcast %cst_7 : f32 to vector<16x16xf32>
    %11 = arith.subf %9, %10 : vector<16x16xf32>
    %12 = math.exp %11 : vector<16x16xf32>
    %cst_8 = arith.constant 1.000000e+00 : f32
    %13 = vector.broadcast %cst_8 : f32 to vector<1x16xf32>
    %cst_9 = arith.constant dense<0.000000e+00> : vector<1x16xf32>
    %14 = tpu.matmul %13, %12, %cst_9 {dimension_numbers = #tpu.dot_dimension_numbers<[1], [0], [0], [1], [0, 0, 1, 1], [], []>} : vector<1x16xf32>, vector<16x16xf32>, vector<1x16xf32> -> vector<1x16xf32>
    %cst_10 = arith.constant dense<0.000000e+00> : vector<1x16xf32>
    %15 = tpu.matmul %13, %12, %cst_10 {dimension_numbers = #tpu.dot_dimension_numbers<[1], [1], [0], [0], [0, 0, 1, 0], [], []>} : vector<1x16xf32>, vector<16x16xf32>, vector<1x16xf32> -> vector<1x16xf32>
    %16 = arith.index_cast %arg2 : i32 to index
    %c0_11 = arith.constant 0 : index
    %c0_12 = arith.constant 0 : index
    %17 = vector.load %arg6[%16, %c0_11, %c0_12] : memref<1x1x16xf32, #tpu.memory_space<vmem>>, vector<1x1x16xf32>
    %18 = vector.shape_cast %17 : vector<1x1x16xf32> to vector<1x16xf32>
    %19 = arith.addf %18, %14 : vector<1x16xf32>
    %20 = arith.index_cast %arg2 : i32 to index
    %c0_13 = arith.constant 0 : index
    %c0_14 = arith.constant 0 : index
    %21 = vector.load %arg6[%20, %c0_13, %c0_14] : memref<1x1x16xf32, #tpu.memory_space<vmem>>, vector<1x1x16xf32>
    %22 = vector.shape_cast %21 : vector<1x1x16xf32> to vector<1x16xf32>
    %23 = vector.shape_cast %19 : vector<1x16xf32> to vector<1x1x16xf32>
    tpu.vector_store %arg6[%20, %c0_13, %c0_14], %23 {strides = array<i32>} : memref<1x1x16xf32, #tpu.memory_space<vmem>>, vector<1x1x16xf32>,
    %24 = arith.index_cast %arg1 : i32 to index
    %c0_15 = arith.constant 0 : index
    %c0_16 = arith.constant 0 : index
    %25 = vector.load %arg7[%24, %c0_15, %c0_16] : memref<1x1x16xf32, #tpu.memory_space<vmem>>, vector<1x1x16xf32>
    %26 = vector.shape_cast %25 : vector<1x1x16xf32> to vector<1x16xf32>
    %27 = arith.addf %26, %15 : vector<1x16xf32>
    %28 = arith.index_cast %arg1 : i32 to index
    %c0_17 = arith.constant 0 : index
    %c0_18 = arith.constant 0 : index
    %29 = vector.load %arg7[%28, %c0_17, %c0_18] : memref<1x1x16xf32, #tpu.memory_space<vmem>>, vector<1x1x16xf32>
    %30 = vector.shape_cast %29 : vector<1x1x16xf32> to vector<1x16xf32>
    %31 = vector.shape_cast %27 : vector<1x16xf32> to vector<1x1x16xf32>
    tpu.vector_store %arg7[%28, %c0_17, %c0_18], %31 {strides = array<i32>} : memref<1x1x16xf32, #tpu.memory_space<vmem>>, vector<1x1x16xf32>,
    %32 = arith.cmpi eq, %arg1, %arg2 : i32
    %33 = arith.extui %32 : i1 to i32
    %c0_i32_19 = arith.constant 0 : i32
    %34 = arith.cmpi ne, %33, %c0_i32_19 : i32
    scf.if %34 {
      %40 = tpu.iota {dimensions = array<i32: 0>} : vector<16x1xi32>
      %41 = tpu.iota {dimensions = array<i32: 1>} : vector<1x16xi32>
      %42 = vector.broadcast %40 : vector<16x1xi32> to vector<16x16xi32>
      %43 = vector.broadcast %41 : vector<1x16xi32> to vector<16x16xi32>
      %44 = arith.cmpi eq, %42, %43 : vector<16x16xi32>
      %cst_23 = arith.constant 0.000000e+00 : f32
      %45 = vector.broadcast %cst_23 : f32 to vector<16x16xf32>
      %46 = arith.select %44, %12, %45 : vector<16x16xi1>, vector<16x16xf32>
      %cst_24 = arith.constant dense<0.000000e+00> : vector<16xf32>
      %47 = vector.multi_reduction <add>, %46, %cst_24 [0] : vector<16x16xf32> to vector<16xf32>
      %48 = vector.shape_cast %47 : vector<16xf32> to vector<1x16xf32>
      %49 = arith.index_cast %arg1 : i32 to index
      %c0_25 = arith.constant 0 : index
      %c0_26 = arith.constant 0 : index
      %50 = vector.load %arg8[%49, %c0_25, %c0_26] : memref<1x1x16xf32, #tpu.memory_space<vmem>>, vector<1x1x16xf32>
      %51 = vector.shape_cast %50 : vector<1x1x16xf32> to vector<1x16xf32>
      %52 = vector.shape_cast %48 : vector<1x16xf32> to vector<1x1x16xf32>
      tpu.vector_store %arg8[%49, %c0_25, %c0_26], %52 {strides = array<i32>} : memref<1x1x16xf32, #tpu.memory_space<vmem>>, vector<1x1x16xf32>,
    } else {
    }
    %c0_i32_20 = arith.constant 0 : i32
    %35 = arith.cmpi eq, %arg1, %c0_i32_20 : i32
    %c0_i32_21 = arith.constant 0 : i32
    %36 = arith.cmpi eq, %arg2, %c0_i32_21 : i32
    %37 = arith.andi %35, %36 : i1
    %38 = arith.extui %37 : i1 to i32
    %c0_i32_22 = arith.constant 0 : i32
    %39 = arith.cmpi ne, %38, %c0_i32_22 : i32
    scf.if %39 {
      %c0_23 = arith.constant 0 : index
      %c0_24 = arith.constant 0 : index
      %c0_25 = arith.constant 0 : index
      %40 = vector.load %arg8[%c0_23, %c0_24, %c0_25] : memref<1x1x16xf32, #tpu.memory_space<vmem>>, vector<1x1x16xf32>
      %41 = vector.shape_cast %40 : vector<1x1x16xf32> to vector<1x16xf32>
      %c0_26 = arith.constant 0 : index
      %c0_27 = arith.constant 0 : index
      %c0_28 = arith.constant 0 : index
      %42 = vector.load %arg6[%c0_26, %c0_27, %c0_28] : memref<1x1x16xf32, #tpu.memory_space<vmem>>, vector<1x1x16xf32>
      %43 = vector.shape_cast %42 : vector<1x1x16xf32> to vector<1x16xf32>
      %44 = arith.divf %41, %43 : vector<1x16xf32>
      %c0_29 = arith.constant 0 : index
      %c0_30 = arith.constant 0 : index
      %c0_31 = arith.constant 0 : index
      %45 = vector.load %arg7[%c0_29, %c0_30, %c0_31] : memref<1x1x16xf32, #tpu.memory_space<vmem>>, vector<1x1x16xf32>
      %46 = vector.shape_cast %45 : vector<1x1x16xf32> to vector<1x16xf32>
      %47 = arith.divf %41, %46 : vector<1x16xf32>
      %48 = arith.addf %44, %47 : vector<1x16xf32>
      %cst_32 = arith.constant 5.000000e-01 : f32
      %49 = vector.broadcast %cst_32 : f32 to vector<1x16xf32>
      %50 = arith.mulf %49, %48 : vector<1x16xf32>
      %cst_33 = arith.constant 9.99999974E-6 : f32
      %51 = vector.broadcast %cst_33 : f32 to vector<1x16xf32>
      %52 = arith.addf %50, %51 : vector<1x16xf32>
      %53 = math.log %52 : vector<1x16xf32>
      %cst_34 = arith.constant 0.000000e+00 : f32
      %54 = vector.broadcast %cst_34 : f32 to vector<1x16xf32>
      %55 = arith.subf %54, %53 : vector<1x16xf32>
      %c0_35 = arith.constant 0 : index
      %c0_36 = arith.constant 0 : index
      %c0_37 = arith.constant 0 : index
      %56 = vector.load %arg5[%c0_35, %c0_36, %c0_37] : memref<1x1x16xf32, #tpu.memory_space<vmem>>, vector<1x1x16xf32>
      %57 = vector.shape_cast %56 : vector<1x1x16xf32> to vector<1x16xf32>
      %58 = vector.shape_cast %55 : vector<1x16xf32> to vector<1x1x16xf32>
      tpu.vector_store %arg5[%c0_35, %c0_36, %c0_37], %58 {strides = array<i32>} : memref<1x1x16xf32, #tpu.memory_space<vmem>>, vector<1x1x16xf32>,
    } else {
    }
    return
  }
  func.func @transform_0(%arg0: i32, %arg1: i32, %arg2: i32) -> (i32, i32, i32) {
    %c0_i32 = arith.constant 0 : i32
    %c0_i32_0 = arith.constant 0 : i32
    return %arg0, %arg2, %c0_i32 : i32, i32, i32
  }
  func.func @transform_1(%arg0: i32, %arg1: i32, %arg2: i32) -> (i32, i32, i32) {
    %c0_i32 = arith.constant 0 : i32
    %c0_i32_0 = arith.constant 0 : i32
    return %arg0, %arg1, %c0_i32 : i32, i32, i32
  }
  func.func @transform_2(%arg0: i32, %arg1: i32, %arg2: i32) -> (i32, i32, i32) {
    %c0_i32 = arith.constant 0 : i32
    %c0_i32_0 = arith.constant 0 : i32
    %c0_i32_1 = arith.constant 0 : i32
    return %arg0, %c0_i32, %c0_i32_0 : i32, i32, i32
  }
}

module attributes {stable_mosaic.version = 11 : i64} {
  func.func @_contrastive_kernel(%arg0: i32, %arg1: i32, %arg2: i32, %arg3: memref<1x64x16xf32, #tpu.memory_space<vmem>>, %arg4: memref<1x64x16xf32, #tpu.memory_space<vmem>>, %arg5: memref<1x1x64xf32, #tpu.memory_space<vmem>>, %arg6: memref<1x1x64xf32, #tpu.memory_space<vmem>>, %arg7: memref<1x1x64xf32, #tpu.memory_space<vmem>>, %arg8: memref<1x1x64xf32, #tpu.memory_space<vmem>>) attributes {dimension_semantics = [#tpu.dimension_semantics<parallel>, #tpu.dimension_semantics<arbitrary>, #tpu.dimension_semantics<arbitrary>], iteration_bounds = array<i64: 2, 1, 1>, scalar_prefetch = 0 : i64, scratch_operands = 3 : i64, tpu.core_type = #tpu.core_type<tc>, window_params = [{transform_indices = @transform_0, window_bounds = array<i64: 1, 64, 16>}, {transform_indices = @transform_1, window_bounds = array<i64: 1, 64, 16>}, {transform_indices = @transform_2, window_bounds = array<i64: 1, 1, 64>}]} {
    %c0_i32 = arith.constant 0 : i32
    %0 = arith.cmpi eq, %arg1, %c0_i32 : i32
    %c0_i32_0 = arith.constant 0 : i32
    %1 = arith.cmpi eq, %arg2, %c0_i32_0 : i32
    %2 = arith.andi %0, %1 : i1
    %3 = arith.extui %2 : i1 to i32
    %c0_i32_1 = arith.constant 0 : i32
    %4 = arith.cmpi ne, %3, %c0_i32_1 : i32
    scf.if %4 {
      %cst_23 = arith.constant 0.000000e+00 : f32
      %40 = vector.broadcast %cst_23 : f32 to vector<1x1x64xf32>
      %c0_24 = arith.constant 0 : index
      %c0_25 = arith.constant 0 : index
      %c0_26 = arith.constant 0 : index
      %41 = vector.load %arg6[%c0_24, %c0_25, %c0_26] : memref<1x1x64xf32, #tpu.memory_space<vmem>>, vector<1x1x64xf32>
      tpu.vector_store %arg6[%c0_24, %c0_25, %c0_26], %40 {strides = array<i32>} : memref<1x1x64xf32, #tpu.memory_space<vmem>>, vector<1x1x64xf32>,
      %cst_27 = arith.constant 0.000000e+00 : f32
      %42 = vector.broadcast %cst_27 : f32 to vector<1x1x64xf32>
      %c0_28 = arith.constant 0 : index
      %c0_29 = arith.constant 0 : index
      %c0_30 = arith.constant 0 : index
      %43 = vector.load %arg7[%c0_28, %c0_29, %c0_30] : memref<1x1x64xf32, #tpu.memory_space<vmem>>, vector<1x1x64xf32>
      tpu.vector_store %arg7[%c0_28, %c0_29, %c0_30], %42 {strides = array<i32>} : memref<1x1x64xf32, #tpu.memory_space<vmem>>, vector<1x1x64xf32>,
      %cst_31 = arith.constant 0.000000e+00 : f32
      %44 = vector.broadcast %cst_31 : f32 to vector<1x1x64xf32>
      %c0_32 = arith.constant 0 : index
      %c0_33 = arith.constant 0 : index
      %c0_34 = arith.constant 0 : index
      %45 = vector.load %arg8[%c0_32, %c0_33, %c0_34] : memref<1x1x64xf32, #tpu.memory_space<vmem>>, vector<1x1x64xf32>
      tpu.vector_store %arg8[%c0_32, %c0_33, %c0_34], %44 {strides = array<i32>} : memref<1x1x64xf32, #tpu.memory_space<vmem>>, vector<1x1x64xf32>,
    } else {
    }
    %c0 = arith.constant 0 : index
    %c0_2 = arith.constant 0 : index
    %c0_3 = arith.constant 0 : index
    %5 = vector.load %arg3[%c0, %c0_2, %c0_3] : memref<1x64x16xf32, #tpu.memory_space<vmem>>, vector<1x64x16xf32>
    %6 = vector.shape_cast %5 : vector<1x64x16xf32> to vector<64x16xf32>
    %c0_4 = arith.constant 0 : index
    %c0_5 = arith.constant 0 : index
    %c0_6 = arith.constant 0 : index
    %7 = vector.load %arg4[%c0_4, %c0_5, %c0_6] : memref<1x64x16xf32, #tpu.memory_space<vmem>>, vector<1x64x16xf32>
    %8 = vector.shape_cast %7 : vector<1x64x16xf32> to vector<64x16xf32>
    %cst = arith.constant dense<0.000000e+00> : vector<64x64xf32>
    %9 = tpu.matmul %8, %6, %cst {dimension_numbers = #tpu.dot_dimension_numbers<[1], [1], [0], [0], [0, 0, 1, 0], [], []>} : vector<64x16xf32>, vector<64x16xf32>, vector<64x64xf32> -> vector<64x64xf32>
    %cst_7 = arith.constant 2.000000e+01 : f32
    %10 = vector.broadcast %cst_7 : f32 to vector<64x64xf32>
    %11 = arith.subf %9, %10 : vector<64x64xf32>
    %12 = math.exp %11 : vector<64x64xf32>
    %cst_8 = arith.constant 1.000000e+00 : f32
    %13 = vector.broadcast %cst_8 : f32 to vector<1x64xf32>
    %cst_9 = arith.constant dense<0.000000e+00> : vector<1x64xf32>
    %14 = tpu.matmul %13, %12, %cst_9 {dimension_numbers = #tpu.dot_dimension_numbers<[1], [0], [0], [1], [0, 0, 1, 1], [], []>} : vector<1x64xf32>, vector<64x64xf32>, vector<1x64xf32> -> vector<1x64xf32>
    %cst_10 = arith.constant dense<0.000000e+00> : vector<1x64xf32>
    %15 = tpu.matmul %13, %12, %cst_10 {dimension_numbers = #tpu.dot_dimension_numbers<[1], [1], [0], [0], [0, 0, 1, 0], [], []>} : vector<1x64xf32>, vector<64x64xf32>, vector<1x64xf32> -> vector<1x64xf32>
    %16 = arith.index_cast %arg2 : i32 to index
    %c0_11 = arith.constant 0 : index
    %c0_12 = arith.constant 0 : index
    %17 = vector.load %arg6[%16, %c0_11, %c0_12] : memref<1x1x64xf32, #tpu.memory_space<vmem>>, vector<1x1x64xf32>
    %18 = vector.shape_cast %17 : vector<1x1x64xf32> to vector<1x64xf32>
    %19 = arith.addf %18, %14 : vector<1x64xf32>
    %20 = arith.index_cast %arg2 : i32 to index
    %c0_13 = arith.constant 0 : index
    %c0_14 = arith.constant 0 : index
    %21 = vector.load %arg6[%20, %c0_13, %c0_14] : memref<1x1x64xf32, #tpu.memory_space<vmem>>, vector<1x1x64xf32>
    %22 = vector.shape_cast %21 : vector<1x1x64xf32> to vector<1x64xf32>
    %23 = vector.shape_cast %19 : vector<1x64xf32> to vector<1x1x64xf32>
    tpu.vector_store %arg6[%20, %c0_13, %c0_14], %23 {strides = array<i32>} : memref<1x1x64xf32, #tpu.memory_space<vmem>>, vector<1x1x64xf32>,
    %24 = arith.index_cast %arg1 : i32 to index
    %c0_15 = arith.constant 0 : index
    %c0_16 = arith.constant 0 : index
    %25 = vector.load %arg7[%24, %c0_15, %c0_16] : memref<1x1x64xf32, #tpu.memory_space<vmem>>, vector<1x1x64xf32>
    %26 = vector.shape_cast %25 : vector<1x1x64xf32> to vector<1x64xf32>
    %27 = arith.addf %26, %15 : vector<1x64xf32>
    %28 = arith.index_cast %arg1 : i32 to index
    %c0_17 = arith.constant 0 : index
    %c0_18 = arith.constant 0 : index
    %29 = vector.load %arg7[%28, %c0_17, %c0_18] : memref<1x1x64xf32, #tpu.memory_space<vmem>>, vector<1x1x64xf32>
    %30 = vector.shape_cast %29 : vector<1x1x64xf32> to vector<1x64xf32>
    %31 = vector.shape_cast %27 : vector<1x64xf32> to vector<1x1x64xf32>
    tpu.vector_store %arg7[%28, %c0_17, %c0_18], %31 {strides = array<i32>} : memref<1x1x64xf32, #tpu.memory_space<vmem>>, vector<1x1x64xf32>,
    %32 = arith.cmpi eq, %arg1, %arg2 : i32
    %33 = arith.extui %32 : i1 to i32
    %c0_i32_19 = arith.constant 0 : i32
    %34 = arith.cmpi ne, %33, %c0_i32_19 : i32
    scf.if %34 {
      %40 = tpu.iota {dimensions = array<i32: 0>} : vector<64x1xi32>
      %41 = tpu.iota {dimensions = array<i32: 1>} : vector<1x64xi32>
      %42 = vector.broadcast %40 : vector<64x1xi32> to vector<64x64xi32>
      %43 = vector.broadcast %41 : vector<1x64xi32> to vector<64x64xi32>
      %44 = arith.cmpi eq, %42, %43 : vector<64x64xi32>
      %cst_23 = arith.constant 0.000000e+00 : f32
      %45 = vector.broadcast %cst_23 : f32 to vector<64x64xf32>
      %46 = arith.select %44, %12, %45 : vector<64x64xi1>, vector<64x64xf32>
      %cst_24 = arith.constant dense<0.000000e+00> : vector<64xf32>
      %47 = vector.multi_reduction <add>, %46, %cst_24 [0] : vector<64x64xf32> to vector<64xf32>
      %48 = vector.shape_cast %47 : vector<64xf32> to vector<1x64xf32>
      %49 = arith.index_cast %arg1 : i32 to index
      %c0_25 = arith.constant 0 : index
      %c0_26 = arith.constant 0 : index
      %50 = vector.load %arg8[%49, %c0_25, %c0_26] : memref<1x1x64xf32, #tpu.memory_space<vmem>>, vector<1x1x64xf32>
      %51 = vector.shape_cast %50 : vector<1x1x64xf32> to vector<1x64xf32>
      %52 = vector.shape_cast %48 : vector<1x64xf32> to vector<1x1x64xf32>
      tpu.vector_store %arg8[%49, %c0_25, %c0_26], %52 {strides = array<i32>} : memref<1x1x64xf32, #tpu.memory_space<vmem>>, vector<1x1x64xf32>,
    } else {
    }
    %c0_i32_20 = arith.constant 0 : i32
    %35 = arith.cmpi eq, %arg1, %c0_i32_20 : i32
    %c0_i32_21 = arith.constant 0 : i32
    %36 = arith.cmpi eq, %arg2, %c0_i32_21 : i32
    %37 = arith.andi %35, %36 : i1
    %38 = arith.extui %37 : i1 to i32
    %c0_i32_22 = arith.constant 0 : i32
    %39 = arith.cmpi ne, %38, %c0_i32_22 : i32
    scf.if %39 {
      %c0_23 = arith.constant 0 : index
      %c0_24 = arith.constant 0 : index
      %c0_25 = arith.constant 0 : index
      %40 = vector.load %arg8[%c0_23, %c0_24, %c0_25] : memref<1x1x64xf32, #tpu.memory_space<vmem>>, vector<1x1x64xf32>
      %41 = vector.shape_cast %40 : vector<1x1x64xf32> to vector<1x64xf32>
      %c0_26 = arith.constant 0 : index
      %c0_27 = arith.constant 0 : index
      %c0_28 = arith.constant 0 : index
      %42 = vector.load %arg6[%c0_26, %c0_27, %c0_28] : memref<1x1x64xf32, #tpu.memory_space<vmem>>, vector<1x1x64xf32>
      %43 = vector.shape_cast %42 : vector<1x1x64xf32> to vector<1x64xf32>
      %44 = arith.divf %41, %43 : vector<1x64xf32>
      %c0_29 = arith.constant 0 : index
      %c0_30 = arith.constant 0 : index
      %c0_31 = arith.constant 0 : index
      %45 = vector.load %arg7[%c0_29, %c0_30, %c0_31] : memref<1x1x64xf32, #tpu.memory_space<vmem>>, vector<1x1x64xf32>
      %46 = vector.shape_cast %45 : vector<1x1x64xf32> to vector<1x64xf32>
      %47 = arith.divf %41, %46 : vector<1x64xf32>
      %48 = arith.addf %44, %47 : vector<1x64xf32>
      %cst_32 = arith.constant 5.000000e-01 : f32
      %49 = vector.broadcast %cst_32 : f32 to vector<1x64xf32>
      %50 = arith.mulf %49, %48 : vector<1x64xf32>
      %cst_33 = arith.constant 9.99999974E-6 : f32
      %51 = vector.broadcast %cst_33 : f32 to vector<1x64xf32>
      %52 = arith.addf %50, %51 : vector<1x64xf32>
      %53 = math.log %52 : vector<1x64xf32>
      %cst_34 = arith.constant 0.000000e+00 : f32
      %54 = vector.broadcast %cst_34 : f32 to vector<1x64xf32>
      %55 = arith.subf %54, %53 : vector<1x64xf32>
      %c0_35 = arith.constant 0 : index
      %c0_36 = arith.constant 0 : index
      %c0_37 = arith.constant 0 : index
      %56 = vector.load %arg5[%c0_35, %c0_36, %c0_37] : memref<1x1x64xf32, #tpu.memory_space<vmem>>, vector<1x1x64xf32>
      %57 = vector.shape_cast %56 : vector<1x1x64xf32> to vector<1x64xf32>
      %58 = vector.shape_cast %55 : vector<1x64xf32> to vector<1x1x64xf32>
      tpu.vector_store %arg5[%c0_35, %c0_36, %c0_37], %58 {strides = array<i32>} : memref<1x1x64xf32, #tpu.memory_space<vmem>>, vector<1x1x64xf32>,
    } else {
    }
    return
  }
  func.func @transform_0(%arg0: i32, %arg1: i32, %arg2: i32) -> (i32, i32, i32) {
    %c0_i32 = arith.constant 0 : i32
    %c0_i32_0 = arith.constant 0 : i32
    return %arg0, %arg2, %c0_i32 : i32, i32, i32
  }
  func.func @transform_1(%arg0: i32, %arg1: i32, %arg2: i32) -> (i32, i32, i32) {
    %c0_i32 = arith.constant 0 : i32
    %c0_i32_0 = arith.constant 0 : i32
    return %arg0, %arg1, %c0_i32 : i32, i32, i32
  }
  func.func @transform_2(%arg0: i32, %arg1: i32, %arg2: i32) -> (i32, i32, i32) {
    %c0_i32 = arith.constant 0 : i32
    %c0_i32_0 = arith.constant 0 : i32
    %c0_i32_1 = arith.constant 0 : i32
    return %arg0, %c0_i32, %c0_i32_0 : i32, i32, i32
  }
}

module attributes {stable_mosaic.version = 11 : i64} {
  func.func @_contrastive_kernel(%arg0: i32, %arg1: i32, %arg2: i32, %arg3: memref<1x256x8xf32, #tpu.memory_space<vmem>>, %arg4: memref<1x256x8xf32, #tpu.memory_space<vmem>>, %arg5: memref<1x1x256xf32, #tpu.memory_space<vmem>>, %arg6: memref<1x1x256xf32, #tpu.memory_space<vmem>>, %arg7: memref<1x1x256xf32, #tpu.memory_space<vmem>>, %arg8: memref<1x1x256xf32, #tpu.memory_space<vmem>>) attributes {dimension_semantics = [#tpu.dimension_semantics<parallel>, #tpu.dimension_semantics<arbitrary>, #tpu.dimension_semantics<arbitrary>], iteration_bounds = array<i64: 2, 1, 1>, scalar_prefetch = 0 : i64, scratch_operands = 3 : i64, tpu.core_type = #tpu.core_type<tc>, window_params = [{transform_indices = @transform_0, window_bounds = array<i64: 1, 256, 8>}, {transform_indices = @transform_1, window_bounds = array<i64: 1, 256, 8>}, {transform_indices = @transform_2, window_bounds = array<i64: 1, 1, 256>}]} {
    %c0_i32 = arith.constant 0 : i32
    %0 = arith.cmpi eq, %arg1, %c0_i32 : i32
    %c0_i32_0 = arith.constant 0 : i32
    %1 = arith.cmpi eq, %arg2, %c0_i32_0 : i32
    %2 = arith.andi %0, %1 : i1
    %3 = arith.extui %2 : i1 to i32
    %c0_i32_1 = arith.constant 0 : i32
    %4 = arith.cmpi ne, %3, %c0_i32_1 : i32
    scf.if %4 {
      %cst_23 = arith.constant 0.000000e+00 : f32
      %40 = vector.broadcast %cst_23 : f32 to vector<1x1x256xf32>
      %c0_24 = arith.constant 0 : index
      %c0_25 = arith.constant 0 : index
      %c0_26 = arith.constant 0 : index
      %41 = vector.load %arg6[%c0_24, %c0_25, %c0_26] : memref<1x1x256xf32, #tpu.memory_space<vmem>>, vector<1x1x256xf32>
      tpu.vector_store %arg6[%c0_24, %c0_25, %c0_26], %40 {strides = array<i32>} : memref<1x1x256xf32, #tpu.memory_space<vmem>>, vector<1x1x256xf32>,
      %cst_27 = arith.constant 0.000000e+00 : f32
      %42 = vector.broadcast %cst_27 : f32 to vector<1x1x256xf32>
      %c0_28 = arith.constant 0 : index
      %c0_29 = arith.constant 0 : index
      %c0_30 = arith.constant 0 : index
      %43 = vector.load %arg7[%c0_28, %c0_29, %c0_30] : memref<1x1x256xf32, #tpu.memory_space<vmem>>, vector<1x1x256xf32>
      tpu.vector_store %arg7[%c0_28, %c0_29, %c0_30], %42 {strides = array<i32>} : memref<1x1x256xf32, #tpu.memory_space<vmem>>, vector<1x1x256xf32>,
      %cst_31 = arith.constant 0.000000e+00 : f32
      %44 = vector.broadcast %cst_31 : f32 to vector<1x1x256xf32>
      %c0_32 = arith.constant 0 : index
      %c0_33 = arith.constant 0 : index
      %c0_34 = arith.constant 0 : index
      %45 = vector.load %arg8[%c0_32, %c0_33, %c0_34] : memref<1x1x256xf32, #tpu.memory_space<vmem>>, vector<1x1x256xf32>
      tpu.vector_store %arg8[%c0_32, %c0_33, %c0_34], %44 {strides = array<i32>} : memref<1x1x256xf32, #tpu.memory_space<vmem>>, vector<1x1x256xf32>,
    } else {
    }
    %c0 = arith.constant 0 : index
    %c0_2 = arith.constant 0 : index
    %c0_3 = arith.constant 0 : index
    %5 = vector.load %arg3[%c0, %c0_2, %c0_3] : memref<1x256x8xf32, #tpu.memory_space<vmem>>, vector<1x256x8xf32>
    %6 = vector.shape_cast %5 : vector<1x256x8xf32> to vector<256x8xf32>
    %c0_4 = arith.constant 0 : index
    %c0_5 = arith.constant 0 : index
    %c0_6 = arith.constant 0 : index
    %7 = vector.load %arg4[%c0_4, %c0_5, %c0_6] : memref<1x256x8xf32, #tpu.memory_space<vmem>>, vector<1x256x8xf32>
    %8 = vector.shape_cast %7 : vector<1x256x8xf32> to vector<256x8xf32>
    %cst = arith.constant dense<0.000000e+00> : vector<256x256xf32>
    %9 = tpu.matmul %8, %6, %cst {dimension_numbers = #tpu.dot_dimension_numbers<[1], [1], [0], [0], [0, 0, 1, 0], [], []>} : vector<256x8xf32>, vector<256x8xf32>, vector<256x256xf32> -> vector<256x256xf32>
    %cst_7 = arith.constant 2.000000e+01 : f32
    %10 = vector.broadcast %cst_7 : f32 to vector<256x256xf32>
    %11 = arith.subf %9, %10 : vector<256x256xf32>
    %12 = math.exp %11 : vector<256x256xf32>
    %cst_8 = arith.constant 1.000000e+00 : f32
    %13 = vector.broadcast %cst_8 : f32 to vector<1x256xf32>
    %cst_9 = arith.constant dense<0.000000e+00> : vector<1x256xf32>
    %14 = tpu.matmul %13, %12, %cst_9 {dimension_numbers = #tpu.dot_dimension_numbers<[1], [0], [0], [1], [0, 0, 1, 1], [], []>} : vector<1x256xf32>, vector<256x256xf32>, vector<1x256xf32> -> vector<1x256xf32>
    %cst_10 = arith.constant dense<0.000000e+00> : vector<1x256xf32>
    %15 = tpu.matmul %13, %12, %cst_10 {dimension_numbers = #tpu.dot_dimension_numbers<[1], [1], [0], [0], [0, 0, 1, 0], [], []>} : vector<1x256xf32>, vector<256x256xf32>, vector<1x256xf32> -> vector<1x256xf32>
    %16 = arith.index_cast %arg2 : i32 to index
    %c0_11 = arith.constant 0 : index
    %c0_12 = arith.constant 0 : index
    %17 = vector.load %arg6[%16, %c0_11, %c0_12] : memref<1x1x256xf32, #tpu.memory_space<vmem>>, vector<1x1x256xf32>
    %18 = vector.shape_cast %17 : vector<1x1x256xf32> to vector<1x256xf32>
    %19 = arith.addf %18, %14 : vector<1x256xf32>
    %20 = arith.index_cast %arg2 : i32 to index
    %c0_13 = arith.constant 0 : index
    %c0_14 = arith.constant 0 : index
    %21 = vector.load %arg6[%20, %c0_13, %c0_14] : memref<1x1x256xf32, #tpu.memory_space<vmem>>, vector<1x1x256xf32>
    %22 = vector.shape_cast %21 : vector<1x1x256xf32> to vector<1x256xf32>
    %23 = vector.shape_cast %19 : vector<1x256xf32> to vector<1x1x256xf32>
    tpu.vector_store %arg6[%20, %c0_13, %c0_14], %23 {strides = array<i32>} : memref<1x1x256xf32, #tpu.memory_space<vmem>>, vector<1x1x256xf32>,
    %24 = arith.index_cast %arg1 : i32 to index
    %c0_15 = arith.constant 0 : index
    %c0_16 = arith.constant 0 : index
    %25 = vector.load %arg7[%24, %c0_15, %c0_16] : memref<1x1x256xf32, #tpu.memory_space<vmem>>, vector<1x1x256xf32>
    %26 = vector.shape_cast %25 : vector<1x1x256xf32> to vector<1x256xf32>
    %27 = arith.addf %26, %15 : vector<1x256xf32>
    %28 = arith.index_cast %arg1 : i32 to index
    %c0_17 = arith.constant 0 : index
    %c0_18 = arith.constant 0 : index
    %29 = vector.load %arg7[%28, %c0_17, %c0_18] : memref<1x1x256xf32, #tpu.memory_space<vmem>>, vector<1x1x256xf32>
    %30 = vector.shape_cast %29 : vector<1x1x256xf32> to vector<1x256xf32>
    %31 = vector.shape_cast %27 : vector<1x256xf32> to vector<1x1x256xf32>
    tpu.vector_store %arg7[%28, %c0_17, %c0_18], %31 {strides = array<i32>} : memref<1x1x256xf32, #tpu.memory_space<vmem>>, vector<1x1x256xf32>,
    %32 = arith.cmpi eq, %arg1, %arg2 : i32
    %33 = arith.extui %32 : i1 to i32
    %c0_i32_19 = arith.constant 0 : i32
    %34 = arith.cmpi ne, %33, %c0_i32_19 : i32
    scf.if %34 {
      %40 = tpu.iota {dimensions = array<i32: 0>} : vector<256x1xi32>
      %41 = tpu.iota {dimensions = array<i32: 1>} : vector<1x256xi32>
      %42 = vector.broadcast %40 : vector<256x1xi32> to vector<256x256xi32>
      %43 = vector.broadcast %41 : vector<1x256xi32> to vector<256x256xi32>
      %44 = arith.cmpi eq, %42, %43 : vector<256x256xi32>
      %cst_23 = arith.constant 0.000000e+00 : f32
      %45 = vector.broadcast %cst_23 : f32 to vector<256x256xf32>
      %46 = arith.select %44, %12, %45 : vector<256x256xi1>, vector<256x256xf32>
      %cst_24 = arith.constant dense<0.000000e+00> : vector<256xf32>
      %47 = vector.multi_reduction <add>, %46, %cst_24 [0] : vector<256x256xf32> to vector<256xf32>
      %48 = vector.shape_cast %47 : vector<256xf32> to vector<1x256xf32>
      %49 = arith.index_cast %arg1 : i32 to index
      %c0_25 = arith.constant 0 : index
      %c0_26 = arith.constant 0 : index
      %50 = vector.load %arg8[%49, %c0_25, %c0_26] : memref<1x1x256xf32, #tpu.memory_space<vmem>>, vector<1x1x256xf32>
      %51 = vector.shape_cast %50 : vector<1x1x256xf32> to vector<1x256xf32>
      %52 = vector.shape_cast %48 : vector<1x256xf32> to vector<1x1x256xf32>
      tpu.vector_store %arg8[%49, %c0_25, %c0_26], %52 {strides = array<i32>} : memref<1x1x256xf32, #tpu.memory_space<vmem>>, vector<1x1x256xf32>,
    } else {
    }
    %c0_i32_20 = arith.constant 0 : i32
    %35 = arith.cmpi eq, %arg1, %c0_i32_20 : i32
    %c0_i32_21 = arith.constant 0 : i32
    %36 = arith.cmpi eq, %arg2, %c0_i32_21 : i32
    %37 = arith.andi %35, %36 : i1
    %38 = arith.extui %37 : i1 to i32
    %c0_i32_22 = arith.constant 0 : i32
    %39 = arith.cmpi ne, %38, %c0_i32_22 : i32
    scf.if %39 {
      %c0_23 = arith.constant 0 : index
      %c0_24 = arith.constant 0 : index
      %c0_25 = arith.constant 0 : index
      %40 = vector.load %arg8[%c0_23, %c0_24, %c0_25] : memref<1x1x256xf32, #tpu.memory_space<vmem>>, vector<1x1x256xf32>
      %41 = vector.shape_cast %40 : vector<1x1x256xf32> to vector<1x256xf32>
      %c0_26 = arith.constant 0 : index
      %c0_27 = arith.constant 0 : index
      %c0_28 = arith.constant 0 : index
      %42 = vector.load %arg6[%c0_26, %c0_27, %c0_28] : memref<1x1x256xf32, #tpu.memory_space<vmem>>, vector<1x1x256xf32>
      %43 = vector.shape_cast %42 : vector<1x1x256xf32> to vector<1x256xf32>
      %44 = arith.divf %41, %43 : vector<1x256xf32>
      %c0_29 = arith.constant 0 : index
      %c0_30 = arith.constant 0 : index
      %c0_31 = arith.constant 0 : index
      %45 = vector.load %arg7[%c0_29, %c0_30, %c0_31] : memref<1x1x256xf32, #tpu.memory_space<vmem>>, vector<1x1x256xf32>
      %46 = vector.shape_cast %45 : vector<1x1x256xf32> to vector<1x256xf32>
      %47 = arith.divf %41, %46 : vector<1x256xf32>
      %48 = arith.addf %44, %47 : vector<1x256xf32>
      %cst_32 = arith.constant 5.000000e-01 : f32
      %49 = vector.broadcast %cst_32 : f32 to vector<1x256xf32>
      %50 = arith.mulf %49, %48 : vector<1x256xf32>
      %cst_33 = arith.constant 9.99999974E-6 : f32
      %51 = vector.broadcast %cst_33 : f32 to vector<1x256xf32>
      %52 = arith.addf %50, %51 : vector<1x256xf32>
      %53 = math.log %52 : vector<1x256xf32>
      %cst_34 = arith.constant 0.000000e+00 : f32
      %54 = vector.broadcast %cst_34 : f32 to vector<1x256xf32>
      %55 = arith.subf %54, %53 : vector<1x256xf32>
      %c0_35 = arith.constant 0 : index
      %c0_36 = arith.constant 0 : index
      %c0_37 = arith.constant 0 : index
      %56 = vector.load %arg5[%c0_35, %c0_36, %c0_37] : memref<1x1x256xf32, #tpu.memory_space<vmem>>, vector<1x1x256xf32>
      %57 = vector.shape_cast %56 : vector<1x1x256xf32> to vector<1x256xf32>
      %58 = vector.shape_cast %55 : vector<1x256xf32> to vector<1x1x256xf32>
      tpu.vector_store %arg5[%c0_35, %c0_36, %c0_37], %58 {strides = array<i32>} : memref<1x1x256xf32, #tpu.memory_space<vmem>>, vector<1x1x256xf32>,
    } else {
    }
    return
  }
  func.func @transform_0(%arg0: i32, %arg1: i32, %arg2: i32) -> (i32, i32, i32) {
    %c0_i32 = arith.constant 0 : i32
    %c0_i32_0 = arith.constant 0 : i32
    return %arg0, %arg2, %c0_i32 : i32, i32, i32
  }
  func.func @transform_1(%arg0: i32, %arg1: i32, %arg2: i32) -> (i32, i32, i32) {
    %c0_i32 = arith.constant 0 : i32
    %c0_i32_0 = arith.constant 0 : i32
    return %arg0, %arg1, %c0_i32 : i32, i32, i32
  }
  func.func @transform_2(%arg0: i32, %arg1: i32, %arg2: i32) -> (i32, i32, i32) {
    %c0_i32 = arith.constant 0 : i32
    %c0_i32_0 = arith.constant 0 : i32
    %c0_i32_1 = arith.constant 0 : i32
    return %arg0, %c0_i32, %c0_i32_0 : i32, i32, i32
  }
}

</mosaic_0001>

<llo_original>
// kernel: contrastive_loss_resnet_forward.5
$region0: #{contrastive_loss_resnet_forward.5}
  #allocation0 [shape = 'u32[]', space=smem, size = 0x4, offset = 0x4, fixed_abs, tag = 'smem constant byte address 0x4 - core index']
  #allocation1 [shape = 'u32[144,128]{1,0:T(1,128)}', space=vmem, size = 0x12000, scoped, tag = 'internal scratch']
  #allocation2 [shape = 'f32[1,1,16]{2,1,0:T(1,128)}', space=vmem, size = 0x200, scoped, tag = 'scratch operand']
  #allocation3 [shape = 'f32[1,1,16]{2,1,0:T(1,128)}', space=vmem, size = 0x200, scoped, tag = 'scratch operand']
  #allocation4 [shape = 'f32[1,1,16]{2,1,0:T(1,128)}', space=vmem, size = 0x200, scoped, tag = 'scratch operand']
  %s0 = inlined_call_operand.vmem [shape: f32[2,16,32], index: 0, kind: input, shape index: {}]
  %s1 = inlined_call_operand.vmem [shape: f32[2,16,32], index: 1, kind: input, shape index: {}]
  %s2 = inlined_call_operand.vmem [shape: f32[2,1,16], index: 2, kind: output, shape index: {}]
  %s3 = sld [smem:[#allocation0]]
  $region53: #{contrastive_loss_resnet_forward.5} parent=0
    _
  %s5 = ssub.s32 1, %s3
  %s6 = scalar_select 0, %s5, %s3
  loop: start=0, step=1, limit=4
  $region2: #{contrastive_loss_resnet_forward.5} parent=0 // loop_pre_header
    _
  $region3: #{contrastive_loss_resnet_forward.5} parent=0 // loop_header
    %s8 = sphi 0, %s12
    %p9 = scmp.ge.s32.totalorder %s8, 4
    %s15 = sphi 0, %s34
    %s16 = sphi 0, %s30
    %s17 = sphi 0, %s26
    %s18 = sphi 0, %s15
    %s19 = sphi 0, %s16
    %s20 = sphi 0, %s17
    %s21 = sphi 0, %s18
    %s22 = sphi 0, %s19
    %s23 = sphi 0, %s20
    %s39 = sphi 0, %s41
    %s42 = sphi 0, %s39
    %s43 = sphi 0, %s42
    %s59 = sphi 0, %s43
    %s67 = sphi 0, %s69
    %s70 = sphi 0, %s67
    %s71 = sphi 0, %s70
    %s87 = sphi 0, %s71
    %s93 = sphi 0, %s95
    %s96 = sphi 0, %s93
    %s97 = sphi 0, %s96
    %s113 = sphi 0, %s97
  $region4: #{contrastive_loss_resnet_forward.5} parent=0 // loop_header_branch
    %11 = sbr.rel (%p9) target = $region8
  $region5: #{contrastive_loss_resnet_forward.5} parent=0 // loop_body
    %s13 = ssub.s32 %s8, 1
    %s14 = ssub.s32 %s8, 2
    %s24 = sadd.s32 1, %s17
    %p25 = scmp.ge.s32.totalorder %s24, 1
    %s26 = scalar_select %p25, 0, %s24
    %s27 = sadd.s32 1, %s16
    %s28 = scalar_select %p25, %s27, %s16
    %p29 = scmp.ge.s32.totalorder %s28, 1
    %s30 = scalar_select %p29, 0, %s28
    %s31 = sadd.s32 1, %s15
    %s32 = scalar_select %p29, %s31, %s15
    %p33 = scmp.ge.s32.totalorder %s32, 2
    %s34 = scalar_select %p33, 0, %s32
    %s35 = ssub.s32 %s15, %s34
    %s36 = ssub.s32 %s17, %s26
    %s37 = sor.u32 %s35, %s36
    %p38 = scmp.eq.s32.totalorder %s37, 0
    %s40 = sadd.s32 %s39, 1
    %s41 = scalar_select %p38, %s39, %s40
    %p44 = pneg %p38
    %p45 = scmp.eq.s32.totalorder %s8, 1
    %p46 = por %p44, %p45
    %p47 = scmp.ne.s32.totalorder %s39, %s42
    %p48 = scmp.eq.s32.totalorder %s8, 0
    %p49 = por %p47, %p48
    %p50 = scmp.ne.s32.totalorder %s39, %s42
    %p51 = scmp.eq.s32.totalorder %s13, 1
    %p52 = por %p50, %p51
    %p53 = scmp.ne.s32.totalorder %s42, %s43
    %p54 = scmp.eq.s32.totalorder %s13, 0
    %p55 = por %p53, %p54
    %p56 = scmp.ne.s32.totalorder %s42, %s43
    %p57 = scmp.eq.s32.totalorder %s14, 1
    %p58 = por %p56, %p57
    %p60 = scmp.ne.s32.totalorder %s43, %s59
    %p61 = scmp.eq.s32.totalorder %s14, 0
    %p62 = por %p60, %p61
    %s63 = ssub.s32 %s15, %s34
    %s64 = ssub.s32 %s16, %s30
    %s65 = sor.u32 %s63, %s64
    %p66 = scmp.eq.s32.totalorder %s65, 0
    %s68 = sadd.s32 %s67, 1
    %s69 = scalar_select %p66, %s67, %s68
    %p72 = pneg %p66
    %p73 = scmp.eq.s32.totalorder %s8, 1
    %p74 = por %p72, %p73
    %p75 = scmp.ne.s32.totalorder %s67, %s70
    %p76 = scmp.eq.s32.totalorder %s8, 0
    %p77 = por %p75, %p76
    %p78 = scmp.ne.s32.totalorder %s67, %s70
    %p79 = scmp.eq.s32.totalorder %s13, 1
    %p80 = por %p78, %p79
    %p81 = scmp.ne.s32.totalorder %s70, %s71
    %p82 = scmp.eq.s32.totalorder %s13, 0
    %p83 = por %p81, %p82
    %p84 = scmp.ne.s32.totalorder %s70, %s71
    %p85 = scmp.eq.s32.totalorder %s14, 1
    %p86 = por %p84, %p85
    %p88 = scmp.ne.s32.totalorder %s71, %s87
    %p89 = scmp.eq.s32.totalorder %s14, 0
    %p90 = por %p88, %p89
    %s91 = ssub.s32 %s15, %s34
    %p92 = scmp.eq.s32.totalorder %s91, 0
    %s94 = sadd.s32 %s93, 1
    %s95 = scalar_select %p92, %s93, %s94
    %p98 = pneg %p92
    %p99 = scmp.eq.s32.totalorder %s8, 1
    %p100 = por %p98, %p99
    %p101 = scmp.ne.s32.totalorder %s93, %s96
    %p102 = scmp.eq.s32.totalorder %s8, 0
    %p103 = por %p101, %p102
    %p104 = scmp.ne.s32.totalorder %s93, %s96
    %p105 = scmp.eq.s32.totalorder %s13, 1
    %p106 = por %p104, %p105
    %p107 = scmp.ne.s32.totalorder %s96, %s97
    %p108 = scmp.eq.s32.totalorder %s13, 0
    %p109 = por %p107, %p108
    %p110 = scmp.ne.s32.totalorder %s96, %s97
    %p111 = scmp.eq.s32.totalorder %s14, 1
    %p112 = por %p110, %p111
    %p114 = scmp.ne.s32.totalorder %s97, %s113
    %p115 = scmp.eq.s32.totalorder %s14, 0
    %p116 = por %p114, %p115
    %p117 = scmp.le.s32.totalorder 1, %s8
    %p118 = scmp.lt.s32.totalorder %s8, 3
    %p119 = pnand %p117, %p118
    %p120 = pneg %p119
    // Predicated region
    $region9: #{contrastive_loss_resnet_forward.5} parent=5 // pred_check
      _
    $region10: #{contrastive_loss_resnet_forward.5} parent=5 // pred_check_branch
      %122 = sbr.rel (%p119) target = $region12
    $region11: #{contrastive_loss_resnet_forward.5} parent=5 // pred_region
      %s123 = ssub.s32 %s8, 1
    $region12: #{contrastive_loss_resnet_forward.5} parent=5 // pred_fallthru
      _
    %p124 = scmp.lt.s32.totalorder %s8, 2
    // Predicated region
    $region13: #{contrastive_loss_resnet_forward.5} parent=5 // pred_check
      %p125 = pneg %p124
    $region14: #{contrastive_loss_resnet_forward.5} parent=5 // pred_check_branch
      %127 = sbr.rel (%p125) target = $region16
    $region15: #{contrastive_loss_resnet_forward.5} parent=5 // pred_region
      // Predicated region
      $region17: #{contrastive_loss_resnet_forward.5} parent=15 // pred_check
        %p128 = pneg %p49
      $region18: #{contrastive_loss_resnet_forward.5} parent=15 // pred_check_branch
        %130 = sbr.rel (%p128) target = $region20
      $region19: #{contrastive_loss_resnet_forward.5} parent=15 // pred_region
        %s131 = smul.u32 2, %s17
        %p132 = scmp.lt.s32.totalorder %s15, 1
        %s133 = scalar_select %p132, %s15, 1
        %p134 = scmp.lt.s32.totalorder %s131, 1
        %s135 = scalar_select %p134, %s131, 1
        %s136 = smul.addr %s133, 2
        %s137 = sadd.s32 %s135, %s136
        %s138 = smul.addr %s137, 8
        %s139 = scalar_lea.vmem %s0, %s138
        %s140 = smul.u32 2, %s17
      $region20: #{contrastive_loss_resnet_forward.5} parent=15 // pred_fallthru
        _
      // Predicated region
      $region21: #{contrastive_loss_resnet_forward.5} parent=15 // pred_check
        %p141 = pneg %p77
      $region22: #{contrastive_loss_resnet_forward.5} parent=15 // pred_check_branch
        %143 = sbr.rel (%p141) target = $region24
      $region23: #{contrastive_loss_resnet_forward.5} parent=15 // pred_region
        %s144 = smul.u32 2, %s16
        %p145 = scmp.lt.s32.totalorder %s15, 1
        %s146 = scalar_select %p145, %s15, 1
        %p147 = scmp.lt.s32.totalorder %s144, 1
        %s148 = scalar_select %p147, %s144, 1
        %s149 = smul.addr %s146, 2
        %s150 = sadd.s32 %s148, %s149
        %s151 = smul.addr %s150, 8
        %s152 = scalar_lea.vmem %s1, %s151
        %s153 = smul.u32 2, %s16
      $region24: #{contrastive_loss_resnet_forward.5} parent=15 // pred_fallthru
        _
    $region16: #{contrastive_loss_resnet_forward.5} parent=5 // pred_fallthru
      _
    %p154 = scmp.le.s32.totalorder 1, %s8
    %p155 = scmp.lt.s32.totalorder %s8, 3
    %p156 = pnand %p154, %p155
    %p157 = pneg %p156
    // Predicated region
    $region25: #{contrastive_loss_resnet_forward.5} parent=5 // pred_check
      _
    $region26: #{contrastive_loss_resnet_forward.5} parent=5 // pred_check_branch
      %159 = sbr.rel (%p156) target = $region28
    $region27: #{contrastive_loss_resnet_forward.5} parent=5 // pred_region
      %s160 = ssub.s32 %s8, 1
      %s161 = smul.u32 2, %s20
      %p162 = scmp.lt.s32.totalorder %s18, 1
      %s163 = scalar_select %p162, %s18, 1
      %p164 = scmp.lt.s32.totalorder %s161, 1
      %s165 = scalar_select %p164, %s161, 1
      %s166 = smul.addr %s163, 2
      %s167 = sadd.s32 %s165, %s166
      %s168 = smul.addr %s167, 8
      %s169 = scalar_lea.vmem %s0, %s168
      %p170 = pneg %p55
      %p171 = pneg %p52
      %s172 = smul.u32 2, %s19
      %p173 = scmp.lt.s32.totalorder %s18, 1
      %s174 = scalar_select %p173, %s18, 1
      %p175 = scmp.lt.s32.totalorder %s172, 1
      %s176 = scalar_select %p175, %s172, 1
      %s177 = smul.addr %s174, 2
      %s178 = sadd.s32 %s176, %s177
      %s179 = smul.addr %s178, 8
      %s180 = scalar_lea.vmem %s1, %s179
      %p181 = pneg %p83
      %p182 = pneg %p80
      %p183 = pneg %p109
      %p184 = pneg %p106
      %p185 = scmp.lt.s32.totalorder %s18, 1
      %s186 = scalar_select %p185, %s18, 1
      %s187 = scalar_lea.vmem %s2, %s186
      %s188 = smul.u32 2, %s20
      %p189 = scmp.lt.s32.totalorder %s18, 1
      %s190 = scalar_select %p189, %s18, 1
      %p191 = scmp.lt.s32.totalorder %s188, 1
      %s192 = scalar_select %p191, %s188, 1
      %s193 = smul.addr %s190, 2
      %s194 = sadd.s32 %s192, %s193
      %s195 = smul.addr %s194, 8
      %s196 = scalar_lea.vmem %s0, %s195
      %s197 = smul.u32 2, %s20
      %s198 = smul.u32 2, %s19
      %p199 = scmp.lt.s32.totalorder %s18, 1
      %s200 = scalar_select %p199, %s18, 1
      %p201 = scmp.lt.s32.totalorder %s198, 1
      %s202 = scalar_select %p201, %s198, 1
      %s203 = smul.addr %s200, 2
      %s204 = sadd.s32 %s202, %s203
      %s205 = smul.addr %s204, 8
      %s206 = scalar_lea.vmem %s1, %s205
      %s207 = smul.u32 2, %s19
      %p208 = scmp.lt.s32.totalorder %s18, 1
      %s209 = scalar_select %p208, %s18, 1
      %s210 = scalar_lea.vmem %s2, %s209
      %p211 = scmp.eq.s32.totalorder %s19, 0
      %p212 = scmp.eq.s32.totalorder %s20, 0
      %p213 = pnand %p211, %p212
      %p214 = pneg %p213
      // Predicated region
      $region29: #{contrastive_loss_resnet_forward.5} parent=27 // pred_check
        _
      $region30: #{contrastive_loss_resnet_forward.5} parent=27 // pred_check_branch
        %216 = sbr.rel (%p213) target = $region32
      $region31: #{contrastive_loss_resnet_forward.5} parent=27 // pred_region
        %vm217 = vcmask 122880
        %218 = vst.msk [vmem:[#allocation2] sm:$0x1] %vm217, 0.0
        %219 = vst.msk [vmem:[#allocation3] sm:$0x1] %vm217, 0.0
        %220 = vst.msk [vmem:[#allocation4] sm:$0x1] %vm217, 0.0
      $region32: #{contrastive_loss_resnet_forward.5} parent=27 // pred_fallthru
        _
      %v221 = vld [vmem:[%s196] sm:$0xff]
      %v222 = vld [vmem:[%s196 + $0x8] sm:$0xff]
      %v223 = vld [vmem:[%s206] sm:$0xff]
      %v224 = vld [vmem:[%s206 + $0x8] sm:$0xff]
      %vm225 = vcmask 261120
      %v227 = vsel %vm225, %v223, 0
      %v230 = vsel %vm225, %v224, 0
      %v233 = vsel %vm225, %v221, 0
      %v236 = vsel %vm225, %v222, 0
      %238 = vmatprep.subr.mxu0 0.0
      %239 = vmatpush1.xpose.msra.mxu0 %v233
      %240 = vmatprep.subr.mxu0 0.0
      %241 = vmatpush1.xpose.msra.mxu0 %v236
      %242 = vmatprep.subr.mxu0 0.0
      %243 = vmatpush1.xpose.msra.mxu0 0.0
      %244 = vmatprep.subr.mxu0 0.0
      %245 = vmatpush1.xpose.msra.mxu0 0.0
      %246 = vmatprep.subr.mxu0 0.0
      %247 = vmatpush1.xpose.msra.mxu0 0.0
      %248 = vmatprep.subr.mxu0 0.0
      %249 = vmatpush1.xpose.msra.mxu0 0.0
      %250 = vmatprep.subr.mxu0 0.0
      %251 = vmatpush1.xpose.msra.mxu0 0.0
      %252 = vmatprep.subr.mxu0 0.0
      %253 = vmatpush1.xpose.msra.mxu0 0.0
      %254 = vmatprep.subr.mxu0 0.0
      %255 = vmatpush1.xpose.msra.mxu0 0.0
      %256 = vmatprep.subr.mxu0 0.0
      %257 = vmatpush1.xpose.msra.mxu0 0.0
      %258 = vmatprep.subr.mxu0 0.0
      %259 = vmatpush1.xpose.msra.mxu0 0.0
      %260 = vmatprep.subr.mxu0 0.0
      %261 = vmatpush1.xpose.msra.mxu0 0.0
      %262 = vmatprep.subr.mxu0 0.0
      %263 = vmatpush1.xpose.msra.mxu0 0.0
      %264 = vmatprep.subr.mxu0 0.0
      %265 = vmatpush1.xpose.msra.mxu0 0.0
      %266 = vmatprep.subr.mxu0 0.0
      %267 = vmatpush1.xpose.msra.mxu0 0.0
      %268 = vmatprep.subr.mxu0 0.0
      %269 = vmatpush1.xpose.msra.mxu0 0.0
      %270 = vmatprep.subr.mxu0 0.0
      %271 = vmatpush1.xpose.msra.mxu0 0.0
      %272 = vmatprep.subr.mxu0 0.0
      %273 = vmatpush1.xpose.msra.mxu0 0.0
      %274 = vmatprep.subr.mxu0 0.0
      %275 = vmatpush1.xpose.msra.mxu0 0.0
      %276 = vmatprep.subr.mxu0 0.0
      %277 = vmatpush1.xpose.msra.mxu0 0.0
      %278 = vmatprep.subr.mxu0 0.0
      %279 = vmatpush1.xpose.msra.mxu0 0.0
      %280 = vmatprep.subr.mxu0 0.0
      %281 = vmatpush1.xpose.msra.mxu0 0.0
      %282 = vmatprep.subr.mxu0 0.0
      %283 = vmatpush1.xpose.msra.mxu0 0.0
      %284 = vmatprep.subr.mxu0 0.0
      %285 = vmatpush1.xpose.msra.mxu0 0.0
      %286 = vmatprep.subr.mxu0 0.0
      %287 = vmatpush1.xpose.msra.mxu0 0.0
      %288 = vmatprep.subr.mxu0 0.0
      %289 = vmatpush1.xpose.msra.mxu0 0.0
      %290 = vmatprep.subr.mxu0 0.0
      %291 = vmatpush1.xpose.msra.mxu0 0.0
      %292 = vmatprep.subr.mxu0 0.0
      %293 = vmatpush1.xpose.msra.mxu0 0.0
      %294 = vmatprep.subr.mxu0 0.0
      %295 = vmatpush1.xpose.msra.mxu0 0.0
      %296 = vmatprep.subr.mxu0 0.0
      %297 = vmatpush1.xpose.msra.mxu0 0.0
      %298 = vmatprep.subr.mxu0 0.0
      %299 = vmatpush1.xpose.msra.mxu0 0.0
      %300 = vmatprep.subr.mxu0 0.0
      %301 = vmatpush1.xpose.msra.mxu0 0.0
      %302 = vmatprep.mubr.f32.mxu0 0.0
      %303 = vmatmul.mubr.f32.gmra.mrb[0].mxu0 %v227
      %v304 = vpop.f32.mrb[0].mxu0
      %v305 = vadd.f32 0.0, %v304
      %v306 = vpop.f32.mrb[0].mxu0
      %307 = vmatprep.mubr.f32.mxu0 0.0
      %308 = vmatmul.mubr.f32.gmra.mrb[0].mxu0 %v230
      %v309 = vpop.f32.mrb[0].mxu0
      %v310 = vadd.f32 0.0, %v309
      %v311 = vpop.f32.mrb[0].mxu0
      %312 = vdwg.mxu0
      %v313 = vsub.f32 %v305, 20.0
      %v314 = vsub.f32 %v310, 20.0
      %v315 = vmul.f32 %v313, 1.442695
      %v316 = vpow.pop %v315
      %v317 = vmul.f32 %v314, 1.442695
      %v318 = vpow.pop %v317
      %vm319 = vcmask 130048
      %v321 = vsel %vm319, 1.0, 0
      %323 = vmatprep.subr.mxu0 0.0
      %324 = vmatpush1.msra.mxu0 %v316
      %325 = vmatprep.subr.mxu0 0.0
      %326 = vmatpush1.msra.mxu0 %v318
      %327 = vmatprep.subr.mxu0 0.0
      %328 = vmatpush1.msra.mxu0 0.0
      %329 = vmatprep.subr.mxu0 0.0
      %330 = vmatpush1.msra.mxu0 0.0
      %331 = vmatprep.subr.mxu0 0.0
      %332 = vmatpush1.msra.mxu0 0.0
      %333 = vmatprep.subr.mxu0 0.0
      %334 = vmatpush1.msra.mxu0 0.0
      %335 = vmatprep.subr.mxu0 0.0
      %336 = vmatpush1.msra.mxu0 0.0
      %337 = vmatprep.subr.mxu0 0.0
      %338 = vmatpush1.msra.mxu0 0.0
      %339 = vmatprep.subr.mxu0 0.0
      %340 = vmatpush1.msra.mxu0 0.0
      %341 = vmatprep.subr.mxu0 0.0
      %342 = vmatpush1.msra.mxu0 0.0
      %343 = vmatprep.subr.mxu0 0.0
      %344 = vmatpush1.msra.mxu0 0.0
      %345 = vmatprep.subr.mxu0 0.0
      %346 = vmatpush1.msra.mxu0 0.0
      %347 = vmatprep.subr.mxu0 0.0
      %348 = vmatpush1.msra.mxu0 0.0
      %349 = vmatprep.subr.mxu0 0.0
      %350 = vmatpush1.msra.mxu0 0.0
      %351 = vmatprep.subr.mxu0 0.0
      %352 = vmatpush1.msra.mxu0 0.0
      %353 = vmatprep.subr.mxu0 0.0
      %354 = vmatpush1.msra.mxu0 0.0
      %355 = vmatprep.subr.mxu0 0.0
      %356 = vmatpush1.msra.mxu0 0.0
      %357 = vmatprep.subr.mxu0 0.0
      %358 = vmatpush1.msra.mxu0 0.0
      %359 = vmatprep.subr.mxu0 0.0
      %360 = vmatpush1.msra.mxu0 0.0
      %361 = vmatprep.subr.mxu0 0.0
      %362 = vmatpush1.msra.mxu0 0.0
      %363 = vmatprep.subr.mxu0 0.0
      %364 = vmatpush1.msra.mxu0 0.0
      %365 = vmatprep.subr.mxu0 0.0
      %366 = vmatpush1.msra.mxu0 0.0
      %367 = vmatprep.subr.mxu0 0.0
      %368 = vmatpush1.msra.mxu0 0.0
      %369 = vmatprep.subr.mxu0 0.0
      %370 = vmatpush1.msra.mxu0 0.0
      %371 = vmatprep.subr.mxu0 0.0
      %372 = vmatpush1.msra.mxu0 0.0
      %373 = vmatprep.subr.mxu0 0.0
      %374 = vmatpush1.msra.mxu0 0.0
      %375 = vmatprep.subr.mxu0 0.0
      %376 = vmatpush1.msra.mxu0 0.0
      %377 = vmatprep.subr.mxu0 0.0
      %378 = vmatpush1.msra.mxu0 0.0
      %379 = vmatprep.subr.mxu0 0.0
      %380 = vmatpush1.msra.mxu0 0.0
      %381 = vmatprep.subr.mxu0 0.0
      %382 = vmatpush1.msra.mxu0 0.0
      %383 = vmatprep.subr.mxu0 0.0
      %384 = vmatpush1.msra.mxu0 0.0
      %385 = vmatprep.subr.mxu0 0.0
      %386 = vmatpush1.msra.mxu0 0.0
      %387 = vmatprep.mubr.f32.mxu0 0.0
      %388 = vmatmul.mubr.f32.gmra.mrb[0].mxu0 %v321
      %v389 = vpop.f32.mrb[0].mxu0
      %v390 = vadd.f32 0.0, %v389
      %v391 = vpop.f32.mrb[0].mxu0
      %392 = vdwg.mxu0
      %v394 = vsel %vm319, %v316, 0
      %v397 = vsel %vm319, %v318, 0
      %399 = vmatprep.subr.mxu0 0.0
      %400 = vmatpush1.xpose.msra.mxu0 %v394
      %401 = vmatprep.subr.mxu0 0.0
      %402 = vmatpush1.xpose.msra.mxu0 %v397
      %403 = vmatprep.subr.mxu0 0.0
      %404 = vmatpush1.xpose.msra.mxu0 0.0
      %405 = vmatprep.subr.mxu0 0.0
      %406 = vmatpush1.xpose.msra.mxu0 0.0
      %407 = vmatprep.subr.mxu0 0.0
      %408 = vmatpush1.xpose.msra.mxu0 0.0
      %409 = vmatprep.subr.mxu0 0.0
      %410 = vmatpush1.xpose.msra.mxu0 0.0
      %411 = vmatprep.subr.mxu0 0.0
      %412 = vmatpush1.xpose.msra.mxu0 0.0
      %413 = vmatprep.subr.mxu0 0.0
      %414 = vmatpush1.xpose.msra.mxu0 0.0
      %415 = vmatprep.subr.mxu0 0.0
      %416 = vmatpush1.xpose.msra.mxu0 0.0
      %417 = vmatprep.subr.mxu0 0.0
      %418 = vmatpush1.xpose.msra.mxu0 0.0
      %419 = vmatprep.subr.mxu0 0.0
      %420 = vmatpush1.xpose.msra.mxu0 0.0
      %421 = vmatprep.subr.mxu0 0.0
      %422 = vmatpush1.xpose.msra.mxu0 0.0
      %423 = vmatprep.subr.mxu0 0.0
      %424 = vmatpush1.xpose.msra.mxu0 0.0
      %425 = vmatprep.subr.mxu0 0.0
      %426 = vmatpush1.xpose.msra.mxu0 0.0
      %427 = vmatprep.subr.mxu0 0.0
      %428 = vmatpush1.xpose.msra.mxu0 0.0
      %429 = vmatprep.subr.mxu0 0.0
      %430 = vmatpush1.xpose.msra.mxu0 0.0
      %431 = vmatprep.subr.mxu0 0.0
      %432 = vmatpush1.xpose.msra.mxu0 0.0
      %433 = vmatprep.subr.mxu0 0.0
      %434 = vmatpush1.xpose.msra.mxu0 0.0
      %435 = vmatprep.subr.mxu0 0.0
      %436 = vmatpush1.xpose.msra.mxu0 0.0
      %437 = vmatprep.subr.mxu0 0.0
      %438 = vmatpush1.xpose.msra.mxu0 0.0
      %439 = vmatprep.subr.mxu0 0.0
      %440 = vmatpush1.xpose.msra.mxu0 0.0
      %441 = vmatprep.subr.mxu0 0.0
      %442 = vmatpush1.xpose.msra.mxu0 0.0
      %443 = vmatprep.subr.mxu0 0.0
      %444 = vmatpush1.xpose.msra.mxu0 0.0
      %445 = vmatprep.subr.mxu0 0.0
      %446 = vmatpush1.xpose.msra.mxu0 0.0
      %447 = vmatprep.subr.mxu0 0.0
      %448 = vmatpush1.xpose.msra.mxu0 0.0
      %449 = vmatprep.subr.mxu0 0.0
      %450 = vmatpush1.xpose.msra.mxu0 0.0
      %451 = vmatprep.subr.mxu0 0.0
      %452 = vmatpush1.xpose.msra.mxu0 0.0
      %453 = vmatprep.subr.mxu0 0.0
      %454 = vmatpush1.xpose.msra.mxu0 0.0
      %455 = vmatprep.subr.mxu0 0.0
      %456 = vmatpush1.xpose.msra.mxu0 0.0
      %457 = vmatprep.subr.mxu0 0.0
      %458 = vmatpush1.xpose.msra.mxu0 0.0
      %459 = vmatprep.subr.mxu0 0.0
      %460 = vmatpush1.xpose.msra.mxu0 0.0
      %461 = vmatprep.subr.mxu0 0.0
      %462 = vmatpush1.xpose.msra.mxu0 0.0
      %463 = vmatprep.mubr.f32.mxu0 0.0
      %464 = vmatmul.mubr.f32.gmra.mrb[0].mxu0 %v321
      %v465 = vpop.f32.mrb[0].mxu0
      %v466 = vadd.f32 0.0, %v465
      %v467 = vpop.f32.mrb[0].mxu0
      %468 = vdwg.mxu0
      %s469 = scalar_lea.vmem [#allocation2], %s20
      %v470 = vld [vmem:[%s469] sm:$0x1]
      %v471 = vadd.f32 %v470, %v390
      %vm472 = vcmask 122880
      %473 = vst.msk [vmem:[%s469] sm:$0x1] %vm472, %v471
      %s474 = scalar_lea.vmem [#allocation3], %s19
      %v475 = vld [vmem:[%s474] sm:$0x1]
      %v476 = vadd.f32 %v475, %v466
      %477 = vst.msk [vmem:[%s474] sm:$0x1] %vm472, %v476
      %p478 = scmp.eq.s32.totalorder %s19, %s20
      // Predicated region
      $region33: #{contrastive_loss_resnet_forward.5} parent=27 // pred_check
        %p479 = pneg %p478
      $region34: #{contrastive_loss_resnet_forward.5} parent=27 // pred_check_branch
        %481 = sbr.rel (%p479) target = $region36
      $region35: #{contrastive_loss_resnet_forward.5} parent=27 // pred_region
        %v482 = vlaneseq
        %v483 = vshrl.u32 %v482, 7
        %v484 = vadd.s32 %v483, 8
        %v485 = vlaneseq
        %v486 = vand.u32 %v485, 127
        %vm487 = vcmp.eq.s32.totalorder %v483, %v486
        %vm488 = vcmp.eq.s32.totalorder %v484, %v486
        %v489 = vsel %vm487, %v316, 0.0
        %v490 = vsel %vm488, %v318, 0.0
        %v491 = vsel %vm319, %v489, 0.0
        %v492 = vsel %vm319, %v490, 0.0
        %v493 = vadd.f32 %v491, %v492
        %v494 = vrot.slane %v493, 4
        %v495 = vadd.f32 %v493, %v494
        %v496 = vrot.slane %v495, 2
        %v497 = vadd.f32 %v495, %v496
        %v498 = vrot.slane %v497, 1
        %v499 = vadd.f32 %v497, %v498
        %s500 = scalar_lea.vmem [#allocation4], %s19
        %501 = vst.msk [vmem:[%s500] sm:$0x1] %vm472, %v499
      $region36: #{contrastive_loss_resnet_forward.5} parent=27 // pred_fallthru
        _
      // Predicated region
      $region37: #{contrastive_loss_resnet_forward.5} parent=27 // pred_check
        _
      $region38: #{contrastive_loss_resnet_forward.5} parent=27 // pred_check_branch
        %503 = sbr.rel (%p213) target = $region40
      $region39: #{contrastive_loss_resnet_forward.5} parent=27 // pred_region
        %v504 = vld [vmem:[#allocation4] sm:$0x1]
        %v505 = vld [vmem:[#allocation2] sm:$0x1]
        %v506 = vrcp.pop %v505
        %v507 = vmul.f32 %v504, %v506
        %v508 = vld [vmem:[#allocation3] sm:$0x1]
        %v509 = vrcp.pop %v508
        %v510 = vmul.f32 %v504, %v509
        %v511 = vadd.f32 %v507, %v510
        %v512 = vmul.f32 %v511, 0.5
        %v513 = vadd.f32 %v512, 1e-05
        %v514 = vlog2.pop %v513
        %v515 = vmul.f32 %v514, 0.6931472
        %v516 = vsub.f32 0.0, %v515
        %517 = vst.msk [vmem:[%s210] sm:$0x1] %vm472, %v516
      $region40: #{contrastive_loss_resnet_forward.5} parent=27 // pred_fallthru
        _
      %p518 = scmp.lt.s32.totalorder %s18, 1
      %s519 = scalar_select %p518, %s18, 1
      %s520 = scalar_lea.vmem %s2, %s519
      // Predicated region
      $region41: #{contrastive_loss_resnet_forward.5} parent=27 // pred_check
        %p521 = pneg %p106
      $region42: #{contrastive_loss_resnet_forward.5} parent=27 // pred_check_branch
        %523 = sbr.rel (%p521) target = $region44
      $region43: #{contrastive_loss_resnet_forward.5} parent=27 // pred_region
        _
      $region44: #{contrastive_loss_resnet_forward.5} parent=27 // pred_fallthru
        _
    $region28: #{contrastive_loss_resnet_forward.5} parent=5 // pred_fallthru
      _
    %p524 = scmp.le.s32.totalorder 2, %s8
    // Predicated region
    $region45: #{contrastive_loss_resnet_forward.5} parent=5 // pred_check
      %p525 = pneg %p524
    $region46: #{contrastive_loss_resnet_forward.5} parent=5 // pred_check_branch
      %527 = sbr.rel (%p525) target = $region48
    $region47: #{contrastive_loss_resnet_forward.5} parent=5 // pred_region
      %s528 = ssub.s32 %s8, 2
      // Predicated region
      $region49: #{contrastive_loss_resnet_forward.5} parent=47 // pred_check
        %p529 = pneg %p112
      $region50: #{contrastive_loss_resnet_forward.5} parent=47 // pred_check_branch
        %531 = sbr.rel (%p529) target = $region52
      $region51: #{contrastive_loss_resnet_forward.5} parent=47 // pred_region
        %p532 = scmp.lt.s32.totalorder %s21, 1
        %s533 = scalar_select %p532, %s21, 1
        %s534 = scalar_lea.vmem %s2, %s533
      $region52: #{contrastive_loss_resnet_forward.5} parent=47 // pred_fallthru
        _
    $region48: #{contrastive_loss_resnet_forward.5} parent=5 // pred_fallthru
      _
  $region6: #{contrastive_loss_resnet_forward.5} parent=0 // loop_footer
    %s12 = sadd.s32 1, %s8
  $region7: #{contrastive_loss_resnet_forward.5} parent=0 // loop_footer_branch
    %7 = sbr.rel target = $region3
  $region8: #{contrastive_loss_resnet_forward.5} parent=0 // loop_exit
    _

// kernel: contrastive_loss_resnet_forward.6
$region0: #{contrastive_loss_resnet_forward.6}
  #allocation0 [shape = 'u32[]', space=smem, size = 0x4, offset = 0x4, fixed_abs, tag = 'smem constant byte address 0x4 - core index']
  #allocation1 [shape = 'u32[144,128]{1,0:T(1,128)}', space=vmem, size = 0x12000, scoped, tag = 'internal scratch']
  #allocation2 [shape = 'f32[1,1,64]{2,1,0:T(1,128)}', space=vmem, size = 0x200, scoped, tag = 'scratch operand']
  #allocation3 [shape = 'f32[1,1,64]{2,1,0:T(1,128)}', space=vmem, size = 0x200, scoped, tag = 'scratch operand']
  #allocation4 [shape = 'f32[1,1,64]{2,1,0:T(1,128)}', space=vmem, size = 0x200, scoped, tag = 'scratch operand']
  %s0 = inlined_call_operand.vmem [shape: f32[2,64,16], index: 0, kind: input, shape index: {}]
  %s1 = inlined_call_operand.vmem [shape: f32[2,64,16], index: 1, kind: input, shape index: {}]
  %s2 = inlined_call_operand.vmem [shape: f32[2,1,64], index: 2, kind: output, shape index: {}]
  %s3 = sld [smem:[#allocation0]]
  $region53: #{contrastive_loss_resnet_forward.6} parent=0
    _
  %s5 = ssub.s32 1, %s3
  %s6 = scalar_select 0, %s5, %s3
  loop: start=0, step=1, limit=4
  $region2: #{contrastive_loss_resnet_forward.6} parent=0 // loop_pre_header
    _
  $region3: #{contrastive_loss_resnet_forward.6} parent=0 // loop_header
    %s8 = sphi 0, %s12
    %p9 = scmp.ge.s32.totalorder %s8, 4
    %s15 = sphi 0, %s34
    %s16 = sphi 0, %s30
    %s17 = sphi 0, %s26
    %s18 = sphi 0, %s15
    %s19 = sphi 0, %s16
    %s20 = sphi 0, %s17
    %s21 = sphi 0, %s18
    %s22 = sphi 0, %s19
    %s23 = sphi 0, %s20
    %s39 = sphi 0, %s41
    %s42 = sphi 0, %s39
    %s43 = sphi 0, %s42
    %s59 = sphi 0, %s43
    %s67 = sphi 0, %s69
    %s70 = sphi 0, %s67
    %s71 = sphi 0, %s70
    %s87 = sphi 0, %s71
    %s93 = sphi 0, %s95
    %s96 = sphi 0, %s93
    %s97 = sphi 0, %s96
    %s113 = sphi 0, %s97
  $region4: #{contrastive_loss_resnet_forward.6} parent=0 // loop_header_branch
    %11 = sbr.rel (%p9) target = $region8
  $region5: #{contrastive_loss_resnet_forward.6} parent=0 // loop_body
    %s13 = ssub.s32 %s8, 1
    %s14 = ssub.s32 %s8, 2
    %s24 = sadd.s32 1, %s17
    %p25 = scmp.ge.s32.totalorder %s24, 1
    %s26 = scalar_select %p25, 0, %s24
    %s27 = sadd.s32 1, %s16
    %s28 = scalar_select %p25, %s27, %s16
    %p29 = scmp.ge.s32.totalorder %s28, 1
    %s30 = scalar_select %p29, 0, %s28
    %s31 = sadd.s32 1, %s15
    %s32 = scalar_select %p29, %s31, %s15
    %p33 = scmp.ge.s32.totalorder %s32, 2
    %s34 = scalar_select %p33, 0, %s32
    %s35 = ssub.s32 %s15, %s34
    %s36 = ssub.s32 %s17, %s26
    %s37 = sor.u32 %s35, %s36
    %p38 = scmp.eq.s32.totalorder %s37, 0
    %s40 = sadd.s32 %s39, 1
    %s41 = scalar_select %p38, %s39, %s40
    %p44 = pneg %p38
    %p45 = scmp.eq.s32.totalorder %s8, 1
    %p46 = por %p44, %p45
    %p47 = scmp.ne.s32.totalorder %s39, %s42
    %p48 = scmp.eq.s32.totalorder %s8, 0
    %p49 = por %p47, %p48
    %p50 = scmp.ne.s32.totalorder %s39, %s42
    %p51 = scmp.eq.s32.totalorder %s13, 1
    %p52 = por %p50, %p51
    %p53 = scmp.ne.s32.totalorder %s42, %s43
    %p54 = scmp.eq.s32.totalorder %s13, 0
    %p55 = por %p53, %p54
    %p56 = scmp.ne.s32.totalorder %s42, %s43
    %p57 = scmp.eq.s32.totalorder %s14, 1
    %p58 = por %p56, %p57
    %p60 = scmp.ne.s32.totalorder %s43, %s59
    %p61 = scmp.eq.s32.totalorder %s14, 0
    %p62 = por %p60, %p61
    %s63 = ssub.s32 %s15, %s34
    %s64 = ssub.s32 %s16, %s30
    %s65 = sor.u32 %s63, %s64
    %p66 = scmp.eq.s32.totalorder %s65, 0
    %s68 = sadd.s32 %s67, 1
    %s69 = scalar_select %p66, %s67, %s68
    %p72 = pneg %p66
    %p73 = scmp.eq.s32.totalorder %s8, 1
    %p74 = por %p72, %p73
    %p75 = scmp.ne.s32.totalorder %s67, %s70
    %p76 = scmp.eq.s32.totalorder %s8, 0
    %p77 = por %p75, %p76
    %p78 = scmp.ne.s32.totalorder %s67, %s70
    %p79 = scmp.eq.s32.totalorder %s13, 1
    %p80 = por %p78, %p79
    %p81 = scmp.ne.s32.totalorder %s70, %s71
    %p82 = scmp.eq.s32.totalorder %s13, 0
    %p83 = por %p81, %p82
    %p84 = scmp.ne.s32.totalorder %s70, %s71
    %p85 = scmp.eq.s32.totalorder %s14, 1
    %p86 = por %p84, %p85
    %p88 = scmp.ne.s32.totalorder %s71, %s87
    %p89 = scmp.eq.s32.totalorder %s14, 0
    %p90 = por %p88, %p89
    %s91 = ssub.s32 %s15, %s34
    %p92 = scmp.eq.s32.totalorder %s91, 0
    %s94 = sadd.s32 %s93, 1
    %s95 = scalar_select %p92, %s93, %s94
    %p98 = pneg %p92
    %p99 = scmp.eq.s32.totalorder %s8, 1
    %p100 = por %p98, %p99
    %p101 = scmp.ne.s32.totalorder %s93, %s96
    %p102 = scmp.eq.s32.totalorder %s8, 0
    %p103 = por %p101, %p102
    %p104 = scmp.ne.s32.totalorder %s93, %s96
    %p105 = scmp.eq.s32.totalorder %s13, 1
    %p106 = por %p104, %p105
    %p107 = scmp.ne.s32.totalorder %s96, %s97
    %p108 = scmp.eq.s32.totalorder %s13, 0
    %p109 = por %p107, %p108
    %p110 = scmp.ne.s32.totalorder %s96, %s97
    %p111 = scmp.eq.s32.totalorder %s14, 1
    %p112 = por %p110, %p111
    %p114 = scmp.ne.s32.totalorder %s97, %s113
    %p115 = scmp.eq.s32.totalorder %s14, 0
    %p116 = por %p114, %p115
    %p117 = scmp.le.s32.totalorder 1, %s8
    %p118 = scmp.lt.s32.totalorder %s8, 3
    %p119 = pnand %p117, %p118
    %p120 = pneg %p119
    // Predicated region
    $region9: #{contrastive_loss_resnet_forward.6} parent=5 // pred_check
      _
    $region10: #{contrastive_loss_resnet_forward.6} parent=5 // pred_check_branch
      %122 = sbr.rel (%p119) target = $region12
    $region11: #{contrastive_loss_resnet_forward.6} parent=5 // pred_region
      %s123 = ssub.s32 %s8, 1
    $region12: #{contrastive_loss_resnet_forward.6} parent=5 // pred_fallthru
      _
    %p124 = scmp.lt.s32.totalorder %s8, 2
    // Predicated region
    $region13: #{contrastive_loss_resnet_forward.6} parent=5 // pred_check
      %p125 = pneg %p124
    $region14: #{contrastive_loss_resnet_forward.6} parent=5 // pred_check_branch
      %127 = sbr.rel (%p125) target = $region16
    $region15: #{contrastive_loss_resnet_forward.6} parent=5 // pred_region
      // Predicated region
      $region17: #{contrastive_loss_resnet_forward.6} parent=15 // pred_check
        %p128 = pneg %p49
      $region18: #{contrastive_loss_resnet_forward.6} parent=15 // pred_check_branch
        %130 = sbr.rel (%p128) target = $region20
      $region19: #{contrastive_loss_resnet_forward.6} parent=15 // pred_region
        %s131 = smul.u32 8, %s17
        %p132 = scmp.lt.s32.totalorder %s15, 1
        %s133 = scalar_select %p132, %s15, 1
        %p134 = scmp.lt.s32.totalorder %s131, 7
        %s135 = scalar_select %p134, %s131, 7
        %s136 = smul.addr %s133, 8
        %s137 = sadd.s32 %s135, %s136
        %s138 = smul.addr %s137, 8
        %s139 = scalar_lea.vmem %s0, %s138
        %s140 = smul.u32 8, %s17
      $region20: #{contrastive_loss_resnet_forward.6} parent=15 // pred_fallthru
        _
      // Predicated region
      $region21: #{contrastive_loss_resnet_forward.6} parent=15 // pred_check
        %p141 = pneg %p77
      $region22: #{contrastive_loss_resnet_forward.6} parent=15 // pred_check_branch
        %143 = sbr.rel (%p141) target = $region24
      $region23: #{contrastive_loss_resnet_forward.6} parent=15 // pred_region
        %s144 = smul.u32 8, %s16
        %p145 = scmp.lt.s32.totalorder %s15, 1
        %s146 = scalar_select %p145, %s15, 1
        %p147 = scmp.lt.s32.totalorder %s144, 7
        %s148 = scalar_select %p147, %s144, 7
        %s149 = smul.addr %s146, 8
        %s150 = sadd.s32 %s148, %s149
        %s151 = smul.addr %s150, 8
        %s152 = scalar_lea.vmem %s1, %s151
        %s153 = smul.u32 8, %s16
      $region24: #{contrastive_loss_resnet_forward.6} parent=15 // pred_fallthru
        _
    $region16: #{contrastive_loss_resnet_forward.6} parent=5 // pred_fallthru
      _
    %p154 = scmp.le.s32.totalorder 1, %s8
    %p155 = scmp.lt.s32.totalorder %s8, 3
    %p156 = pnand %p154, %p155
    %p157 = pneg %p156
    // Predicated region
    $region25: #{contrastive_loss_resnet_forward.6} parent=5 // pred_check
      _
    $region26: #{contrastive_loss_resnet_forward.6} parent=5 // pred_check_branch
      %159 = sbr.rel (%p156) target = $region28
    $region27: #{contrastive_loss_resnet_forward.6} parent=5 // pred_region
      %s160 = ssub.s32 %s8, 1
      %s161 = smul.u32 8, %s20
      %p162 = scmp.lt.s32.totalorder %s18, 1
      %s163 = scalar_select %p162, %s18, 1
      %p164 = scmp.lt.s32.totalorder %s161, 7
      %s165 = scalar_select %p164, %s161, 7
      %s166 = smul.addr %s163, 8
      %s167 = sadd.s32 %s165, %s166
      %s168 = smul.addr %s167, 8
      %s169 = scalar_lea.vmem %s0, %s168
      %p170 = pneg %p55
      %p171 = pneg %p52
      %s172 = smul.u32 8, %s19
      %p173 = scmp.lt.s32.totalorder %s18, 1
      %s174 = scalar_select %p173, %s18, 1
      %p175 = scmp.lt.s32.totalorder %s172, 7
      %s176 = scalar_select %p175, %s172, 7
      %s177 = smul.addr %s174, 8
      %s178 = sadd.s32 %s176, %s177
      %s179 = smul.addr %s178, 8
      %s180 = scalar_lea.vmem %s1, %s179
      %p181 = pneg %p83
      %p182 = pneg %p80
      %p183 = pneg %p109
      %p184 = pneg %p106
      %p185 = scmp.lt.s32.totalorder %s18, 1
      %s186 = scalar_select %p185, %s18, 1
      %s187 = scalar_lea.vmem %s2, %s186
      %s188 = smul.u32 8, %s20
      %p189 = scmp.lt.s32.totalorder %s18, 1
      %s190 = scalar_select %p189, %s18, 1
      %p191 = scmp.lt.s32.totalorder %s188, 7
      %s192 = scalar_select %p191, %s188, 7
      %s193 = smul.addr %s190, 8
      %s194 = sadd.s32 %s192, %s193
      %s195 = smul.addr %s194, 8
      %s196 = scalar_lea.vmem %s0, %s195
      %s197 = smul.u32 8, %s20
      %s198 = smul.u32 8, %s19
      %p199 = scmp.lt.s32.totalorder %s18, 1
      %s200 = scalar_select %p199, %s18, 1
      %p201 = scmp.lt.s32.totalorder %s198, 7
      %s202 = scalar_select %p201, %s198, 7
      %s203 = smul.addr %s200, 8
      %s204 = sadd.s32 %s202, %s203
      %s205 = smul.addr %s204, 8
      %s206 = scalar_lea.vmem %s1, %s205
      %s207 = smul.u32 8, %s19
      %p208 = scmp.lt.s32.totalorder %s18, 1
      %s209 = scalar_select %p208, %s18, 1
      %s210 = scalar_lea.vmem %s2, %s209
      %p211 = scmp.eq.s32.totalorder %s19, 0
      %p212 = scmp.eq.s32.totalorder %s20, 0
      %p213 = pnand %p211, %p212
      %p214 = pneg %p213
      // Predicated region
      $region29: #{contrastive_loss_resnet_forward.6} parent=27 // pred_check
        _
      $region30: #{contrastive_loss_resnet_forward.6} parent=27 // pred_check_branch
        %216 = sbr.rel (%p213) target = $region32
      $region31: #{contrastive_loss_resnet_forward.6} parent=27 // pred_region
        %vm217 = vcmask 516096
        %218 = vst.msk [vmem:[#allocation2] sm:$0x1] %vm217, 0.0
        %219 = vst.msk [vmem:[#allocation3] sm:$0x1] %vm217, 0.0
        %220 = vst.msk [vmem:[#allocation4] sm:$0x1] %vm217, 0.0
      $region32: #{contrastive_loss_resnet_forward.6} parent=27 // pred_fallthru
        _
      %v221 = vld [vmem:[%s196] sm:$0xff]
      %v222 = vld [vmem:[%s196 + $0x8] sm:$0xff]
      %v223 = vld [vmem:[%s196 + $0x10] sm:$0xff]
      %v224 = vld [vmem:[%s196 + $0x18] sm:$0xff]
      %v225 = vld [vmem:[%s196 + $0x20] sm:$0xff]
      %v226 = vld [vmem:[%s196 + $0x28] sm:$0xff]
      %v227 = vld [vmem:[%s196 + $0x30] sm:$0xff]
      %v228 = vld [vmem:[%s196 + $0x38] sm:$0xff]
      %v229 = vld [vmem:[%s206] sm:$0xff]
      %v230 = vld [vmem:[%s206 + $0x8] sm:$0xff]
      %v231 = vld [vmem:[%s206 + $0x10] sm:$0xff]
      %v232 = vld [vmem:[%s206 + $0x18] sm:$0xff]
      %v233 = vld [vmem:[%s206 + $0x20] sm:$0xff]
      %v234 = vld [vmem:[%s206 + $0x28] sm:$0xff]
      %v235 = vld [vmem:[%s206 + $0x30] sm:$0xff]
      %v236 = vld [vmem:[%s206 + $0x38] sm:$0xff]
      %vm237 = vcmask 130048
      %v239 = vsel %vm237, %v229, 0
      %v242 = vsel %vm237, %v230, 0
      %v245 = vsel %vm237, %v231, 0
      %v248 = vsel %vm237, %v232, 0
      %v251 = vsel %vm237, %v233, 0
      %v254 = vsel %vm237, %v234, 0
      %v257 = vsel %vm237, %v235, 0
      %v260 = vsel %vm237, %v236, 0
      %v263 = vsel %vm237, %v221, 0
      %v266 = vsel %vm237, %v222, 0
      %v269 = vsel %vm237, %v223, 0
      %v272 = vsel %vm237, %v224, 0
      %v275 = vsel %vm237, %v225, 0
      %v278 = vsel %vm237, %v226, 0
      %v281 = vsel %vm237, %v227, 0
      %v284 = vsel %vm237, %v228, 0
      %286 = vmatprep.subr.mxu0 0.0
      %287 = vmatpush1.xpose.msra.mxu0 %v263
      %288 = vmatprep.subr.mxu0 0.0
      %289 = vmatpush1.xpose.msra.mxu0 %v266
      %290 = vmatprep.subr.mxu0 0.0
      %291 = vmatpush1.xpose.msra.mxu0 %v269
      %292 = vmatprep.subr.mxu0 0.0
      %293 = vmatpush1.xpose.msra.mxu0 %v272
      %294 = vmatprep.subr.mxu0 0.0
      %295 = vmatpush1.xpose.msra.mxu0 %v275
      %296 = vmatprep.subr.mxu0 0.0
      %297 = vmatpush1.xpose.msra.mxu0 %v278
      %298 = vmatprep.subr.mxu0 0.0
      %299 = vmatpush1.xpose.msra.mxu0 %v281
      %300 = vmatprep.subr.mxu0 0.0
      %301 = vmatpush1.xpose.msra.mxu0 %v284
      %302 = vmatprep.subr.mxu0 0.0
      %303 = vmatpush1.xpose.msra.mxu0 0.0
      %304 = vmatprep.subr.mxu0 0.0
      %305 = vmatpush1.xpose.msra.mxu0 0.0
      %306 = vmatprep.subr.mxu0 0.0
      %307 = vmatpush1.xpose.msra.mxu0 0.0
      %308 = vmatprep.subr.mxu0 0.0
      %309 = vmatpush1.xpose.msra.mxu0 0.0
      %310 = vmatprep.subr.mxu0 0.0
      %311 = vmatpush1.xpose.msra.mxu0 0.0
      %312 = vmatprep.subr.mxu0 0.0
      %313 = vmatpush1.xpose.msra.mxu0 0.0
      %314 = vmatprep.subr.mxu0 0.0
      %315 = vmatpush1.xpose.msra.mxu0 0.0
      %316 = vmatprep.subr.mxu0 0.0
      %317 = vmatpush1.xpose.msra.mxu0 0.0
      %318 = vmatprep.subr.mxu0 0.0
      %319 = vmatpush1.xpose.msra.mxu0 0.0
      %320 = vmatprep.subr.mxu0 0.0
      %321 = vmatpush1.xpose.msra.mxu0 0.0
      %322 = vmatprep.subr.mxu0 0.0
      %323 = vmatpush1.xpose.msra.mxu0 0.0
      %324 = vmatprep.subr.mxu0 0.0
      %325 = vmatpush1.xpose.msra.mxu0 0.0
      %326 = vmatprep.subr.mxu0 0.0
      %327 = vmatpush1.xpose.msra.mxu0 0.0
      %328 = vmatprep.subr.mxu0 0.0
      %329 = vmatpush1.xpose.msra.mxu0 0.0
      %330 = vmatprep.subr.mxu0 0.0
      %331 = vmatpush1.xpose.msra.mxu0 0.0
      %332 = vmatprep.subr.mxu0 0.0
      %333 = vmatpush1.xpose.msra.mxu0 0.0
      %334 = vmatprep.subr.mxu0 0.0
      %335 = vmatpush1.xpose.msra.mxu0 0.0
      %336 = vmatprep.subr.mxu0 0.0
      %337 = vmatpush1.xpose.msra.mxu0 0.0
      %338 = vmatprep.subr.mxu0 0.0
      %339 = vmatpush1.xpose.msra.mxu0 0.0
      %340 = vmatprep.subr.mxu0 0.0
      %341 = vmatpush1.xpose.msra.mxu0 0.0
      %342 = vmatprep.subr.mxu0 0.0
      %343 = vmatpush1.xpose.msra.mxu0 0.0
      %344 = vmatprep.subr.mxu0 0.0
      %345 = vmatpush1.xpose.msra.mxu0 0.0
      %346 = vmatprep.subr.mxu0 0.0
      %347 = vmatpush1.xpose.msra.mxu0 0.0
      %348 = vmatprep.subr.mxu0 0.0
      %349 = vmatpush1.xpose.msra.mxu0 0.0
      %350 = vmatprep.mubr.f32.mxu0 0.0
      %351 = vmatmul.mubr.f32.gmra.mrb[0].mxu0 %v239
      %v352 = vpop.f32.mrb[0].mxu0
      %v353 = vadd.f32 0.0, %v352
      %v354 = vpop.f32.mrb[0].mxu0
      %355 = vmatprep.mubr.f32.mxu0 0.0
      %356 = vmatmul.mubr.f32.gmra.mrb[0].mxu0 %v242
      %v357 = vpop.f32.mrb[0].mxu0
      %v358 = vadd.f32 0.0, %v357
      %v359 = vpop.f32.mrb[0].mxu0
      %360 = vmatprep.mubr.f32.mxu0 0.0
      %361 = vmatmul.mubr.f32.gmra.mrb[0].mxu0 %v245
      %v362 = vpop.f32.mrb[0].mxu0
      %v363 = vadd.f32 0.0, %v362
      %v364 = vpop.f32.mrb[0].mxu0
      %365 = vmatprep.mubr.f32.mxu0 0.0
      %366 = vmatmul.mubr.f32.gmra.mrb[0].mxu0 %v248
      %v367 = vpop.f32.mrb[0].mxu0
      %v368 = vadd.f32 0.0, %v367
      %v369 = vpop.f32.mrb[0].mxu0
      %370 = vmatprep.mubr.f32.mxu0 0.0
      %371 = vmatmul.mubr.f32.gmra.mrb[0].mxu0 %v251
      %v372 = vpop.f32.mrb[0].mxu0
      %v373 = vadd.f32 0.0, %v372
      %v374 = vpop.f32.mrb[0].mxu0
      %375 = vmatprep.mubr.f32.mxu0 0.0
      %376 = vmatmul.mubr.f32.gmra.mrb[0].mxu0 %v254
      %v377 = vpop.f32.mrb[0].mxu0
      %v378 = vadd.f32 0.0, %v377
      %v379 = vpop.f32.mrb[0].mxu0
      %380 = vmatprep.mubr.f32.mxu0 0.0
      %381 = vmatmul.mubr.f32.gmra.mrb[0].mxu0 %v257
      %v382 = vpop.f32.mrb[0].mxu0
      %v383 = vadd.f32 0.0, %v382
      %v384 = vpop.f32.mrb[0].mxu0
      %385 = vmatprep.mubr.f32.mxu0 0.0
      %386 = vmatmul.mubr.f32.gmra.mrb[0].mxu0 %v260
      %v387 = vpop.f32.mrb[0].mxu0
      %v388 = vadd.f32 0.0, %v387
      %v389 = vpop.f32.mrb[0].mxu0
      %390 = vdwg.mxu0
      %v391 = vsub.f32 %v353, 20.0
      %v392 = vsub.f32 %v358, 20.0
      %v393 = vsub.f32 %v363, 20.0
      %v394 = vsub.f32 %v368, 20.0
      %v395 = vsub.f32 %v373, 20.0
      %v396 = vsub.f32 %v378, 20.0
      %v397 = vsub.f32 %v383, 20.0
      %v398 = vsub.f32 %v388, 20.0
      %v399 = vmul.f32 %v391, 1.442695
      %v400 = vpow.pop %v399
      %v401 = vmul.f32 %v392, 1.442695
      %v402 = vpow.pop %v401
      %v403 = vmul.f32 %v393, 1.442695
      %v404 = vpow.pop %v403
      %v405 = vmul.f32 %v394, 1.442695
      %v406 = vpow.pop %v405
      %v407 = vmul.f32 %v395, 1.442695
      %v408 = vpow.pop %v407
      %v409 = vmul.f32 %v396, 1.442695
      %v410 = vpow.pop %v409
      %v411 = vmul.f32 %v397, 1.442695
      %v412 = vpow.pop %v411
      %v413 = vmul.f32 %v398, 1.442695
      %v414 = vpow.pop %v413
      %vm415 = vcmask 523264
      %v417 = vsel %vm415, 1.0, 0
      %419 = vmatprep.subr.mxu0 0.0
      %420 = vmatpush1.msra.mxu0 %v400
      %421 = vmatprep.subr.mxu0 0.0
      %422 = vmatpush1.msra.mxu0 %v402
      %423 = vmatprep.subr.mxu0 0.0
      %424 = vmatpush1.msra.mxu0 %v404
      %425 = vmatprep.subr.mxu0 0.0
      %426 = vmatpush1.msra.mxu0 %v406
      %427 = vmatprep.subr.mxu0 0.0
      %428 = vmatpush1.msra.mxu0 %v408
      %429 = vmatprep.subr.mxu0 0.0
      %430 = vmatpush1.msra.mxu0 %v410
      %431 = vmatprep.subr.mxu0 0.0
      %432 = vmatpush1.msra.mxu0 %v412
      %433 = vmatprep.subr.mxu0 0.0
      %434 = vmatpush1.msra.mxu0 %v414
      %435 = vmatprep.subr.mxu0 0.0
      %436 = vmatpush1.msra.mxu0 0.0
      %437 = vmatprep.subr.mxu0 0.0
      %438 = vmatpush1.msra.mxu0 0.0
      %439 = vmatprep.subr.mxu0 0.0
      %440 = vmatpush1.msra.mxu0 0.0
      %441 = vmatprep.subr.mxu0 0.0
      %442 = vmatpush1.msra.mxu0 0.0
      %443 = vmatprep.subr.mxu0 0.0
      %444 = vmatpush1.msra.mxu0 0.0
      %445 = vmatprep.subr.mxu0 0.0
      %446 = vmatpush1.msra.mxu0 0.0
      %447 = vmatprep.subr.mxu0 0.0
      %448 = vmatpush1.msra.mxu0 0.0
      %449 = vmatprep.subr.mxu0 0.0
      %450 = vmatpush1.msra.mxu0 0.0
      %451 = vmatprep.subr.mxu0 0.0
      %452 = vmatpush1.msra.mxu0 0.0
      %453 = vmatprep.subr.mxu0 0.0
      %454 = vmatpush1.msra.mxu0 0.0
      %455 = vmatprep.subr.mxu0 0.0
      %456 = vmatpush1.msra.mxu0 0.0
      %457 = vmatprep.subr.mxu0 0.0
      %458 = vmatpush1.msra.mxu0 0.0
      %459 = vmatprep.subr.mxu0 0.0
      %460 = vmatpush1.msra.mxu0 0.0
      %461 = vmatprep.subr.mxu0 0.0
      %462 = vmatpush1.msra.mxu0 0.0
      %463 = vmatprep.subr.mxu0 0.0
      %464 = vmatpush1.msra.mxu0 0.0
      %465 = vmatprep.subr.mxu0 0.0
      %466 = vmatpush1.msra.mxu0 0.0
      %467 = vmatprep.subr.mxu0 0.0
      %468 = vmatpush1.msra.mxu0 0.0
      %469 = vmatprep.subr.mxu0 0.0
      %470 = vmatpush1.msra.mxu0 0.0
      %471 = vmatprep.subr.mxu0 0.0
      %472 = vmatpush1.msra.mxu0 0.0
      %473 = vmatprep.subr.mxu0 0.0
      %474 = vmatpush1.msra.mxu0 0.0
      %475 = vmatprep.subr.mxu0 0.0
      %476 = vmatpush1.msra.mxu0 0.0
      %477 = vmatprep.subr.mxu0 0.0
      %478 = vmatpush1.msra.mxu0 0.0
      %479 = vmatprep.subr.mxu0 0.0
      %480 = vmatpush1.msra.mxu0 0.0
      %481 = vmatprep.subr.mxu0 0.0
      %482 = vmatpush1.msra.mxu0 0.0
      %483 = vmatprep.mubr.f32.mxu0 0.0
      %484 = vmatmul.mubr.f32.gmra.mrb[0].mxu0 %v417
      %v485 = vpop.f32.mrb[0].mxu0
      %v486 = vadd.f32 0.0, %v485
      %v487 = vpop.f32.mrb[0].mxu0
      %488 = vdwg.mxu0
      %v490 = vsel %vm415, %v400, 0
      %v493 = vsel %vm415, %v402, 0
      %v496 = vsel %vm415, %v404, 0
      %v499 = vsel %vm415, %v406, 0
      %v502 = vsel %vm415, %v408, 0
      %v505 = vsel %vm415, %v410, 0
      %v508 = vsel %vm415, %v412, 0
      %v511 = vsel %vm415, %v414, 0
      %513 = vmatprep.subr.mxu0 0.0
      %514 = vmatpush1.xpose.msra.mxu0 %v490
      %515 = vmatprep.subr.mxu0 0.0
      %516 = vmatpush1.xpose.msra.mxu0 %v493
      %517 = vmatprep.subr.mxu0 0.0
      %518 = vmatpush1.xpose.msra.mxu0 %v496
      %519 = vmatprep.subr.mxu0 0.0
      %520 = vmatpush1.xpose.msra.mxu0 %v499
      %521 = vmatprep.subr.mxu0 0.0
      %522 = vmatpush1.xpose.msra.mxu0 %v502
      %523 = vmatprep.subr.mxu0 0.0
      %524 = vmatpush1.xpose.msra.mxu0 %v505
      %525 = vmatprep.subr.mxu0 0.0
      %526 = vmatpush1.xpose.msra.mxu0 %v508
      %527 = vmatprep.subr.mxu0 0.0
      %528 = vmatpush1.xpose.msra.mxu0 %v511
      %529 = vmatprep.subr.mxu0 0.0
      %530 = vmatpush1.xpose.msra.mxu0 0.0
      %531 = vmatprep.subr.mxu0 0.0
      %532 = vmatpush1.xpose.msra.mxu0 0.0
      %533 = vmatprep.subr.mxu0 0.0
      %534 = vmatpush1.xpose.msra.mxu0 0.0
      %535 = vmatprep.subr.mxu0 0.0
      %536 = vmatpush1.xpose.msra.mxu0 0.0
      %537 = vmatprep.subr.mxu0 0.0
      %538 = vmatpush1.xpose.msra.mxu0 0.0
      %539 = vmatprep.subr.mxu0 0.0
      %540 = vmatpush1.xpose.msra.mxu0 0.0
      %541 = vmatprep.subr.mxu0 0.0
      %542 = vmatpush1.xpose.msra.mxu0 0.0
      %543 = vmatprep.subr.mxu0 0.0
      %544 = vmatpush1.xpose.msra.mxu0 0.0
      %545 = vmatprep.subr.mxu0 0.0
      %546 = vmatpush1.xpose.msra.mxu0 0.0
      %547 = vmatprep.subr.mxu0 0.0
      %548 = vmatpush1.xpose.msra.mxu0 0.0
      %549 = vmatprep.subr.mxu0 0.0
      %550 = vmatpush1.xpose.msra.mxu0 0.0
      %551 = vmatprep.subr.mxu0 0.0
      %552 = vmatpush1.xpose.msra.mxu0 0.0
      %553 = vmatprep.subr.mxu0 0.0
      %554 = vmatpush1.xpose.msra.mxu0 0.0
      %555 = vmatprep.subr.mxu0 0.0
      %556 = vmatpush1.xpose.msra.mxu0 0.0
      %557 = vmatprep.subr.mxu0 0.0
      %558 = vmatpush1.xpose.msra.mxu0 0.0
      %559 = vmatprep.subr.mxu0 0.0
      %560 = vmatpush1.xpose.msra.mxu0 0.0
      %561 = vmatprep.subr.mxu0 0.0
      %562 = vmatpush1.xpose.msra.mxu0 0.0
      %563 = vmatprep.subr.mxu0 0.0
      %564 = vmatpush1.xpose.msra.mxu0 0.0
      %565 = vmatprep.subr.mxu0 0.0
      %566 = vmatpush1.xpose.msra.mxu0 0.0
      %567 = vmatprep.subr.mxu0 0.0
      %568 = vmatpush1.xpose.msra.mxu0 0.0
      %569 = vmatprep.subr.mxu0 0.0
      %570 = vmatpush1.xpose.msra.mxu0 0.0
      %571 = vmatprep.subr.mxu0 0.0
      %572 = vmatpush1.xpose.msra.mxu0 0.0
      %573 = vmatprep.subr.mxu0 0.0
      %574 = vmatpush1.xpose.msra.mxu0 0.0
      %575 = vmatprep.subr.mxu0 0.0
      %576 = vmatpush1.xpose.msra.mxu0 0.0
      %577 = vmatprep.mubr.f32.mxu0 0.0
      %578 = vmatmul.mubr.f32.gmra.mrb[0].mxu0 %v417
      %v579 = vpop.f32.mrb[0].mxu0
      %v580 = vadd.f32 0.0, %v579
      %v581 = vpop.f32.mrb[0].mxu0
      %582 = vdwg.mxu0
      %s583 = scalar_lea.vmem [#allocation2], %s20
      %v584 = vld [vmem:[%s583] sm:$0x1]
      %v585 = vadd.f32 %v584, %v486
      %vm586 = vcmask 516096
      %587 = vst.msk [vmem:[%s583] sm:$0x1] %vm586, %v585
      %s588 = scalar_lea.vmem [#allocation3], %s19
      %v589 = vld [vmem:[%s588] sm:$0x1]
      %v590 = vadd.f32 %v589, %v580
      %591 = vst.msk [vmem:[%s588] sm:$0x1] %vm586, %v590
      %p592 = scmp.eq.s32.totalorder %s19, %s20
      // Predicated region
      $region33: #{contrastive_loss_resnet_forward.6} parent=27 // pred_check
        %p593 = pneg %p592
      $region34: #{contrastive_loss_resnet_forward.6} parent=27 // pred_check_branch
        %595 = sbr.rel (%p593) target = $region36
      $region35: #{contrastive_loss_resnet_forward.6} parent=27 // pred_region
        %v596 = vlaneseq
        %v597 = vshrl.u32 %v596, 7
        %v598 = vadd.s32 %v597, 8
        %v599 = vadd.s32 %v597, 16
        %v600 = vadd.s32 %v597, 24
        %v601 = vadd.s32 %v597, 32
        %v602 = vadd.s32 %v597, 40
        %v603 = vadd.s32 %v597, 48
        %v604 = vadd.s32 %v597, 56
        %v605 = vlaneseq
        %v606 = vand.u32 %v605, 127
        %vm607 = vcmp.eq.s32.totalorder %v597, %v606
        %vm608 = vcmp.eq.s32.totalorder %v598, %v606
        %vm609 = vcmp.eq.s32.totalorder %v599, %v606
        %vm610 = vcmp.eq.s32.totalorder %v600, %v606
        %vm611 = vcmp.eq.s32.totalorder %v601, %v606
        %vm612 = vcmp.eq.s32.totalorder %v602, %v606
        %vm613 = vcmp.eq.s32.totalorder %v603, %v606
        %vm614 = vcmp.eq.s32.totalorder %v604, %v606
        %v615 = vsel %vm607, %v400, 0.0
        %v616 = vsel %vm608, %v402, 0.0
        %v617 = vsel %vm609, %v404, 0.0
        %v618 = vsel %vm610, %v406, 0.0
        %v619 = vsel %vm611, %v408, 0.0
        %v620 = vsel %vm612, %v410, 0.0
        %v621 = vsel %vm613, %v412, 0.0
        %v622 = vsel %vm614, %v414, 0.0
        %v623 = vsel %vm415, %v615, 0.0
        %v624 = vsel %vm415, %v616, 0.0
        %v625 = vadd.f32 %v623, %v624
        %v626 = vsel %vm415, %v617, 0.0
        %v627 = vadd.f32 %v625, %v626
        %v628 = vsel %vm415, %v618, 0.0
        %v629 = vadd.f32 %v627, %v628
        %v630 = vsel %vm415, %v619, 0.0
        %v631 = vadd.f32 %v629, %v630
        %v632 = vsel %vm415, %v620, 0.0
        %v633 = vadd.f32 %v631, %v632
        %v634 = vsel %vm415, %v621, 0.0
        %v635 = vadd.f32 %v633, %v634
        %v636 = vsel %vm415, %v622, 0.0
        %v637 = vadd.f32 %v635, %v636
        %v638 = vrot.slane %v637, 4
        %v639 = vadd.f32 %v637, %v638
        %v640 = vrot.slane %v639, 2
        %v641 = vadd.f32 %v639, %v640
        %v642 = vrot.slane %v641, 1
        %v643 = vadd.f32 %v641, %v642
        %s644 = scalar_lea.vmem [#allocation4], %s19
        %645 = vst.msk [vmem:[%s644] sm:$0x1] %vm586, %v643
      $region36: #{contrastive_loss_resnet_forward.6} parent=27 // pred_fallthru
        _
      // Predicated region
      $region37: #{contrastive_loss_resnet_forward.6} parent=27 // pred_check
        _
      $region38: #{contrastive_loss_resnet_forward.6} parent=27 // pred_check_branch
        %647 = sbr.rel (%p213) target = $region40
      $region39: #{contrastive_loss_resnet_forward.6} parent=27 // pred_region
        %v648 = vld [vmem:[#allocation4] sm:$0x1]
        %v649 = vld [vmem:[#allocation2] sm:$0x1]
        %v650 = vrcp.pop %v649
        %v651 = vmul.f32 %v648, %v650
        %v652 = vld [vmem:[#allocation3] sm:$0x1]
        %v653 = vrcp.pop %v652
        %v654 = vmul.f32 %v648, %v653
        %v655 = vadd.f32 %v651, %v654
        %v656 = vmul.f32 %v655, 0.5
        %v657 = vadd.f32 %v656, 1e-05
        %v658 = vlog2.pop %v657
        %v659 = vmul.f32 %v658, 0.6931472
        %v660 = vsub.f32 0.0, %v659
        %661 = vst.msk [vmem:[%s210] sm:$0x1] %vm586, %v660
      $region40: #{contrastive_loss_resnet_forward.6} parent=27 // pred_fallthru
        _
      %p662 = scmp.lt.s32.totalorder %s18, 1
      %s663 = scalar_select %p662, %s18, 1
      %s664 = scalar_lea.vmem %s2, %s663
      // Predicated region
      $region41: #{contrastive_loss_resnet_forward.6} parent=27 // pred_check
        %p665 = pneg %p106
      $region42: #{contrastive_loss_resnet_forward.6} parent=27 // pred_check_branch
        %667 = sbr.rel (%p665) target = $region44
      $region43: #{contrastive_loss_resnet_forward.6} parent=27 // pred_region
        _
      $region44: #{contrastive_loss_resnet_forward.6} parent=27 // pred_fallthru
        _
    $region28: #{contrastive_loss_resnet_forward.6} parent=5 // pred_fallthru
      _
    %p668 = scmp.le.s32.totalorder 2, %s8
    // Predicated region
    $region45: #{contrastive_loss_resnet_forward.6} parent=5 // pred_check
      %p669 = pneg %p668
    $region46: #{contrastive_loss_resnet_forward.6} parent=5 // pred_check_branch
      %671 = sbr.rel (%p669) target = $region48
    $region47: #{contrastive_loss_resnet_forward.6} parent=5 // pred_region
      %s672 = ssub.s32 %s8, 2
      // Predicated region
      $region49: #{contrastive_loss_resnet_forward.6} parent=47 // pred_check
        %p673 = pneg %p112
      $region50: #{contrastive_loss_resnet_forward.6} parent=47 // pred_check_branch
        %675 = sbr.rel (%p673) target = $region52
      $region51: #{contrastive_loss_resnet_forward.6} parent=47 // pred_region
        %p676 = scmp.lt.s32.totalorder %s21, 1
        %s677 = scalar_select %p676, %s21, 1
        %s678 = scalar_lea.vmem %s2, %s677
      $region52: #{contrastive_loss_resnet_forward.6} parent=47 // pred_fallthru
        _
    $region48: #{contrastive_loss_resnet_forward.6} parent=5 // pred_fallthru
      _
  $region6: #{contrastive_loss_resnet_forward.6} parent=0 // loop_footer
    %s12 = sadd.s32 1, %s8
  $region7: #{contrastive_loss_resnet_forward.6} parent=0 // loop_footer_branch
    %7 = sbr.rel target = $region3
  $region8: #{contrastive_loss_resnet_forward.6} parent=0 // loop_exit
    _

// kernel: contrastive_loss_resnet_forward.7
$region0: #{contrastive_loss_resnet_forward.7}
  #allocation0 [shape = 'u32[]', space=smem, size = 0x4, offset = 0x4, fixed_abs, tag = 'smem constant byte address 0x4 - core index']
  #allocation1 [shape = 'u32[144,128]{1,0:T(1,128)}', space=vmem, size = 0x12000, scoped, tag = 'internal scratch']
  #allocation2 [shape = 'f32[1,1,256]{2,1,0:T(1,128)}', space=vmem, size = 0x400, scoped, tag = 'scratch operand']
  #allocation3 [shape = 'f32[1,1,256]{2,1,0:T(1,128)}', space=vmem, size = 0x400, scoped, tag = 'scratch operand']
  #allocation4 [shape = 'f32[1,1,256]{2,1,0:T(1,128)}', space=vmem, size = 0x400, scoped, tag = 'scratch operand']
  %s0 = inlined_call_operand.vmem [shape: f32[2,256,8], index: 0, kind: input, shape index: {}]
  %s1 = inlined_call_operand.vmem [shape: f32[2,256,8], index: 1, kind: input, shape index: {}]
  %s2 = inlined_call_operand.vmem [shape: f32[2,1,256], index: 2, kind: output, shape index: {}]
  %s3 = sld [smem:[#allocation0]]
  $region53: #{contrastive_loss_resnet_forward.7} parent=0
    _
  %s5 = ssub.s32 1, %s3
  %s6 = scalar_select 0, %s5, %s3
  loop: start=0, step=1, limit=4
  $region2: #{contrastive_loss_resnet_forward.7} parent=0 // loop_pre_header
    _
  $region3: #{contrastive_loss_resnet_forward.7} parent=0 // loop_header
    %s8 = sphi 0, %s12
    %p9 = scmp.ge.s32.totalorder %s8, 4
    %s15 = sphi 0, %s34
    %s16 = sphi 0, %s30
    %s17 = sphi 0, %s26
    %s18 = sphi 0, %s15
    %s19 = sphi 0, %s16
    %s20 = sphi 0, %s17
    %s21 = sphi 0, %s18
    %s22 = sphi 0, %s19
    %s23 = sphi 0, %s20
    %s39 = sphi 0, %s41
    %s42 = sphi 0, %s39
    %s43 = sphi 0, %s42
    %s59 = sphi 0, %s43
    %s67 = sphi 0, %s69
    %s70 = sphi 0, %s67
    %s71 = sphi 0, %s70
    %s87 = sphi 0, %s71
    %s93 = sphi 0, %s95
    %s96 = sphi 0, %s93
    %s97 = sphi 0, %s96
    %s113 = sphi 0, %s97
  $region4: #{contrastive_loss_resnet_forward.7} parent=0 // loop_header_branch
    %11 = sbr.rel (%p9) target = $region8
  $region5: #{contrastive_loss_resnet_forward.7} parent=0 // loop_body
    %s13 = ssub.s32 %s8, 1
    %s14 = ssub.s32 %s8, 2
    %s24 = sadd.s32 1, %s17
    %p25 = scmp.ge.s32.totalorder %s24, 1
    %s26 = scalar_select %p25, 0, %s24
    %s27 = sadd.s32 1, %s16
    %s28 = scalar_select %p25, %s27, %s16
    %p29 = scmp.ge.s32.totalorder %s28, 1
    %s30 = scalar_select %p29, 0, %s28
    %s31 = sadd.s32 1, %s15
    %s32 = scalar_select %p29, %s31, %s15
    %p33 = scmp.ge.s32.totalorder %s32, 2
    %s34 = scalar_select %p33, 0, %s32
    %s35 = ssub.s32 %s15, %s34
    %s36 = ssub.s32 %s17, %s26
    %s37 = sor.u32 %s35, %s36
    %p38 = scmp.eq.s32.totalorder %s37, 0
    %s40 = sadd.s32 %s39, 1
    %s41 = scalar_select %p38, %s39, %s40
    %p44 = pneg %p38
    %p45 = scmp.eq.s32.totalorder %s8, 1
    %p46 = por %p44, %p45
    %p47 = scmp.ne.s32.totalorder %s39, %s42
    %p48 = scmp.eq.s32.totalorder %s8, 0
    %p49 = por %p47, %p48
    %p50 = scmp.ne.s32.totalorder %s39, %s42
    %p51 = scmp.eq.s32.totalorder %s13, 1
    %p52 = por %p50, %p51
    %p53 = scmp.ne.s32.totalorder %s42, %s43
    %p54 = scmp.eq.s32.totalorder %s13, 0
    %p55 = por %p53, %p54
    %p56 = scmp.ne.s32.totalorder %s42, %s43
    %p57 = scmp.eq.s32.totalorder %s14, 1
    %p58 = por %p56, %p57
    %p60 = scmp.ne.s32.totalorder %s43, %s59
    %p61 = scmp.eq.s32.totalorder %s14, 0
    %p62 = por %p60, %p61
    %s63 = ssub.s32 %s15, %s34
    %s64 = ssub.s32 %s16, %s30
    %s65 = sor.u32 %s63, %s64
    %p66 = scmp.eq.s32.totalorder %s65, 0
    %s68 = sadd.s32 %s67, 1
    %s69 = scalar_select %p66, %s67, %s68
    %p72 = pneg %p66
    %p73 = scmp.eq.s32.totalorder %s8, 1
    %p74 = por %p72, %p73
    %p75 = scmp.ne.s32.totalorder %s67, %s70
    %p76 = scmp.eq.s32.totalorder %s8, 0
    %p77 = por %p75, %p76
    %p78 = scmp.ne.s32.totalorder %s67, %s70
    %p79 = scmp.eq.s32.totalorder %s13, 1
    %p80 = por %p78, %p79
    %p81 = scmp.ne.s32.totalorder %s70, %s71
    %p82 = scmp.eq.s32.totalorder %s13, 0
    %p83 = por %p81, %p82
    %p84 = scmp.ne.s32.totalorder %s70, %s71
    %p85 = scmp.eq.s32.totalorder %s14, 1
    %p86 = por %p84, %p85
    %p88 = scmp.ne.s32.totalorder %s71, %s87
    %p89 = scmp.eq.s32.totalorder %s14, 0
    %p90 = por %p88, %p89
    %s91 = ssub.s32 %s15, %s34
    %p92 = scmp.eq.s32.totalorder %s91, 0
    %s94 = sadd.s32 %s93, 1
    %s95 = scalar_select %p92, %s93, %s94
    %p98 = pneg %p92
    %p99 = scmp.eq.s32.totalorder %s8, 1
    %p100 = por %p98, %p99
    %p101 = scmp.ne.s32.totalorder %s93, %s96
    %p102 = scmp.eq.s32.totalorder %s8, 0
    %p103 = por %p101, %p102
    %p104 = scmp.ne.s32.totalorder %s93, %s96
    %p105 = scmp.eq.s32.totalorder %s13, 1
    %p106 = por %p104, %p105
    %p107 = scmp.ne.s32.totalorder %s96, %s97
    %p108 = scmp.eq.s32.totalorder %s13, 0
    %p109 = por %p107, %p108
    %p110 = scmp.ne.s32.totalorder %s96, %s97
    %p111 = scmp.eq.s32.totalorder %s14, 1
    %p112 = por %p110, %p111
    %p114 = scmp.ne.s32.totalorder %s97, %s113
    %p115 = scmp.eq.s32.totalorder %s14, 0
    %p116 = por %p114, %p115
    %p117 = scmp.le.s32.totalorder 1, %s8
    %p118 = scmp.lt.s32.totalorder %s8, 3
    %p119 = pnand %p117, %p118
    %p120 = pneg %p119
    // Predicated region
    $region9: #{contrastive_loss_resnet_forward.7} parent=5 // pred_check
      _
    $region10: #{contrastive_loss_resnet_forward.7} parent=5 // pred_check_branch
      %122 = sbr.rel (%p119) target = $region12
    $region11: #{contrastive_loss_resnet_forward.7} parent=5 // pred_region
      %s123 = ssub.s32 %s8, 1
    $region12: #{contrastive_loss_resnet_forward.7} parent=5 // pred_fallthru
      _
    %p124 = scmp.lt.s32.totalorder %s8, 2
    // Predicated region
    $region13: #{contrastive_loss_resnet_forward.7} parent=5 // pred_check
      %p125 = pneg %p124
    $region14: #{contrastive_loss_resnet_forward.7} parent=5 // pred_check_branch
      %127 = sbr.rel (%p125) target = $region16
    $region15: #{contrastive_loss_resnet_forward.7} parent=5 // pred_region
      // Predicated region
      $region17: #{contrastive_loss_resnet_forward.7} parent=15 // pred_check
        %p128 = pneg %p49
      $region18: #{contrastive_loss_resnet_forward.7} parent=15 // pred_check_branch
        %130 = sbr.rel (%p128) target = $region20
      $region19: #{contrastive_loss_resnet_forward.7} parent=15 // pred_region
        %s131 = smul.u32 32, %s17
        %p132 = scmp.lt.s32.totalorder %s15, 1
        %s133 = scalar_select %p132, %s15, 1
        %p134 = scmp.lt.s32.totalorder %s131, 31
        %s135 = scalar_select %p134, %s131, 31
        %s136 = smul.addr %s133, 32
        %s137 = sadd.s32 %s135, %s136
        %s138 = smul.addr %s137, 8
        %s139 = scalar_lea.vmem %s0, %s138
        %s140 = smul.u32 32, %s17
      $region20: #{contrastive_loss_resnet_forward.7} parent=15 // pred_fallthru
        _
      // Predicated region
      $region21: #{contrastive_loss_resnet_forward.7} parent=15 // pred_check
        %p141 = pneg %p77
      $region22: #{contrastive_loss_resnet_forward.7} parent=15 // pred_check_branch
        %143 = sbr.rel (%p141) target = $region24
      $region23: #{contrastive_loss_resnet_forward.7} parent=15 // pred_region
        %s144 = smul.u32 32, %s16
        %p145 = scmp.lt.s32.totalorder %s15, 1
        %s146 = scalar_select %p145, %s15, 1
        %p147 = scmp.lt.s32.totalorder %s144, 31
        %s148 = scalar_select %p147, %s144, 31
        %s149 = smul.addr %s146, 32
        %s150 = sadd.s32 %s148, %s149
        %s151 = smul.addr %s150, 8
        %s152 = scalar_lea.vmem %s1, %s151
        %s153 = smul.u32 32, %s16
      $region24: #{contrastive_loss_resnet_forward.7} parent=15 // pred_fallthru
        _
    $region16: #{contrastive_loss_resnet_forward.7} parent=5 // pred_fallthru
      _
    %p154 = scmp.le.s32.totalorder 1, %s8
    %p155 = scmp.lt.s32.totalorder %s8, 3
    %p156 = pnand %p154, %p155
    %p157 = pneg %p156
    // Predicated region
    $region25: #{contrastive_loss_resnet_forward.7} parent=5 // pred_check
      _
    $region26: #{contrastive_loss_resnet_forward.7} parent=5 // pred_check_branch
      %159 = sbr.rel (%p156) target = $region28
    $region27: #{contrastive_loss_resnet_forward.7} parent=5 // pred_region
      %s160 = ssub.s32 %s8, 1
      %s161 = smul.u32 32, %s20
      %p162 = scmp.lt.s32.totalorder %s18, 1
      %s163 = scalar_select %p162, %s18, 1
      %p164 = scmp.lt.s32.totalorder %s161, 31
      %s165 = scalar_select %p164, %s161, 31
      %s166 = smul.addr %s163, 32
      %s167 = sadd.s32 %s165, %s166
      %s168 = smul.addr %s167, 8
      %s169 = scalar_lea.vmem %s0, %s168
      %p170 = pneg %p55
      %p171 = pneg %p52
      %s172 = smul.u32 32, %s19
      %p173 = scmp.lt.s32.totalorder %s18, 1
      %s174 = scalar_select %p173, %s18, 1
      %p175 = scmp.lt.s32.totalorder %s172, 31
      %s176 = scalar_select %p175, %s172, 31
      %s177 = smul.addr %s174, 32
      %s178 = sadd.s32 %s176, %s177
      %s179 = smul.addr %s178, 8
      %s180 = scalar_lea.vmem %s1, %s179
      %p181 = pneg %p83
      %p182 = pneg %p80
      %p183 = pneg %p109
      %p184 = pneg %p106
      %p185 = scmp.lt.s32.totalorder %s18, 1
      %s186 = scalar_select %p185, %s18, 1
      %s187 = smul.addr %s186, 2
      %s188 = scalar_lea.vmem %s2, %s187
      %s189 = smul.u32 32, %s20
      %p190 = scmp.lt.s32.totalorder %s18, 1
      %s191 = scalar_select %p190, %s18, 1
      %p192 = scmp.lt.s32.totalorder %s189, 31
      %s193 = scalar_select %p192, %s189, 31
      %s194 = smul.addr %s191, 32
      %s195 = sadd.s32 %s193, %s194
      %s196 = smul.addr %s195, 8
      %s197 = scalar_lea.vmem %s0, %s196
      %s198 = smul.u32 32, %s20
      %s199 = smul.u32 32, %s19
      %p200 = scmp.lt.s32.totalorder %s18, 1
      %s201 = scalar_select %p200, %s18, 1
      %p202 = scmp.lt.s32.totalorder %s199, 31
      %s203 = scalar_select %p202, %s199, 31
      %s204 = smul.addr %s201, 32
      %s205 = sadd.s32 %s203, %s204
      %s206 = smul.addr %s205, 8
      %s207 = scalar_lea.vmem %s1, %s206
      %s208 = smul.u32 32, %s19
      %p209 = scmp.lt.s32.totalorder %s18, 1
      %s210 = scalar_select %p209, %s18, 1
      %s211 = smul.addr %s210, 2
      %s212 = scalar_lea.vmem %s2, %s211
      %p213 = scmp.eq.s32.totalorder %s19, 0
      %p214 = scmp.eq.s32.totalorder %s20, 0
      %p215 = pnand %p213, %p214
      %p216 = pneg %p215
      // Predicated region
      $region29: #{contrastive_loss_resnet_forward.7} parent=27 // pred_check
        _
      $region30: #{contrastive_loss_resnet_forward.7} parent=27 // pred_check_branch
        %218 = sbr.rel (%p215) target = $region32
      $region31: #{contrastive_loss_resnet_forward.7} parent=27 // pred_region
        %v219 = vlaneseq
        %vm220 = vcmp.ge.s32.totalorder %v219, 0
        %vm221 = vcmp.lt.s32.totalorder %v219, 256
        %vm222 = vmand %vm220, %vm221
        %223 = vst.msk [vmem:[#allocation2] sm:$0x3] %vm222, 0.0
        %224 = vst.msk [vmem:[#allocation3] sm:$0x3] %vm222, 0.0
        %225 = vst.msk [vmem:[#allocation4] sm:$0x3] %vm222, 0.0
      $region32: #{contrastive_loss_resnet_forward.7} parent=27 // pred_fallthru
        _
      %v226 = vld [vmem:[%s197] sm:$0xff]
      %v227 = vld [vmem:[%s197 + $0x8] sm:$0xff]
      %v228 = vld [vmem:[%s197 + $0x10] sm:$0xff]
      %v229 = vld [vmem:[%s197 + $0x18] sm:$0xff]
      %v230 = vld [vmem:[%s197 + $0x20] sm:$0xff]
      %v231 = vld [vmem:[%s197 + $0x28] sm:$0xff]
      %v232 = vld [vmem:[%s197 + $0x30] sm:$0xff]
      %v233 = vld [vmem:[%s197 + $0x38] sm:$0xff]
      %v234 = vld [vmem:[%s197 + $0x40] sm:$0xff]
      %v235 = vld [vmem:[%s197 + $0x48] sm:$0xff]
      %v236 = vld [vmem:[%s197 + $0x50] sm:$0xff]
      %v237 = vld [vmem:[%s197 + $0x58] sm:$0xff]
      %v238 = vld [vmem:[%s197 + $0x60] sm:$0xff]
      %v239 = vld [vmem:[%s197 + $0x68] sm:$0xff]
      %v240 = vld [vmem:[%s197 + $0x70] sm:$0xff]
      %v241 = vld [vmem:[%s197 + $0x78] sm:$0xff]
      %v242 = vld [vmem:[%s197 + $0x80] sm:$0xff]
      %v243 = vld [vmem:[%s197 + $0x88] sm:$0xff]
      %v244 = vld [vmem:[%s197 + $0x90] sm:$0xff]
      %v245 = vld [vmem:[%s197 + $0x98] sm:$0xff]
      %v246 = vld [vmem:[%s197 + $0xa0] sm:$0xff]
      %v247 = vld [vmem:[%s197 + $0xa8] sm:$0xff]
      %v248 = vld [vmem:[%s197 + $0xb0] sm:$0xff]
      %v249 = vld [vmem:[%s197 + $0xb8] sm:$0xff]
      %v250 = vld [vmem:[%s197 + $0xc0] sm:$0xff]
      %v251 = vld [vmem:[%s197 + $0xc8] sm:$0xff]
      %v252 = vld [vmem:[%s197 + $0xd0] sm:$0xff]
      %v253 = vld [vmem:[%s197 + $0xd8] sm:$0xff]
      %v254 = vld [vmem:[%s197 + $0xe0] sm:$0xff]
      %v255 = vld [vmem:[%s197 + $0xe8] sm:$0xff]
      %v256 = vld [vmem:[%s197 + $0xf0] sm:$0xff]
      %v257 = vld [vmem:[%s197 + $0xf8] sm:$0xff]
      %v258 = vld [vmem:[%s207] sm:$0xff]
      %v259 = vld [vmem:[%s207 + $0x8] sm:$0xff]
      %v260 = vld [vmem:[%s207 + $0x10] sm:$0xff]
      %v261 = vld [vmem:[%s207 + $0x18] sm:$0xff]
      %v262 = vld [vmem:[%s207 + $0x20] sm:$0xff]
      %v263 = vld [vmem:[%s207 + $0x28] sm:$0xff]
      %v264 = vld [vmem:[%s207 + $0x30] sm:$0xff]
      %v265 = vld [vmem:[%s207 + $0x38] sm:$0xff]
      %v266 = vld [vmem:[%s207 + $0x40] sm:$0xff]
      %v267 = vld [vmem:[%s207 + $0x48] sm:$0xff]
      %v268 = vld [vmem:[%s207 + $0x50] sm:$0xff]
      %v269 = vld [vmem:[%s207 + $0x58] sm:$0xff]
      %v270 = vld [vmem:[%s207 + $0x60] sm:$0xff]
      %v271 = vld [vmem:[%s207 + $0x68] sm:$0xff]
      %v272 = vld [vmem:[%s207 + $0x70] sm:$0xff]
      %v273 = vld [vmem:[%s207 + $0x78] sm:$0xff]
      %v274 = vld [vmem:[%s207 + $0x80] sm:$0xff]
      %v275 = vld [vmem:[%s207 + $0x88] sm:$0xff]
      %v276 = vld [vmem:[%s207 + $0x90] sm:$0xff]
      %v277 = vld [vmem:[%s207 + $0x98] sm:$0xff]
      %v278 = vld [vmem:[%s207 + $0xa0] sm:$0xff]
      %v279 = vld [vmem:[%s207 + $0xa8] sm:$0xff]
      %v280 = vld [vmem:[%s207 + $0xb0] sm:$0xff]
      %v281 = vld [vmem:[%s207 + $0xb8] sm:$0xff]
      %v282 = vld [vmem:[%s207 + $0xc0] sm:$0xff]
      %v283 = vld [vmem:[%s207 + $0xc8] sm:$0xff]
      %v284 = vld [vmem:[%s207 + $0xd0] sm:$0xff]
      %v285 = vld [vmem:[%s207 + $0xd8] sm:$0xff]
      %v286 = vld [vmem:[%s207 + $0xe0] sm:$0xff]
      %v287 = vld [vmem:[%s207 + $0xe8] sm:$0xff]
      %v288 = vld [vmem:[%s207 + $0xf0] sm:$0xff]
      %v289 = vld [vmem:[%s207 + $0xf8] sm:$0xff]
      %vm290 = vcmask 64512
      %v292 = vsel %vm290, %v258, 0
      %v295 = vsel %vm290, %v259, 0
      %v298 = vsel %vm290, %v260, 0
      %v301 = vsel %vm290, %v261, 0
      %v304 = vsel %vm290, %v262, 0
      %v307 = vsel %vm290, %v263, 0
      %v310 = vsel %vm290, %v264, 0
      %v313 = vsel %vm290, %v265, 0
      %v316 = vsel %vm290, %v266, 0
      %v319 = vsel %vm290, %v267, 0
      %v322 = vsel %vm290, %v268, 0
      %v325 = vsel %vm290, %v269, 0
      %v328 = vsel %vm290, %v270, 0
      %v331 = vsel %vm290, %v271, 0
      %v334 = vsel %vm290, %v272, 0
      %v337 = vsel %vm290, %v273, 0
      %v340 = vsel %vm290, %v274, 0
      %v343 = vsel %vm290, %v275, 0
      %v346 = vsel %vm290, %v276, 0
      %v349 = vsel %vm290, %v277, 0
      %v352 = vsel %vm290, %v278, 0
      %v355 = vsel %vm290, %v279, 0
      %v358 = vsel %vm290, %v280, 0
      %v361 = vsel %vm290, %v281, 0
      %v364 = vsel %vm290, %v282, 0
      %v367 = vsel %vm290, %v283, 0
      %v370 = vsel %vm290, %v284, 0
      %v373 = vsel %vm290, %v285, 0
      %v376 = vsel %vm290, %v286, 0
      %v379 = vsel %vm290, %v287, 0
      %v382 = vsel %vm290, %v288, 0
      %v385 = vsel %vm290, %v289, 0
      %v388 = vsel %vm290, %v226, 0
      %v391 = vsel %vm290, %v227, 0
      %v394 = vsel %vm290, %v228, 0
      %v397 = vsel %vm290, %v229, 0
      %v400 = vsel %vm290, %v230, 0
      %v403 = vsel %vm290, %v231, 0
      %v406 = vsel %vm290, %v232, 0
      %v409 = vsel %vm290, %v233, 0
      %v412 = vsel %vm290, %v234, 0
      %v415 = vsel %vm290, %v235, 0
      %v418 = vsel %vm290, %v236, 0
      %v421 = vsel %vm290, %v237, 0
      %v424 = vsel %vm290, %v238, 0
      %v427 = vsel %vm290, %v239, 0
      %v430 = vsel %vm290, %v240, 0
      %v433 = vsel %vm290, %v241, 0
      %v436 = vsel %vm290, %v242, 0
      %v439 = vsel %vm290, %v243, 0
      %v442 = vsel %vm290, %v244, 0
      %v445 = vsel %vm290, %v245, 0
      %v448 = vsel %vm290, %v246, 0
      %v451 = vsel %vm290, %v247, 0
      %v454 = vsel %vm290, %v248, 0
      %v457 = vsel %vm290, %v249, 0
      %v460 = vsel %vm290, %v250, 0
      %v463 = vsel %vm290, %v251, 0
      %v466 = vsel %vm290, %v252, 0
      %v469 = vsel %vm290, %v253, 0
      %v472 = vsel %vm290, %v254, 0
      %v475 = vsel %vm290, %v255, 0
      %v478 = vsel %vm290, %v256, 0
      %v481 = vsel %vm290, %v257, 0
      %483 = vmatprep.subr.mxu0 0.0
      %484 = vmatpush1.xpose.msra.mxu0 %v388
      %485 = vmatprep.subr.mxu0 0.0
      %486 = vmatpush1.xpose.msra.mxu0 %v391
      %487 = vmatprep.subr.mxu0 0.0
      %488 = vmatpush1.xpose.msra.mxu0 %v394
      %489 = vmatprep.subr.mxu0 0.0
      %490 = vmatpush1.xpose.msra.mxu0 %v397
      %491 = vmatprep.subr.mxu0 0.0
      %492 = vmatpush1.xpose.msra.mxu0 %v400
      %493 = vmatprep.subr.mxu0 0.0
      %494 = vmatpush1.xpose.msra.mxu0 %v403
      %495 = vmatprep.subr.mxu0 0.0
      %496 = vmatpush1.xpose.msra.mxu0 %v406
      %497 = vmatprep.subr.mxu0 0.0
      %498 = vmatpush1.xpose.msra.mxu0 %v409
      %499 = vmatprep.subr.mxu0 0.0
      %500 = vmatpush1.xpose.msra.mxu0 %v412
      %501 = vmatprep.subr.mxu0 0.0
      %502 = vmatpush1.xpose.msra.mxu0 %v415
      %503 = vmatprep.subr.mxu0 0.0
      %504 = vmatpush1.xpose.msra.mxu0 %v418
      %505 = vmatprep.subr.mxu0 0.0
      %506 = vmatpush1.xpose.msra.mxu0 %v421
      %507 = vmatprep.subr.mxu0 0.0
      %508 = vmatpush1.xpose.msra.mxu0 %v424
      %509 = vmatprep.subr.mxu0 0.0
      %510 = vmatpush1.xpose.msra.mxu0 %v427
      %511 = vmatprep.subr.mxu0 0.0
      %512 = vmatpush1.xpose.msra.mxu0 %v430
      %513 = vmatprep.subr.mxu0 0.0
      %514 = vmatpush1.xpose.msra.mxu0 %v433
      %515 = vmatprep.subr.mxu0 0.0
      %516 = vmatpush1.xpose.msra.mxu0 %v436
      %517 = vmatprep.subr.mxu0 0.0
      %518 = vmatpush1.xpose.msra.mxu0 %v439
      %519 = vmatprep.subr.mxu0 0.0
      %520 = vmatpush1.xpose.msra.mxu0 %v442
      %521 = vmatprep.subr.mxu0 0.0
      %522 = vmatpush1.xpose.msra.mxu0 %v445
      %523 = vmatprep.subr.mxu0 0.0
      %524 = vmatpush1.xpose.msra.mxu0 %v448
      %525 = vmatprep.subr.mxu0 0.0
      %526 = vmatpush1.xpose.msra.mxu0 %v451
      %527 = vmatprep.subr.mxu0 0.0
      %528 = vmatpush1.xpose.msra.mxu0 %v454
      %529 = vmatprep.subr.mxu0 0.0
      %530 = vmatpush1.xpose.msra.mxu0 %v457
      %531 = vmatprep.subr.mxu0 0.0
      %532 = vmatpush1.xpose.msra.mxu0 %v460
      %533 = vmatprep.subr.mxu0 0.0
      %534 = vmatpush1.xpose.msra.mxu0 %v463
      %535 = vmatprep.subr.mxu0 0.0
      %536 = vmatpush1.xpose.msra.mxu0 %v466
      %537 = vmatprep.subr.mxu0 0.0
      %538 = vmatpush1.xpose.msra.mxu0 %v469
      %539 = vmatprep.subr.mxu0 0.0
      %540 = vmatpush1.xpose.msra.mxu0 %v472
      %541 = vmatprep.subr.mxu0 0.0
      %542 = vmatpush1.xpose.msra.mxu0 %v475
      %543 = vmatprep.subr.mxu0 0.0
      %544 = vmatpush1.xpose.msra.mxu0 %v478
      %545 = vmatprep.subr.mxu0 0.0
      %546 = vmatpush1.xpose.msra.mxu0 %v481
      %547 = vmatprep.mubr.f32.mxu0 0.0
      %548 = vmatmul.mubr.f32.gmra.mrb[0].mxu0 %v292
      %v549 = vpop.f32.mrb[0].mxu0
      %v550 = vadd.f32 0.0, %v549
      %v551 = vpop.f32.mrb[0].mxu0
      %v552 = vadd.f32 0.0, %v551
      %553 = vmatprep.mubr.f32.mxu0 0.0
      %554 = vmatmul.mubr.f32.gmra.mrb[0].mxu0 %v295
      %v555 = vpop.f32.mrb[0].mxu0
      %v556 = vadd.f32 0.0, %v555
      %v557 = vpop.f32.mrb[0].mxu0
      %v558 = vadd.f32 0.0, %v557
      %559 = vmatprep.mubr.f32.mxu0 0.0
      %560 = vmatmul.mubr.f32.gmra.mrb[0].mxu0 %v298
      %v561 = vpop.f32.mrb[0].mxu0
      %v562 = vadd.f32 0.0, %v561
      %v563 = vpop.f32.mrb[0].mxu0
      %v564 = vadd.f32 0.0, %v563
      %565 = vmatprep.mubr.f32.mxu0 0.0
      %566 = vmatmul.mubr.f32.gmra.mrb[0].mxu0 %v301
      %v567 = vpop.f32.mrb[0].mxu0
      %v568 = vadd.f32 0.0, %v567
      %v569 = vpop.f32.mrb[0].mxu0
      %v570 = vadd.f32 0.0, %v569
      %571 = vmatprep.mubr.f32.mxu0 0.0
      %572 = vmatmul.mubr.f32.gmra.mrb[0].mxu0 %v304
      %v573 = vpop.f32.mrb[0].mxu0
      %v574 = vadd.f32 0.0, %v573
      %v575 = vpop.f32.mrb[0].mxu0
      %v576 = vadd.f32 0.0, %v575
      %577 = vmatprep.mubr.f32.mxu0 0.0
      %578 = vmatmul.mubr.f32.gmra.mrb[0].mxu0 %v307
      %v579 = vpop.f32.mrb[0].mxu0
      %v580 = vadd.f32 0.0, %v579
      %v581 = vpop.f32.mrb[0].mxu0
      %v582 = vadd.f32 0.0, %v581
      %583 = vmatprep.mubr.f32.mxu0 0.0
      %584 = vmatmul.mubr.f32.gmra.mrb[0].mxu0 %v310
      %v585 = vpop.f32.mrb[0].mxu0
      %v586 = vadd.f32 0.0, %v585
      %v587 = vpop.f32.mrb[0].mxu0
      %v588 = vadd.f32 0.0, %v587
      %589 = vmatprep.mubr.f32.mxu0 0.0
      %590 = vmatmul.mubr.f32.gmra.mrb[0].mxu0 %v313
      %v591 = vpop.f32.mrb[0].mxu0
      %v592 = vadd.f32 0.0, %v591
      %v593 = vpop.f32.mrb[0].mxu0
      %v594 = vadd.f32 0.0, %v593
      %595 = vmatprep.mubr.f32.mxu0 0.0
      %596 = vmatmul.mubr.f32.gmra.mrb[0].mxu0 %v316
      %v597 = vpop.f32.mrb[0].mxu0
      %v598 = vadd.f32 0.0, %v597
      %v599 = vpop.f32.mrb[0].mxu0
      %v600 = vadd.f32 0.0, %v599
      %601 = vmatprep.mubr.f32.mxu0 0.0
      %602 = vmatmul.mubr.f32.gmra.mrb[0].mxu0 %v319
      %v603 = vpop.f32.mrb[0].mxu0
      %v604 = vadd.f32 0.0, %v603
      %v605 = vpop.f32.mrb[0].mxu0
      %v606 = vadd.f32 0.0, %v605
      %607 = vmatprep.mubr.f32.mxu0 0.0
      %608 = vmatmul.mubr.f32.gmra.mrb[0].mxu0 %v322
      %v609 = vpop.f32.mrb[0].mxu0
      %v610 = vadd.f32 0.0, %v609
      %v611 = vpop.f32.mrb[0].mxu0
      %v612 = vadd.f32 0.0, %v611
      %613 = vmatprep.mubr.f32.mxu0 0.0
      %614 = vmatmul.mubr.f32.gmra.mrb[0].mxu0 %v325
      %v615 = vpop.f32.mrb[0].mxu0
      %v616 = vadd.f32 0.0, %v615
      %v617 = vpop.f32.mrb[0].mxu0
      %v618 = vadd.f32 0.0, %v617
      %619 = vmatprep.mubr.f32.mxu0 0.0
      %620 = vmatmul.mubr.f32.gmra.mrb[0].mxu0 %v328
      %v621 = vpop.f32.mrb[0].mxu0
      %v622 = vadd.f32 0.0, %v621
      %v623 = vpop.f32.mrb[0].mxu0
      %v624 = vadd.f32 0.0, %v623
      %625 = vmatprep.mubr.f32.mxu0 0.0
      %626 = vmatmul.mubr.f32.gmra.mrb[0].mxu0 %v331
      %v627 = vpop.f32.mrb[0].mxu0
      %v628 = vadd.f32 0.0, %v627
      %v629 = vpop.f32.mrb[0].mxu0
      %v630 = vadd.f32 0.0, %v629
      %631 = vmatprep.mubr.f32.mxu0 0.0
      %632 = vmatmul.mubr.f32.gmra.mrb[0].mxu0 %v334
      %v633 = vpop.f32.mrb[0].mxu0
      %v634 = vadd.f32 0.0, %v633
      %v635 = vpop.f32.mrb[0].mxu0
      %v636 = vadd.f32 0.0, %v635
      %637 = vmatprep.mubr.f32.mxu0 0.0
      %638 = vmatmul.mubr.f32.gmra.mrb[0].mxu0 %v337
      %v639 = vpop.f32.mrb[0].mxu0
      %v640 = vadd.f32 0.0, %v639
      %v641 = vpop.f32.mrb[0].mxu0
      %v642 = vadd.f32 0.0, %v641
      %643 = vmatprep.mubr.f32.mxu0 0.0
      %644 = vmatmul.mubr.f32.gmra.mrb[0].mxu0 %v340
      %v645 = vpop.f32.mrb[0].mxu0
      %v646 = vadd.f32 0.0, %v645
      %v647 = vpop.f32.mrb[0].mxu0
      %v648 = vadd.f32 0.0, %v647
      %649 = vmatprep.mubr.f32.mxu0 0.0
      %650 = vmatmul.mubr.f32.gmra.mrb[0].mxu0 %v343
      %v651 = vpop.f32.mrb[0].mxu0
      %v652 = vadd.f32 0.0, %v651
      %v653 = vpop.f32.mrb[0].mxu0
      %v654 = vadd.f32 0.0, %v653
      %655 = vmatprep.mubr.f32.mxu0 0.0
      %656 = vmatmul.mubr.f32.gmra.mrb[0].mxu0 %v346
      %v657 = vpop.f32.mrb[0].mxu0
      %v658 = vadd.f32 0.0, %v657
      %v659 = vpop.f32.mrb[0].mxu0
      %v660 = vadd.f32 0.0, %v659
      %661 = vmatprep.mubr.f32.mxu0 0.0
      %662 = vmatmul.mubr.f32.gmra.mrb[0].mxu0 %v349
      %v663 = vpop.f32.mrb[0].mxu0
      %v664 = vadd.f32 0.0, %v663
      %v665 = vpop.f32.mrb[0].mxu0
      %v666 = vadd.f32 0.0, %v665
      %667 = vmatprep.mubr.f32.mxu0 0.0
      %668 = vmatmul.mubr.f32.gmra.mrb[0].mxu0 %v352
      %v669 = vpop.f32.mrb[0].mxu0
      %v670 = vadd.f32 0.0, %v669
      %v671 = vpop.f32.mrb[0].mxu0
      %v672 = vadd.f32 0.0, %v671
      %673 = vmatprep.mubr.f32.mxu0 0.0
      %674 = vmatmul.mubr.f32.gmra.mrb[0].mxu0 %v355
      %v675 = vpop.f32.mrb[0].mxu0
      %v676 = vadd.f32 0.0, %v675
      %v677 = vpop.f32.mrb[0].mxu0
      %v678 = vadd.f32 0.0, %v677
      %679 = vmatprep.mubr.f32.mxu0 0.0
      %680 = vmatmul.mubr.f32.gmra.mrb[0].mxu0 %v358
      %v681 = vpop.f32.mrb[0].mxu0
      %v682 = vadd.f32 0.0, %v681
      %v683 = vpop.f32.mrb[0].mxu0
      %v684 = vadd.f32 0.0, %v683
      %685 = vmatprep.mubr.f32.mxu0 0.0
      %686 = vmatmul.mubr.f32.gmra.mrb[0].mxu0 %v361
      %v687 = vpop.f32.mrb[0].mxu0
      %v688 = vadd.f32 0.0, %v687
      %v689 = vpop.f32.mrb[0].mxu0
      %v690 = vadd.f32 0.0, %v689
      %691 = vmatprep.mubr.f32.mxu0 0.0
      %692 = vmatmul.mubr.f32.gmra.mrb[0].mxu0 %v364
      %v693 = vpop.f32.mrb[0].mxu0
      %v694 = vadd.f32 0.0, %v693
      %v695 = vpop.f32.mrb[0].mxu0
      %v696 = vadd.f32 0.0, %v695
      %697 = vmatprep.mubr.f32.mxu0 0.0
      %698 = vmatmul.mubr.f32.gmra.mrb[0].mxu0 %v367
      %v699 = vpop.f32.mrb[0].mxu0
      %v700 = vadd.f32 0.0, %v699
      %v701 = vpop.f32.mrb[0].mxu0
      %v702 = vadd.f32 0.0, %v701
      %703 = vmatprep.mubr.f32.mxu0 0.0
      %704 = vmatmul.mubr.f32.gmra.mrb[0].mxu0 %v370
      %v705 = vpop.f32.mrb[0].mxu0
      %v706 = vadd.f32 0.0, %v705
      %v707 = vpop.f32.mrb[0].mxu0
      %v708 = vadd.f32 0.0, %v707
      %709 = vmatprep.mubr.f32.mxu0 0.0
      %710 = vmatmul.mubr.f32.gmra.mrb[0].mxu0 %v373
      %v711 = vpop.f32.mrb[0].mxu0
      %v712 = vadd.f32 0.0, %v711
      %v713 = vpop.f32.mrb[0].mxu0
      %v714 = vadd.f32 0.0, %v713
      %715 = vmatprep.mubr.f32.mxu0 0.0
      %716 = vmatmul.mubr.f32.gmra.mrb[0].mxu0 %v376
      %v717 = vpop.f32.mrb[0].mxu0
      %v718 = vadd.f32 0.0, %v717
      %v719 = vpop.f32.mrb[0].mxu0
      %v720 = vadd.f32 0.0, %v719
      %721 = vmatprep.mubr.f32.mxu0 0.0
      %722 = vmatmul.mubr.f32.gmra.mrb[0].mxu0 %v379
      %v723 = vpop.f32.mrb[0].mxu0
      %v724 = vadd.f32 0.0, %v723
      %v725 = vpop.f32.mrb[0].mxu0
      %v726 = vadd.f32 0.0, %v725
      %727 = vmatprep.mubr.f32.mxu0 0.0
      %728 = vmatmul.mubr.f32.gmra.mrb[0].mxu0 %v382
      %v729 = vpop.f32.mrb[0].mxu0
      %v730 = vadd.f32 0.0, %v729
      %v731 = vpop.f32.mrb[0].mxu0
      %v732 = vadd.f32 0.0, %v731
      %733 = vmatprep.mubr.f32.mxu0 0.0
      %734 = vmatmul.mubr.f32.gmra.mrb[0].mxu0 %v385
      %v735 = vpop.f32.mrb[0].mxu0
      %v736 = vadd.f32 0.0, %v735
      %v737 = vpop.f32.mrb[0].mxu0
      %v738 = vadd.f32 0.0, %v737
      %739 = vdwg.mxu0
      %v740 = vsub.f32 %v550, 20.0
      %v741 = vsub.f32 %v552, 20.0
      %v742 = vsub.f32 %v556, 20.0
      %v743 = vsub.f32 %v558, 20.0
      %v744 = vsub.f32 %v562, 20.0
      %v745 = vsub.f32 %v564, 20.0
      %v746 = vsub.f32 %v568, 20.0
      %v747 = vsub.f32 %v570, 20.0
      %v748 = vsub.f32 %v574, 20.0
      %v749 = vsub.f32 %v576, 20.0
      %v750 = vsub.f32 %v580, 20.0
      %v751 = vsub.f32 %v582, 20.0
      %v752 = vsub.f32 %v586, 20.0
      %v753 = vsub.f32 %v588, 20.0
      %v754 = vsub.f32 %v592, 20.0
      %v755 = vsub.f32 %v594, 20.0
      %v756 = vsub.f32 %v598, 20.0
      %v757 = vsub.f32 %v600, 20.0
      %v758 = vsub.f32 %v604, 20.0
      %v759 = vsub.f32 %v606, 20.0
      %v760 = vsub.f32 %v610, 20.0
      %v761 = vsub.f32 %v612, 20.0
      %v762 = vsub.f32 %v616, 20.0
      %v763 = vsub.f32 %v618, 20.0
      %v764 = vsub.f32 %v622, 20.0
      %v765 = vsub.f32 %v624, 20.0
      %v766 = vsub.f32 %v628, 20.0
      %v767 = vsub.f32 %v630, 20.0
      %v768 = vsub.f32 %v634, 20.0
      %v769 = vsub.f32 %v636, 20.0
      %v770 = vsub.f32 %v640, 20.0
      %v771 = vsub.f32 %v642, 20.0
      %v772 = vsub.f32 %v646, 20.0
      %v773 = vsub.f32 %v648, 20.0
      %v774 = vsub.f32 %v652, 20.0
      %v775 = vsub.f32 %v654, 20.0
      %v776 = vsub.f32 %v658, 20.0
      %v777 = vsub.f32 %v660, 20.0
      %v778 = vsub.f32 %v664, 20.0
      %v779 = vsub.f32 %v666, 20.0
      %v780 = vsub.f32 %v670, 20.0
      %v781 = vsub.f32 %v672, 20.0
      %v782 = vsub.f32 %v676, 20.0
      %v783 = vsub.f32 %v678, 20.0
      %v784 = vsub.f32 %v682, 20.0
      %v785 = vsub.f32 %v684, 20.0
      %v786 = vsub.f32 %v688, 20.0
      %v787 = vsub.f32 %v690, 20.0
      %v788 = vsub.f32 %v694, 20.0
      %v789 = vsub.f32 %v696, 20.0
      %v790 = vsub.f32 %v700, 20.0
      %v791 = vsub.f32 %v702, 20.0
      %v792 = vsub.f32 %v706, 20.0
      %v793 = vsub.f32 %v708, 20.0
      %v794 = vsub.f32 %v712, 20.0
      %v795 = vsub.f32 %v714, 20.0
      %v796 = vsub.f32 %v718, 20.0
      %v797 = vsub.f32 %v720, 20.0
      %v798 = vsub.f32 %v724, 20.0
      %v799 = vsub.f32 %v726, 20.0
      %v800 = vsub.f32 %v730, 20.0
      %v801 = vsub.f32 %v732, 20.0
      %v802 = vsub.f32 %v736, 20.0
      %v803 = vsub.f32 %v738, 20.0
      %v804 = vmul.f32 %v740, 1.442695
      %v805 = vpow.pop %v804
      %v806 = vmul.f32 %v741, 1.442695
      %v807 = vpow.pop %v806
      %v808 = vmul.f32 %v742, 1.442695
      %v809 = vpow.pop %v808
      %v810 = vmul.f32 %v743, 1.442695
      %v811 = vpow.pop %v810
      %v812 = vmul.f32 %v744, 1.442695
      %v813 = vpow.pop %v812
      %v814 = vmul.f32 %v745, 1.442695
      %v815 = vpow.pop %v814
      %v816 = vmul.f32 %v746, 1.442695
      %v817 = vpow.pop %v816
      %v818 = vmul.f32 %v747, 1.442695
      %v819 = vpow.pop %v818
      %v820 = vmul.f32 %v748, 1.442695
      %v821 = vpow.pop %v820
      %v822 = vmul.f32 %v749, 1.442695
      %v823 = vpow.pop %v822
      %v824 = vmul.f32 %v750, 1.442695
      %v825 = vpow.pop %v824
      %v826 = vmul.f32 %v751, 1.442695
      %v827 = vpow.pop %v826
      %v828 = vmul.f32 %v752, 1.442695
      %v829 = vpow.pop %v828
      %v830 = vmul.f32 %v753, 1.442695
      %v831 = vpow.pop %v830
      %v832 = vmul.f32 %v754, 1.442695
      %v833 = vpow.pop %v832
      %v834 = vmul.f32 %v755, 1.442695
      %v835 = vpow.pop %v834
      %v836 = vmul.f32 %v756, 1.442695
      %v837 = vpow.pop %v836
      %v838 = vmul.f32 %v757, 1.442695
      %v839 = vpow.pop %v838
      %v840 = vmul.f32 %v758, 1.442695
      %v841 = vpow.pop %v840
      %v842 = vmul.f32 %v759, 1.442695
      %v843 = vpow.pop %v842
      %v844 = vmul.f32 %v760, 1.442695
      %v845 = vpow.pop %v844
      %v846 = vmul.f32 %v761, 1.442695
      %v847 = vpow.pop %v846
      %v848 = vmul.f32 %v762, 1.442695
      %v849 = vpow.pop %v848
      %v850 = vmul.f32 %v763, 1.442695
      %v851 = vpow.pop %v850
      %v852 = vmul.f32 %v764, 1.442695
      %v853 = vpow.pop %v852
      %v854 = vmul.f32 %v765, 1.442695
      %v855 = vpow.pop %v854
      %v856 = vmul.f32 %v766, 1.442695
      %v857 = vpow.pop %v856
      %v858 = vmul.f32 %v767, 1.442695
      %v859 = vpow.pop %v858
      %v860 = vmul.f32 %v768, 1.442695
      %v861 = vpow.pop %v860
      %v862 = vmul.f32 %v769, 1.442695
      %v863 = vpow.pop %v862
      %v864 = vmul.f32 %v770, 1.442695
      %v865 = vpow.pop %v864
      %v866 = vmul.f32 %v771, 1.442695
      %v867 = vpow.pop %v866
      %v868 = vmul.f32 %v772, 1.442695
      %v869 = vpow.pop %v868
      %v870 = vmul.f32 %v773, 1.442695
      %v871 = vpow.pop %v870
      %v872 = vmul.f32 %v774, 1.442695
      %v873 = vpow.pop %v872
      %v874 = vmul.f32 %v775, 1.442695
      %v875 = vpow.pop %v874
      %v876 = vmul.f32 %v776, 1.442695
      %v877 = vpow.pop %v876
      %v878 = vmul.f32 %v777, 1.442695
      %v879 = vpow.pop %v878
      %v880 = vmul.f32 %v778, 1.442695
      %v881 = vpow.pop %v880
      %v882 = vmul.f32 %v779, 1.442695
      %v883 = vpow.pop %v882
      %v884 = vmul.f32 %v780, 1.442695
      %v885 = vpow.pop %v884
      %v886 = vmul.f32 %v781, 1.442695
      %v887 = vpow.pop %v886
      %v888 = vmul.f32 %v782, 1.442695
      %v889 = vpow.pop %v888
      %v890 = vmul.f32 %v783, 1.442695
      %v891 = vpow.pop %v890
      %v892 = vmul.f32 %v784, 1.442695
      %v893 = vpow.pop %v892
      %v894 = vmul.f32 %v785, 1.442695
      %v895 = vpow.pop %v894
      %v896 = vmul.f32 %v786, 1.442695
      %v897 = vpow.pop %v896
      %v898 = vmul.f32 %v787, 1.442695
      %v899 = vpow.pop %v898
      %v900 = vmul.f32 %v788, 1.442695
      %v901 = vpow.pop %v900
      %v902 = vmul.f32 %v789, 1.442695
      %v903 = vpow.pop %v902
      %v904 = vmul.f32 %v790, 1.442695
      %v905 = vpow.pop %v904
      %v906 = vmul.f32 %v791, 1.442695
      %v907 = vpow.pop %v906
      %v908 = vmul.f32 %v792, 1.442695
      %v909 = vpow.pop %v908
      %v910 = vmul.f32 %v793, 1.442695
      %v911 = vpow.pop %v910
      %v912 = vmul.f32 %v794, 1.442695
      %v913 = vpow.pop %v912
      %v914 = vmul.f32 %v795, 1.442695
      %v915 = vpow.pop %v914
      %v916 = vmul.f32 %v796, 1.442695
      %v917 = vpow.pop %v916
      %v918 = vmul.f32 %v797, 1.442695
      %v919 = vpow.pop %v918
      %v920 = vmul.f32 %v798, 1.442695
      %v921 = vpow.pop %v920
      %v922 = vmul.f32 %v799, 1.442695
      %v923 = vpow.pop %v922
      %v924 = vmul.f32 %v800, 1.442695
      %v925 = vpow.pop %v924
      %v926 = vmul.f32 %v801, 1.442695
      %v927 = vpow.pop %v926
      %v928 = vmul.f32 %v802, 1.442695
      %v929 = vpow.pop %v928
      %v930 = vmul.f32 %v803, 1.442695
      %v931 = vpow.pop %v930
      %932 = vmatprep.subr.mxu0 %v807
      %933 = vmatpush1.msra.mxu0 %v805
      %934 = vmatprep.subr.mxu0 %v811
      %935 = vmatpush1.msra.mxu0 %v809
      %936 = vmatprep.subr.mxu0 %v815
      %937 = vmatpush1.msra.mxu0 %v813
      %938 = vmatprep.subr.mxu0 %v819
      %939 = vmatpush1.msra.mxu0 %v817
      %940 = vmatprep.subr.mxu0 %v823
      %941 = vmatpush1.msra.mxu0 %v821
      %942 = vmatprep.subr.mxu0 %v827
      %943 = vmatpush1.msra.mxu0 %v825
      %944 = vmatprep.subr.mxu0 %v831
      %945 = vmatpush1.msra.mxu0 %v829
      %946 = vmatprep.subr.mxu0 %v835
      %947 = vmatpush1.msra.mxu0 %v833
      %948 = vmatprep.subr.mxu0 %v839
      %949 = vmatpush1.msra.mxu0 %v837
      %950 = vmatprep.subr.mxu0 %v843
      %951 = vmatpush1.msra.mxu0 %v841
      %952 = vmatprep.subr.mxu0 %v847
      %953 = vmatpush1.msra.mxu0 %v845
      %954 = vmatprep.subr.mxu0 %v851
      %955 = vmatpush1.msra.mxu0 %v849
      %956 = vmatprep.subr.mxu0 %v855
      %957 = vmatpush1.msra.mxu0 %v853
      %958 = vmatprep.subr.mxu0 %v859
      %959 = vmatpush1.msra.mxu0 %v857
      %960 = vmatprep.subr.mxu0 %v863
      %961 = vmatpush1.msra.mxu0 %v861
      %962 = vmatprep.subr.mxu0 %v867
      %963 = vmatpush1.msra.mxu0 %v865
      %964 = vmatprep.subr.mxu0 %v871
      %965 = vmatpush1.msra.mxu0 %v869
      %966 = vmatprep.subr.mxu0 %v875
      %967 = vmatpush1.msra.mxu0 %v873
      %968 = vmatprep.subr.mxu0 %v879
      %969 = vmatpush1.msra.mxu0 %v877
      %970 = vmatprep.subr.mxu0 %v883
      %971 = vmatpush1.msra.mxu0 %v881
      %972 = vmatprep.subr.mxu0 %v887
      %973 = vmatpush1.msra.mxu0 %v885
      %974 = vmatprep.subr.mxu0 %v891
      %975 = vmatpush1.msra.mxu0 %v889
      %976 = vmatprep.subr.mxu0 %v895
      %977 = vmatpush1.msra.mxu0 %v893
      %978 = vmatprep.subr.mxu0 %v899
      %979 = vmatpush1.msra.mxu0 %v897
      %980 = vmatprep.subr.mxu0 %v903
      %981 = vmatpush1.msra.mxu0 %v901
      %982 = vmatprep.subr.mxu0 %v907
      %983 = vmatpush1.msra.mxu0 %v905
      %984 = vmatprep.subr.mxu0 %v911
      %985 = vmatpush1.msra.mxu0 %v909
      %986 = vmatprep.subr.mxu0 %v915
      %987 = vmatpush1.msra.mxu0 %v913
      %988 = vmatprep.subr.mxu0 %v919
      %989 = vmatpush1.msra.mxu0 %v917
      %990 = vmatprep.subr.mxu0 %v923
      %991 = vmatpush1.msra.mxu0 %v921
      %992 = vmatprep.subr.mxu0 %v927
      %993 = vmatpush1.msra.mxu0 %v925
      %994 = vmatprep.subr.mxu0 %v931
      %995 = vmatpush1.msra.mxu0 %v929
      %996 = vmatprep.mubr.f32.mxu0 1.0
      %997 = vmatmul.mubr.f32.gmra.mrb[0].mxu0 1.0
      %v998 = vpop.f32.mrb[0].mxu0
      %v999 = vadd.f32 0.0, %v998
      %v1000 = vpop.f32.mrb[0].mxu0
      %v1001 = vadd.f32 0.0, %v1000
      %1002 = vdwg.mxu0
      %1003 = vmatprep.subr.mxu0 %v807
      %1004 = vmatpush1.xpose.msra.mxu0 %v805
      %1005 = vmatprep.subr.mxu0 %v811
      %1006 = vmatpush1.xpose.msra.mxu0 %v809
      %1007 = vmatprep.subr.mxu0 %v815
      %1008 = vmatpush1.xpose.msra.mxu0 %v813
      %1009 = vmatprep.subr.mxu0 %v819
      %1010 = vmatpush1.xpose.msra.mxu0 %v817
      %1011 = vmatprep.subr.mxu0 %v823
      %1012 = vmatpush1.xpose.msra.mxu0 %v821
      %1013 = vmatprep.subr.mxu0 %v827
      %1014 = vmatpush1.xpose.msra.mxu0 %v825
      %1015 = vmatprep.subr.mxu0 %v831
      %1016 = vmatpush1.xpose.msra.mxu0 %v829
      %1017 = vmatprep.subr.mxu0 %v835
      %1018 = vmatpush1.xpose.msra.mxu0 %v833
      %1019 = vmatprep.subr.mxu0 %v839
      %1020 = vmatpush1.xpose.msra.mxu0 %v837
      %1021 = vmatprep.subr.mxu0 %v843
      %1022 = vmatpush1.xpose.msra.mxu0 %v841
      %1023 = vmatprep.subr.mxu0 %v847
      %1024 = vmatpush1.xpose.msra.mxu0 %v845
      %1025 = vmatprep.subr.mxu0 %v851
      %1026 = vmatpush1.xpose.msra.mxu0 %v849
      %1027 = vmatprep.subr.mxu0 %v855
      %1028 = vmatpush1.xpose.msra.mxu0 %v853
      %1029 = vmatprep.subr.mxu0 %v859
      %1030 = vmatpush1.xpose.msra.mxu0 %v857
      %1031 = vmatprep.subr.mxu0 %v863
      %1032 = vmatpush1.xpose.msra.mxu0 %v861
      %1033 = vmatprep.subr.mxu0 %v867
      %1034 = vmatpush1.xpose.msra.mxu0 %v865
      %1035 = vmatprep.subr.mxu0 %v871
      %1036 = vmatpush1.xpose.msra.mxu0 %v869
      %1037 = vmatprep.subr.mxu0 %v875
      %1038 = vmatpush1.xpose.msra.mxu0 %v873
      %1039 = vmatprep.subr.mxu0 %v879
      %1040 = vmatpush1.xpose.msra.mxu0 %v877
      %1041 = vmatprep.subr.mxu0 %v883
      %1042 = vmatpush1.xpose.msra.mxu0 %v881
      %1043 = vmatprep.subr.mxu0 %v887
      %1044 = vmatpush1.xpose.msra.mxu0 %v885
      %1045 = vmatprep.subr.mxu0 %v891
      %1046 = vmatpush1.xpose.msra.mxu0 %v889
      %1047 = vmatprep.subr.mxu0 %v895
      %1048 = vmatpush1.xpose.msra.mxu0 %v893
      %1049 = vmatprep.subr.mxu0 %v899
      %1050 = vmatpush1.xpose.msra.mxu0 %v897
      %1051 = vmatprep.subr.mxu0 %v903
      %1052 = vmatpush1.xpose.msra.mxu0 %v901
      %1053 = vmatprep.subr.mxu0 %v907
      %1054 = vmatpush1.xpose.msra.mxu0 %v905
      %1055 = vmatprep.subr.mxu0 %v911
      %1056 = vmatpush1.xpose.msra.mxu0 %v909
      %1057 = vmatprep.subr.mxu0 %v915
      %1058 = vmatpush1.xpose.msra.mxu0 %v913
      %1059 = vmatprep.subr.mxu0 %v919
      %1060 = vmatpush1.xpose.msra.mxu0 %v917
      %1061 = vmatprep.subr.mxu0 %v923
      %1062 = vmatpush1.xpose.msra.mxu0 %v921
      %1063 = vmatprep.subr.mxu0 %v927
      %1064 = vmatpush1.xpose.msra.mxu0 %v925
      %1065 = vmatprep.subr.mxu0 %v931
      %1066 = vmatpush1.xpose.msra.mxu0 %v929
      %1067 = vmatprep.mubr.f32.mxu0 1.0
      %1068 = vmatmul.mubr.f32.gmra.mrb[0].mxu0 1.0
      %v1069 = vpop.f32.mrb[0].mxu0
      %v1070 = vadd.f32 0.0, %v1069
      %v1071 = vpop.f32.mrb[0].mxu0
      %v1072 = vadd.f32 0.0, %v1071
      %1073 = vdwg.mxu0
      %s1074 = smul.u32 %s20, 2
      %s1075 = scalar_lea.vmem [#allocation2], %s1074
      %v1076 = vld [vmem:[%s1075] sm:$0x3]
      %v1079 = vcombine.low %v999, %v1001
      %v1081 = vunpack.c.l.s4 1966171168
      %v1082 = vunpack.c.0.s8 %v1081
      %v1083 = vlaneseq
      %v1084 = vshrl.u32 %v1083, 7
      %v1085 = vsub.s32 %v1082, %v1084
      %v1086 = vrot.slane %v1079, %v1085
      %v1088 = vunpack.c.l.s4 1966171168
      %v1089 = vunpack.c.0.s8 %v1088
      %v1090 = vlaneseq
      %v1091 = vshrl.u32 %v1090, 7
      %v1092 = vsub.s32 %v1089, %v1091
      %v1093 = vrot.slane %v1086, %v1092
      %v1095 = vadd.f32 %v1076, %v1093
      %v1096 = vlaneseq
      %vm1097 = vcmp.ge.s32.totalorder %v1096, 0
      %vm1098 = vcmp.lt.s32.totalorder %v1096, 256
      %vm1099 = vmand %vm1097, %vm1098
      %1100 = vst.msk [vmem:[%s1075] sm:$0x3] %vm1099, %v1095
      %s1101 = smul.u32 %s19, 2
      %s1102 = scalar_lea.vmem [#allocation3], %s1101
      %v1103 = vld [vmem:[%s1102] sm:$0x3]
      %v1106 = vcombine.low %v1070, %v1072
      %v1108 = vunpack.c.l.s4 1966171168
      %v1109 = vunpack.c.0.s8 %v1108
      %v1110 = vlaneseq
      %v1111 = vshrl.u32 %v1110, 7
      %v1112 = vsub.s32 %v1109, %v1111
      %v1113 = vrot.slane %v1106, %v1112
      %v1115 = vunpack.c.l.s4 1966171168
      %v1116 = vunpack.c.0.s8 %v1115
      %v1117 = vlaneseq
      %v1118 = vshrl.u32 %v1117, 7
      %v1119 = vsub.s32 %v1116, %v1118
      %v1120 = vrot.slane %v1113, %v1119
      %v1122 = vadd.f32 %v1103, %v1120
      %1123 = vst.msk [vmem:[%s1102] sm:$0x3] %vm1099, %v1122
      %p1124 = scmp.eq.s32.totalorder %s19, %s20
      // Predicated region
      $region33: #{contrastive_loss_resnet_forward.7} parent=27 // pred_check
        %p1125 = pneg %p1124
      $region34: #{contrastive_loss_resnet_forward.7} parent=27 // pred_check_branch
        %1127 = sbr.rel (%p1125) target = $region36
      $region35: #{contrastive_loss_resnet_forward.7} parent=27 // pred_region
        %v1128 = vlaneseq
        %v1129 = vshrl.u32 %v1128, 7
        %v1130 = vadd.s32 %v1129, 8
        %v1131 = vadd.s32 %v1129, 16
        %v1132 = vadd.s32 %v1129, 24
        %v1133 = vadd.s32 %v1129, 32
        %v1134 = vadd.s32 %v1129, 40
        %v1135 = vadd.s32 %v1129, 48
        %v1136 = vadd.s32 %v1129, 56
        %v1137 = vadd.s32 %v1129, 64
        %v1138 = vadd.s32 %v1129, 72
        %v1139 = vadd.s32 %v1129, 80
        %v1140 = vadd.s32 %v1129, 88
        %v1141 = vadd.s32 %v1129, 96
        %v1142 = vadd.s32 %v1129, 104
        %v1143 = vadd.s32 %v1129, 112
        %v1144 = vadd.s32 %v1129, 120
        %v1145 = vadd.s32 %v1129, 128
        %v1146 = vadd.s32 %v1129, 136
        %v1147 = vadd.s32 %v1129, 144
        %v1148 = vadd.s32 %v1129, 152
        %v1149 = vadd.s32 %v1129, 160
        %v1150 = vadd.s32 %v1129, 168
        %v1151 = vadd.s32 %v1129, 176
        %v1152 = vadd.s32 %v1129, 184
        %v1153 = vadd.s32 %v1129, 192
        %v1154 = vadd.s32 %v1129, 200
        %v1155 = vadd.s32 %v1129, 208
        %v1156 = vadd.s32 %v1129, 216
        %v1157 = vadd.s32 %v1129, 224
        %v1158 = vadd.s32 %v1129, 232
        %v1159 = vadd.s32 %v1129, 240
        %v1160 = vadd.s32 %v1129, 248
        %v1161 = vlaneseq
        %v1162 = vand.u32 %v1161, 127
        %v1163 = vadd.s32 %v1162, 128
        %vm1164 = vcmp.eq.s32.totalorder %v1129, %v1162
        %vm1165 = vcmp.eq.s32.totalorder %v1129, %v1163
        %vm1166 = vcmp.eq.s32.totalorder %v1130, %v1162
        %vm1167 = vcmp.eq.s32.totalorder %v1130, %v1163
        %vm1168 = vcmp.eq.s32.totalorder %v1131, %v1162
        %vm1169 = vcmp.eq.s32.totalorder %v1131, %v1163
        %vm1170 = vcmp.eq.s32.totalorder %v1132, %v1162
        %vm1171 = vcmp.eq.s32.totalorder %v1132, %v1163
        %vm1172 = vcmp.eq.s32.totalorder %v1133, %v1162
        %vm1173 = vcmp.eq.s32.totalorder %v1133, %v1163
        %vm1174 = vcmp.eq.s32.totalorder %v1134, %v1162
        %vm1175 = vcmp.eq.s32.totalorder %v1134, %v1163
        %vm1176 = vcmp.eq.s32.totalorder %v1135, %v1162
        %vm1177 = vcmp.eq.s32.totalorder %v1135, %v1163
        %vm1178 = vcmp.eq.s32.totalorder %v1136, %v1162
        %vm1179 = vcmp.eq.s32.totalorder %v1136, %v1163
        %vm1180 = vcmp.eq.s32.totalorder %v1137, %v1162
        %vm1181 = vcmp.eq.s32.totalorder %v1137, %v1163
        %vm1182 = vcmp.eq.s32.totalorder %v1138, %v1162
        %vm1183 = vcmp.eq.s32.totalorder %v1138, %v1163
        %vm1184 = vcmp.eq.s32.totalorder %v1139, %v1162
        %vm1185 = vcmp.eq.s32.totalorder %v1139, %v1163
        %vm1186 = vcmp.eq.s32.totalorder %v1140, %v1162
        %vm1187 = vcmp.eq.s32.totalorder %v1140, %v1163
        %vm1188 = vcmp.eq.s32.totalorder %v1141, %v1162
        %vm1189 = vcmp.eq.s32.totalorder %v1141, %v1163
        %vm1190 = vcmp.eq.s32.totalorder %v1142, %v1162
        %vm1191 = vcmp.eq.s32.totalorder %v1142, %v1163
        %vm1192 = vcmp.eq.s32.totalorder %v1143, %v1162
        %vm1193 = vcmp.eq.s32.totalorder %v1143, %v1163
        %vm1194 = vcmp.eq.s32.totalorder %v1144, %v1162
        %vm1195 = vcmp.eq.s32.totalorder %v1144, %v1163
        %vm1196 = vcmp.eq.s32.totalorder %v1145, %v1162
        %vm1197 = vcmp.eq.s32.totalorder %v1145, %v1163
        %vm1198 = vcmp.eq.s32.totalorder %v1146, %v1162
        %vm1199 = vcmp.eq.s32.totalorder %v1146, %v1163
        %vm1200 = vcmp.eq.s32.totalorder %v1147, %v1162
        %vm1201 = vcmp.eq.s32.totalorder %v1147, %v1163
        %vm1202 = vcmp.eq.s32.totalorder %v1148, %v1162
        %vm1203 = vcmp.eq.s32.totalorder %v1148, %v1163
        %vm1204 = vcmp.eq.s32.totalorder %v1149, %v1162
        %vm1205 = vcmp.eq.s32.totalorder %v1149, %v1163
        %vm1206 = vcmp.eq.s32.totalorder %v1150, %v1162
        %vm1207 = vcmp.eq.s32.totalorder %v1150, %v1163
        %vm1208 = vcmp.eq.s32.totalorder %v1151, %v1162
        %vm1209 = vcmp.eq.s32.totalorder %v1151, %v1163
        %vm1210 = vcmp.eq.s32.totalorder %v1152, %v1162
        %vm1211 = vcmp.eq.s32.totalorder %v1152, %v1163
        %vm1212 = vcmp.eq.s32.totalorder %v1153, %v1162
        %vm1213 = vcmp.eq.s32.totalorder %v1153, %v1163
        %vm1214 = vcmp.eq.s32.totalorder %v1154, %v1162
        %vm1215 = vcmp.eq.s32.totalorder %v1154, %v1163
        %vm1216 = vcmp.eq.s32.totalorder %v1155, %v1162
        %vm1217 = vcmp.eq.s32.totalorder %v1155, %v1163
        %vm1218 = vcmp.eq.s32.totalorder %v1156, %v1162
        %vm1219 = vcmp.eq.s32.totalorder %v1156, %v1163
        %vm1220 = vcmp.eq.s32.totalorder %v1157, %v1162
        %vm1221 = vcmp.eq.s32.totalorder %v1157, %v1163
        %vm1222 = vcmp.eq.s32.totalorder %v1158, %v1162
        %vm1223 = vcmp.eq.s32.totalorder %v1158, %v1163
        %vm1224 = vcmp.eq.s32.totalorder %v1159, %v1162
        %vm1225 = vcmp.eq.s32.totalorder %v1159, %v1163
        %vm1226 = vcmp.eq.s32.totalorder %v1160, %v1162
        %vm1227 = vcmp.eq.s32.totalorder %v1160, %v1163
        %v1228 = vsel %vm1164, %v805, 0.0
        %v1229 = vsel %vm1165, %v807, 0.0
        %v1230 = vsel %vm1166, %v809, 0.0
        %v1231 = vsel %vm1167, %v811, 0.0
        %v1232 = vsel %vm1168, %v813, 0.0
        %v1233 = vsel %vm1169, %v815, 0.0
        %v1234 = vsel %vm1170, %v817, 0.0
        %v1235 = vsel %vm1171, %v819, 0.0
        %v1236 = vsel %vm1172, %v821, 0.0
        %v1237 = vsel %vm1173, %v823, 0.0
        %v1238 = vsel %vm1174, %v825, 0.0
        %v1239 = vsel %vm1175, %v827, 0.0
        %v1240 = vsel %vm1176, %v829, 0.0
        %v1241 = vsel %vm1177, %v831, 0.0
        %v1242 = vsel %vm1178, %v833, 0.0
        %v1243 = vsel %vm1179, %v835, 0.0
        %v1244 = vsel %vm1180, %v837, 0.0
        %v1245 = vsel %vm1181, %v839, 0.0
        %v1246 = vsel %vm1182, %v841, 0.0
        %v1247 = vsel %vm1183, %v843, 0.0
        %v1248 = vsel %vm1184, %v845, 0.0
        %v1249 = vsel %vm1185, %v847, 0.0
        %v1250 = vsel %vm1186, %v849, 0.0
        %v1251 = vsel %vm1187, %v851, 0.0
        %v1252 = vsel %vm1188, %v853, 0.0
        %v1253 = vsel %vm1189, %v855, 0.0
        %v1254 = vsel %vm1190, %v857, 0.0
        %v1255 = vsel %vm1191, %v859, 0.0
        %v1256 = vsel %vm1192, %v861, 0.0
        %v1257 = vsel %vm1193, %v863, 0.0
        %v1258 = vsel %vm1194, %v865, 0.0
        %v1259 = vsel %vm1195, %v867, 0.0
        %v1260 = vsel %vm1196, %v869, 0.0
        %v1261 = vsel %vm1197, %v871, 0.0
        %v1262 = vsel %vm1198, %v873, 0.0
        %v1263 = vsel %vm1199, %v875, 0.0
        %v1264 = vsel %vm1200, %v877, 0.0
        %v1265 = vsel %vm1201, %v879, 0.0
        %v1266 = vsel %vm1202, %v881, 0.0
        %v1267 = vsel %vm1203, %v883, 0.0
        %v1268 = vsel %vm1204, %v885, 0.0
        %v1269 = vsel %vm1205, %v887, 0.0
        %v1270 = vsel %vm1206, %v889, 0.0
        %v1271 = vsel %vm1207, %v891, 0.0
        %v1272 = vsel %vm1208, %v893, 0.0
        %v1273 = vsel %vm1209, %v895, 0.0
        %v1274 = vsel %vm1210, %v897, 0.0
        %v1275 = vsel %vm1211, %v899, 0.0
        %v1276 = vsel %vm1212, %v901, 0.0
        %v1277 = vsel %vm1213, %v903, 0.0
        %v1278 = vsel %vm1214, %v905, 0.0
        %v1279 = vsel %vm1215, %v907, 0.0
        %v1280 = vsel %vm1216, %v909, 0.0
        %v1281 = vsel %vm1217, %v911, 0.0
        %v1282 = vsel %vm1218, %v913, 0.0
        %v1283 = vsel %vm1219, %v915, 0.0
        %v1284 = vsel %vm1220, %v917, 0.0
        %v1285 = vsel %vm1221, %v919, 0.0
        %v1286 = vsel %vm1222, %v921, 0.0
        %v1287 = vsel %vm1223, %v923, 0.0
        %v1288 = vsel %vm1224, %v925, 0.0
        %v1289 = vsel %vm1225, %v927, 0.0
        %v1290 = vsel %vm1226, %v929, 0.0
        %v1291 = vsel %vm1227, %v931, 0.0
        %v1292 = vadd.f32 %v1228, %v1230
        %v1293 = vadd.f32 %v1292, %v1232
        %v1294 = vadd.f32 %v1293, %v1234
        %v1295 = vadd.f32 %v1294, %v1236
        %v1296 = vadd.f32 %v1295, %v1238
        %v1297 = vadd.f32 %v1296, %v1240
        %v1298 = vadd.f32 %v1297, %v1242
        %v1299 = vadd.f32 %v1298, %v1244
        %v1300 = vadd.f32 %v1299, %v1246
        %v1301 = vadd.f32 %v1300, %v1248
        %v1302 = vadd.f32 %v1301, %v1250
        %v1303 = vadd.f32 %v1302, %v1252
        %v1304 = vadd.f32 %v1303, %v1254
        %v1305 = vadd.f32 %v1304, %v1256
        %v1306 = vadd.f32 %v1305, %v1258
        %v1307 = vadd.f32 %v1306, %v1260
        %v1308 = vadd.f32 %v1307, %v1262
        %v1309 = vadd.f32 %v1308, %v1264
        %v1310 = vadd.f32 %v1309, %v1266
        %v1311 = vadd.f32 %v1310, %v1268
        %v1312 = vadd.f32 %v1311, %v1270
        %v1313 = vadd.f32 %v1312, %v1272
        %v1314 = vadd.f32 %v1313, %v1274
        %v1315 = vadd.f32 %v1314, %v1276
        %v1316 = vadd.f32 %v1315, %v1278
        %v1317 = vadd.f32 %v1316, %v1280
        %v1318 = vadd.f32 %v1317, %v1282
        %v1319 = vadd.f32 %v1318, %v1284
        %v1320 = vadd.f32 %v1319, %v1286
        %v1321 = vadd.f32 %v1320, %v1288
        %v1322 = vadd.f32 %v1321, %v1290
        %v1323 = vrot.slane %v1322, 4
        %v1324 = vadd.f32 %v1322, %v1323
        %v1325 = vrot.slane %v1324, 2
        %v1326 = vadd.f32 %v1324, %v1325
        %v1327 = vrot.slane %v1326, 1
        %v1328 = vadd.f32 %v1326, %v1327
        %v1329 = vadd.f32 %v1229, %v1231
        %v1330 = vadd.f32 %v1329, %v1233
        %v1331 = vadd.f32 %v1330, %v1235
        %v1332 = vadd.f32 %v1331, %v1237
        %v1333 = vadd.f32 %v1332, %v1239
        %v1334 = vadd.f32 %v1333, %v1241
        %v1335 = vadd.f32 %v1334, %v1243
        %v1336 = vadd.f32 %v1335, %v1245
        %v1337 = vadd.f32 %v1336, %v1247
        %v1338 = vadd.f32 %v1337, %v1249
        %v1339 = vadd.f32 %v1338, %v1251
        %v1340 = vadd.f32 %v1339, %v1253
        %v1341 = vadd.f32 %v1340, %v1255
        %v1342 = vadd.f32 %v1341, %v1257
        %v1343 = vadd.f32 %v1342, %v1259
        %v1344 = vadd.f32 %v1343, %v1261
        %v1345 = vadd.f32 %v1344, %v1263
        %v1346 = vadd.f32 %v1345, %v1265
        %v1347 = vadd.f32 %v1346, %v1267
        %v1348 = vadd.f32 %v1347, %v1269
        %v1349 = vadd.f32 %v1348, %v1271
        %v1350 = vadd.f32 %v1349, %v1273
        %v1351 = vadd.f32 %v1350, %v1275
        %v1352 = vadd.f32 %v1351, %v1277
        %v1353 = vadd.f32 %v1352, %v1279
        %v1354 = vadd.f32 %v1353, %v1281
        %v1355 = vadd.f32 %v1354, %v1283
        %v1356 = vadd.f32 %v1355, %v1285
        %v1357 = vadd.f32 %v1356, %v1287
        %v1358 = vadd.f32 %v1357, %v1289
        %v1359 = vadd.f32 %v1358, %v1291
        %v1360 = vrot.slane %v1359, 4
        %v1361 = vadd.f32 %v1359, %v1360
        %v1362 = vrot.slane %v1361, 2
        %v1363 = vadd.f32 %v1361, %v1362
        %v1364 = vrot.slane %v1363, 1
        %v1365 = vadd.f32 %v1363, %v1364
        %v1368 = vcombine.low %v1328, %v1365
        %v1370 = vunpack.c.l.s4 1966171168
        %v1371 = vunpack.c.0.s8 %v1370
        %v1372 = vlaneseq
        %v1373 = vshrl.u32 %v1372, 7
        %v1374 = vsub.s32 %v1371, %v1373
        %v1375 = vrot.slane %v1368, %v1374
        %v1377 = vunpack.c.l.s4 1966171168
        %v1378 = vunpack.c.0.s8 %v1377
        %v1379 = vlaneseq
        %v1380 = vshrl.u32 %v1379, 7
        %v1381 = vsub.s32 %v1378, %v1380
        %v1382 = vrot.slane %v1375, %v1381
        %s1384 = scalar_lea.vmem [#allocation4], %s1101
        %1385 = vst.msk [vmem:[%s1384] sm:$0x3] %vm1099, %v1382
      $region36: #{contrastive_loss_resnet_forward.7} parent=27 // pred_fallthru
        _
      // Predicated region
      $region37: #{contrastive_loss_resnet_forward.7} parent=27 // pred_check
        _
      $region38: #{contrastive_loss_resnet_forward.7} parent=27 // pred_check_branch
        %1387 = sbr.rel (%p215) target = $region40
      $region39: #{contrastive_loss_resnet_forward.7} parent=27 // pred_region
        %v1388 = vld [vmem:[#allocation4] sm:$0x3]
        %v1389 = vld [vmem:[#allocation2] sm:$0x3]
        %v1390 = vrcp.pop %v1389
        %v1391 = vmul.f32 %v1388, %v1390
        %v1392 = vld [vmem:[#allocation3] sm:$0x3]
        %v1393 = vrcp.pop %v1392
        %v1394 = vmul.f32 %v1388, %v1393
        %v1395 = vadd.f32 %v1391, %v1394
        %v1396 = vmul.f32 %v1395, 0.5
        %v1397 = vadd.f32 %v1396, 1e-05
        %v1398 = vlog2.pop %v1397
        %v1399 = vmul.f32 %v1398, 0.6931472
        %v1400 = vsub.f32 0.0, %v1399
        %1401 = vst.msk [vmem:[%s212] sm:$0x3] %vm1099, %v1400
      $region40: #{contrastive_loss_resnet_forward.7} parent=27 // pred_fallthru
        _
      %p1402 = scmp.lt.s32.totalorder %s18, 1
      %s1403 = scalar_select %p1402, %s18, 1
      %s1404 = smul.addr %s1403, 2
      %s1405 = scalar_lea.vmem %s2, %s1404
      // Predicated region
      $region41: #{contrastive_loss_resnet_forward.7} parent=27 // pred_check
        %p1406 = pneg %p106
      $region42: #{contrastive_loss_resnet_forward.7} parent=27 // pred_check_branch
        %1408 = sbr.rel (%p1406) target = $region44
      $region43: #{contrastive_loss_resnet_forward.7} parent=27 // pred_region
        _
      $region44: #{contrastive_loss_resnet_forward.7} parent=27 // pred_fallthru
        _
    $region28: #{contrastive_loss_resnet_forward.7} parent=5 // pred_fallthru
      _
    %p1409 = scmp.le.s32.totalorder 2, %s8
    // Predicated region
    $region45: #{contrastive_loss_resnet_forward.7} parent=5 // pred_check
      %p1410 = pneg %p1409
    $region46: #{contrastive_loss_resnet_forward.7} parent=5 // pred_check_branch
      %1412 = sbr.rel (%p1410) target = $region48
    $region47: #{contrastive_loss_resnet_forward.7} parent=5 // pred_region
      %s1413 = ssub.s32 %s8, 2
      // Predicated region
      $region49: #{contrastive_loss_resnet_forward.7} parent=47 // pred_check
        %p1414 = pneg %p112
      $region50: #{contrastive_loss_resnet_forward.7} parent=47 // pred_check_branch
        %1416 = sbr.rel (%p1414) target = $region52
      $region51: #{contrastive_loss_resnet_forward.7} parent=47 // pred_region
        %p1417 = scmp.lt.s32.totalorder %s21, 1
        %s1418 = scalar_select %p1417, %s21, 1
        %s1419 = smul.addr %s1418, 2
        %s1420 = scalar_lea.vmem %s2, %s1419
      $region52: #{contrastive_loss_resnet_forward.7} parent=47 // pred_fallthru
        _
    $region48: #{contrastive_loss_resnet_forward.7} parent=5 // pred_fallthru
      _
  $region6: #{contrastive_loss_resnet_forward.7} parent=0 // loop_footer
    %s12 = sadd.s32 1, %s8
  $region7: #{contrastive_loss_resnet_forward.7} parent=0 // loop_footer_branch
    %7 = sbr.rel target = $region3
  $region8: #{contrastive_loss_resnet_forward.7} parent=0 // loop_exit
    _

</llo_original>
